<compile_context>
chip_gen: v7x
topology: tpu7x:2x2x1
jax: 0.10.0
libtpu: 0.0.40
codegen_flags: <defaults>
</compile_context>

<pallas_src>
import jax
import jax.numpy as jnp
from jax.experimental import pallas as pl
from jax.experimental.pallas import tpu as pltpu


# ----------------------------------------------------------------------------
# Helpers
# ----------------------------------------------------------------------------
def round_up(n, m):
    return ((n + m - 1) // m) * m


def pad_rows(x, rows):
    if x.shape[0] == rows:
        return x
    return jnp.pad(x, ((0, rows - x.shape[0]), (0, 0)))


def im2col_nhwc(x, k, s):
    """x: [N, H, W, C] -> patches [N*OH*OW, k*k*C] with (kh, kw, c) column order."""
    N, H, W, C = x.shape
    OH = (H - k) // s + 1
    OW = (W - k) // s + 1
    cols = []
    for i in range(k):
        for j in range(k):
            cols.append(x[:, i : i + s * (OH - 1) + 1 : s,
                             j : j + s * (OW - 1) + 1 : s, :])   # [N, OH, OW, C]
    p = jnp.stack(cols, axis=3)                                   # [N, OH, OW, k*k, C]
    return p.reshape(N * OH * OW, k * k * C), OH, OW


# ----------------------------------------------------------------------------
# Pallas kernels
# ----------------------------------------------------------------------------
_VMEM_SPEC = pl.BlockSpec(memory_space=pltpu.MemorySpace.VMEM)


def _dense_relu_kernel(x_ref, w_ref, b_ref, o_ref):
    # y = relu(x @ w + b); bf16 operands, f32 accumulation + epilogue.
    y = jnp.dot(x_ref[...], w_ref[...], preferred_element_type=jnp.float32)
    y = jnp.maximum(y + b_ref[...], 0.0)
    o_ref[...] = y.astype(o_ref.dtype)


def pallas_dense_relu(x, w, b):
    """x: [M, K] bf16, w: [K, N] bf16, b: [1, N] f32 -> [M, N] bf16 (single VMEM block)."""
    M, K = x.shape
    _, N = w.shape
    flops = 2 * M * K * N
    bytes_accessed = int(x.size) * 2 + int(w.size) * 2 + int(b.size) * 4 + M * N * 2
    return pl.pallas_call(
        _dense_relu_kernel,
        out_shape=jax.ShapeDtypeStruct((M, N), jnp.bfloat16),
        in_specs=[_VMEM_SPEC, _VMEM_SPEC, _VMEM_SPEC],
        out_specs=_VMEM_SPEC,
        cost_estimate=pl.CostEstimate(flops=flops, transcendentals=0,
                                      bytes_accessed=bytes_accessed),
    )(x, w, b)


def _head_kernel(x3_ref, act_ref, w3c_ref, b3c_ref,
                 w1f_ref, w1a_ref, b1_ref,
                 w2_ref, b2_ref, w3f_ref, b3f_ref, o_ref):
    """Fused conv3 + fc1 + fc2 + fc3 for both Q branches, everything VMEM-resident."""
    f32 = jnp.float32
    bf16 = jnp.bfloat16
    # conv3 (1x1 output): x3 is the full 3x3xC window per sample.
    feat = jnp.dot(x3_ref[...], w3c_ref[...], preferred_element_type=f32)
    feat = jnp.maximum(feat + b3c_ref[...], 0.0)                  # [M, 256] f32
    # fc1: features + action handled as two dots into the same accumulator.
    h = jnp.dot(feat.astype(bf16), w1f_ref[...], preferred_element_type=f32)
    h = h + jnp.dot(act_ref[...], w1a_ref[...], preferred_element_type=f32)
    h = jnp.maximum(h + b1_ref[...], 0.0)                         # [M, 1024]
    # fc2
    h = jnp.dot(h.astype(bf16), w2_ref[...], preferred_element_type=f32)
    h = jnp.maximum(h + b2_ref[...], 0.0)                         # [M, 512]
    # fc3 (q1 in lane 0, q2 in lane 1, padded to 128 lanes)
    q = jnp.dot(h.astype(bf16), w3f_ref[...], preferred_element_type=f32)
    o_ref[...] = q + b3f_ref[...]


def pallas_head(x3, act, packed):
    M, K3 = x3.shape
    flops = 2 * M * (K3 * 256 + 256 * 1024 + 128 * 1024 + 1024 * 512 + 512 * 128)
    w_bytes = sum(int(packed[k].size) * 2 for k in
                  ("w3c", "wf1_feat", "wf1_act", "wf2", "wf3"))
    bytes_accessed = int(x3.size) * 2 + int(act.size) * 2 + w_bytes + M * 128 * 4
    return pl.pallas_call(
        _head_kernel,
        out_shape=jax.ShapeDtypeStruct((M, 128), jnp.float32),
        in_specs=[_VMEM_SPEC] * 11,
        out_specs=_VMEM_SPEC,
        cost_estimate=pl.CostEstimate(flops=flops, transcendentals=0,
                                      bytes_accessed=bytes_accessed),
    )(x3, act,
      packed["w3c"], packed["b3c"],
      packed["wf1_feat"], packed["wf1_act"], packed["bf1"],
      packed["wf2"], packed["bf2"],
      packed["wf3"], packed["bf3"])


# ----------------------------------------------------------------------------
# Parameter init (PyTorch-default-style uniform fan-in scaling, per-branch)
# ----------------------------------------------------------------------------
def _conv_param(key, cin, cout, k):
    k1, k2 = jax.random.split(key)
    bound = 1.0 / (cin * k * k) ** 0.5
    w = jax.random.uniform(k1, (cout, cin, k, k), jnp.float32, -bound, bound)
    b = jax.random.uniform(k2, (cout,), jnp.float32, -bound, bound)
    return w, b


def _linear_param(key, din, dout):
    k1, k2 = jax.random.split(key)
    bound = 1.0 / din ** 0.5
    w = jax.random.uniform(k1, (din, dout), jnp.float32, -bound, bound)
    b = jax.random.uniform(k2, (dout,), jnp.float32, -bound, bound)
    return w, b


def conv_stack_output_size(input_shape):
    _, h, w = input_shape
    h1, w1 = (h - 8) // 4 + 1, (w - 8) // 4 + 1
    h2, w2 = (h1 - 4) // 2 + 1, (w1 - 4) // 2 + 1
    h3, w3 = (h2 - 3) // 1 + 1, (w2 - 3) // 1 + 1
    return 128 * h3 * w3


def init_params(key, input_shape=(4, 40, 40), action_dim=5):
    cin = input_shape[0]
    flat = conv_stack_output_size(input_shape)
    keys = jax.random.split(key, 12)

    def conv_branch(ks):
        return [_conv_param(ks[0], cin, 32, 8),
                _conv_param(ks[1], 32, 64, 4),
                _conv_param(ks[2], 64, 128, 3)]

    def fc_branch(ks):
        return [_linear_param(ks[0], flat + action_dim, 512),
                _linear_param(ks[1], 512, 256),
                _linear_param(ks[2], 256, 1)]

    return {"conv_q1": conv_branch(keys[0:3]), "fc_q1": fc_branch(keys[3:6]),
            "conv_q2": conv_branch(keys[6:9]), "fc_q2": fc_branch(keys[9:12])}


# ----------------------------------------------------------------------------
# Pack / pad the per-branch weights into the merged, lane-aligned layout.
# ----------------------------------------------------------------------------
def pack_params(raw, input_shape, action_dim):
    c_in, H, W = input_shape
    oh1, ow1 = (H - 8) // 4 + 1, (W - 8) // 4 + 1
    oh2, ow2 = (oh1 - 4) // 2 + 1, (ow1 - 4) // 2 + 1
    oh3, ow3 = (oh2 - 3) // 1 + 1, (ow2 - 3) // 1 + 1
    assert oh3 == 1 and ow3 == 1, "fused head assumes conv3 output is 1x1 (use 40x40 input)"
    assert action_dim <= 128
    flat = 128 * oh3 * ow3                                   # == 128

    (w1a, b1a), (w2a, b2a), (w3a, b3a) = raw["conv_q1"]
    (w1b, b1b), (w2b, b2b), (w3b, b3b) = raw["conv_q2"]
    (fw1a, fb1a), (fw2a, fb2a), (fw3a, fb3a) = raw["fc_q1"]
    (fw1b, fb1b), (fw2b, fb2b), (fw3b, fb3b) = raw["fc_q2"]

    def t(w):  # (O, I, kh, kw) -> (kh, kw, I, O) to match im2col (kh, kw, c) cols
        return jnp.transpose(w, (2, 3, 1, 0))

    C1P = 128  # conv1 packed output channels: q1 0:32, q2 32:64, rest zero pad

    w1p = jnp.zeros((8, 8, c_in, C1P), jnp.float32)
    w1p = w1p.at[:, :, :, 0:32].set(t(w1a)).at[:, :, :, 32:64].set(t(w1b))
    w1p = w1p.reshape(8 * 8 * c_in, C1P)
    b1p = jnp.zeros((C1P,), jnp.float32).at[0:32].set(b1a).at[32:64].set(b1b)

    w2p = jnp.zeros((4, 4, C1P, 128), jnp.float32)
    w2p = w2p.at[:, :, 0:32, 0:64].set(t(w2a)).at[:, :, 32:64, 64:128].set(t(w2b))
    w2p = w2p.reshape(4 * 4 * C1P, 128)
    b2p = jnp.concatenate([b2a, b2b])

    w3p = jnp.zeros((3, 3, 128, 256), jnp.float32)
    w3p = w3p.at[:, :, 0:64, 0:128].set(t(w3a)).at[:, :, 64:128, 128:256].set(t(w3b))
    w3p = w3p.reshape(3 * 3 * 128, 256)
    b3p = jnp.concatenate([b3a, b3b])

    wf1_feat = jnp.zeros((2 * flat, 1024), jnp.float32)
    wf1_feat = wf1_feat.at[0:flat, 0:512].set(fw1a[0:flat])
    wf1_feat = wf1_feat.at[flat:2 * flat, 512:1024].set(fw1b[0:flat])
    wf1_act = jnp.zeros((128, 1024), jnp.float32)
    wf1_act = wf1_act.at[0:action_dim, 0:512].set(fw1a[flat:])
    wf1_act = wf1_act.at[0:action_dim, 512:1024].set(fw1b[flat:])
    bf1 = jnp.concatenate([fb1a, fb1b])

    wf2 = jnp.zeros((1024, 512), jnp.float32)
    wf2 = wf2.at[0:512, 0:256].set(fw2a).at[512:1024, 256:512].set(fw2b)
    bf2 = jnp.concatenate([fb2a, fb2b])

    wf3 = jnp.zeros((512, 128), jnp.float32)
    wf3 = wf3.at[0:256, 0:1].set(fw3a).at[256:512, 1:2].set(fw3b)
    bf3 = jnp.zeros((128,), jnp.float32).at[0].set(fb3a[0]).at[1].set(fb3b[0])

    bf16 = lambda x: x.astype(jnp.bfloat16)
    row = lambda b: b.reshape(1, -1)
    return {
        "w1": bf16(w1p), "b1": row(b1p),
        "w2": bf16(w2p), "b2": row(b2p),
        "w3c": bf16(w3p), "b3c": row(b3p),
        "wf1_feat": bf16(wf1_feat), "wf1_act": bf16(wf1_act), "bf1": row(bf1),
        "wf2": bf16(wf2), "bf2": row(bf2),
        "wf3": bf16(wf3), "bf3": row(bf3),
    }


# ----------------------------------------------------------------------------
# Forward pass: 3 pallas_calls total (conv1, conv2, fused conv3+fc head)
# ----------------------------------------------------------------------------
def critic_forward(packed, state, action):
    B = state.shape[0]
    bf16 = jnp.bfloat16
    x = jnp.transpose(state, (0, 2, 3, 1)).astype(bf16)          # NCHW -> NHWC

    # conv1 (both branches, packed along Cout)
    p1, oh1, ow1 = im2col_nhwc(x, 8, 4)
    a1 = pallas_dense_relu(pad_rows(p1, round_up(p1.shape[0], 8)),
                           packed["w1"], packed["b1"])
    a1 = a1[: B * oh1 * ow1].reshape(B, oh1, ow1, a1.shape[-1])

    # conv2 (both branches)
    p2, oh2, ow2 = im2col_nhwc(a1, 4, 2)
    a2 = pallas_dense_relu(pad_rows(p2, round_up(p2.shape[0], 8)),
                           packed["w2"], packed["b2"])
    # conv3 covers the full 3x3 spatial extent -> its im2col is just a reshape.
    a2 = a2[: B * oh2 * ow2].reshape(B, oh2 * ow2 * a2.shape[-1])

    # fused conv3 + fc1 + fc2 + fc3 (both branches) in a single VMEM-resident kernel
    mb = round_up(B, 8)
    x3 = pad_rows(a2, mb)
    act = jnp.zeros((mb, 128), bf16).at[:B, : action.shape[1]].set(action.astype(bf16))
    out = pallas_head(x3, act, packed)                           # [mb, 128] f32
    return out[:B, 0:1], out[:B, 1:2]


# ----------------------------------------------------------------------------
# Pure-JAX reference (per-branch, unpacked weights, same bf16 operand rounding)
# ----------------------------------------------------------------------------
def _ref_dense(h, w, b, relu):
    y = jnp.dot(h.astype(jnp.bfloat16), w.astype(jnp.bfloat16),
                preferred_element_type=jnp.float32) + b
    if relu:
        return jnp.maximum(y, 0.0).astype(jnp.bfloat16)
    return y


def _ref_branch(conv_params, fc_params, state, action):
    bf16 = jnp.bfloat16
    x = state.astype(bf16)
    for (w, b), s in zip(conv_params, (4, 2, 1)):
        y = jax.lax.conv_general_dilated(
            x, w.astype(bf16), window_strides=(s, s), padding="VALID",
            dimension_numbers=("NCHW", "OIHW", "NCHW"),
            preferred_element_type=jnp.float32)
        x = jnp.maximum(y + b.reshape(1, -1, 1, 1), 0.0).astype(bf16)
    feat = x.reshape(x.shape[0], -1)                             # torch nn.Flatten (C,H,W)
    h = jnp.concatenate([feat, action.astype(bf16)], axis=1)
    h = _ref_dense(h, fc_params[0][0], fc_params[0][1], True)
    h = _ref_dense(h, fc_params[1][0], fc_params[1][1], True)
    return _ref_dense(h, fc_params[2][0], fc_params[2][1], False)


def critic_forward_reference(raw, state, action):
    q1 = _ref_branch(raw["conv_q1"], raw["fc_q1"], state, action)
    q2 = _ref_branch(raw["conv_q2"], raw["fc_q2"], state, action)
    return q1, q2


if __name__ == "__main__":
    key = jax.random.PRNGKey(0)
    k_params, k_state, k_action = jax.random.split(key, 3)

    input_shape = (4, 40, 40)   # smallest spatial size valid for the conv stack
    action_dim = 5
    batch = 2

    raw = init_params(k_params, input_shape, action_dim)
    packed = pack_params(raw, input_shape, action_dim)

    state = jax.random.normal(k_state, (batch,) + input_shape, jnp.float32)
    action = jax.random.normal(k_action, (batch, action_dim), jnp.float32)

    fwd = jax.jit(critic_forward)
    q1, q2 = fwd(packed, state, action)
    jax.block_until_ready((q1, q2))
    assert q1.shape == (batch, 1) and q2.shape == (batch, 1)

    # Correctness check vs. a per-branch pure-JAX reference (same bf16 operand
    # rounding, f32 accumulation) built from the unpacked weights.
    r1, r2 = critic_forward_reference(raw, state, action)
    assert jnp.allclose(q1, r1, atol=1e-2, rtol=1e-2), (q1, r1)
    assert jnp.allclose(q2, r2, atol=1e-2, rtol=1e-2), (q2, r2)

    print("KERNEL_OK")
</pallas_src>

<mosaic_0001>
module attributes {stable_mosaic.version = 11 : i64} {
  func.func @_dense_relu_kernel(%arg0: memref<168x256xbf16, #tpu.memory_space<vmem>>, %arg1: memref<256x128xbf16, #tpu.memory_space<vmem>>, %arg2: memref<1x128xf32, #tpu.memory_space<vmem>>, %arg3: memref<168x128xbf16, #tpu.memory_space<vmem>>) attributes {dimension_semantics = [], scalar_prefetch = 0 : i64, scratch_operands = 0 : i64, tpu.core_type = #tpu.core_type<tc>} {
    %c0 = arith.constant 0 : index
    %c0_0 = arith.constant 0 : index
    %0 = vector.load %arg0[%c0, %c0_0] : memref<168x256xbf16, #tpu.memory_space<vmem>>, vector<168x256xbf16>
    %c0_1 = arith.constant 0 : index
    %c0_2 = arith.constant 0 : index
    %1 = vector.load %arg1[%c0_1, %c0_2] : memref<256x128xbf16, #tpu.memory_space<vmem>>, vector<256x128xbf16>
    %cst = arith.constant dense<0.000000e+00> : vector<168x128xf32>
    %2 = tpu.matmul %0, %1, %cst {dimension_numbers = #tpu.dot_dimension_numbers<[1], [0], [0], [1], [0, 0, 1, 1], [], []>} : vector<168x256xbf16>, vector<256x128xbf16>, vector<168x128xf32> -> vector<168x128xf32>
    %c0_3 = arith.constant 0 : index
    %c0_4 = arith.constant 0 : index
    %3 = vector.load %arg2[%c0_3, %c0_4] : memref<1x128xf32, #tpu.memory_space<vmem>>, vector<1x128xf32>
    %4 = vector.broadcast %3 : vector<1x128xf32> to vector<168x128xf32>
    %5 = arith.addf %2, %4 : vector<168x128xf32>
    %cst_5 = arith.constant 0.000000e+00 : f32
    %6 = vector.broadcast %cst_5 : f32 to vector<168x128xf32>
    %7 = arith.maximumf %5, %6 : vector<168x128xf32>
    %8 = arith.truncf %7 : vector<168x128xf32> to vector<168x128xbf16>
    %c0_6 = arith.constant 0 : index
    %c0_7 = arith.constant 0 : index
    %9 = vector.load %arg3[%c0_6, %c0_7] : memref<168x128xbf16, #tpu.memory_space<vmem>>, vector<168x128xbf16>
    tpu.vector_store %arg3[%c0_6, %c0_7], %8 {strides = array<i32>} : memref<168x128xbf16, #tpu.memory_space<vmem>>, vector<168x128xbf16>,
    return
  }
}

module attributes {stable_mosaic.version = 11 : i64} {
  func.func @_dense_relu_kernel(%arg0: memref<24x2048xbf16, #tpu.memory_space<vmem>>, %arg1: memref<2048x128xbf16, #tpu.memory_space<vmem>>, %arg2: memref<1x128xf32, #tpu.memory_space<vmem>>, %arg3: memref<24x128xbf16, #tpu.memory_space<vmem>>) attributes {dimension_semantics = [], scalar_prefetch = 0 : i64, scratch_operands = 0 : i64, tpu.core_type = #tpu.core_type<tc>} {
    %c0 = arith.constant 0 : index
    %c0_0 = arith.constant 0 : index
    %0 = vector.load %arg0[%c0, %c0_0] : memref<24x2048xbf16, #tpu.memory_space<vmem>>, vector<24x2048xbf16>
    %c0_1 = arith.constant 0 : index
    %c0_2 = arith.constant 0 : index
    %1 = vector.load %arg1[%c0_1, %c0_2] : memref<2048x128xbf16, #tpu.memory_space<vmem>>, vector<2048x128xbf16>
    %cst = arith.constant dense<0.000000e+00> : vector<24x128xf32>
    %2 = tpu.matmul %0, %1, %cst {dimension_numbers = #tpu.dot_dimension_numbers<[1], [0], [0], [1], [0, 0, 1, 1], [], []>} : vector<24x2048xbf16>, vector<2048x128xbf16>, vector<24x128xf32> -> vector<24x128xf32>
    %c0_3 = arith.constant 0 : index
    %c0_4 = arith.constant 0 : index
    %3 = vector.load %arg2[%c0_3, %c0_4] : memref<1x128xf32, #tpu.memory_space<vmem>>, vector<1x128xf32>
    %4 = vector.broadcast %3 : vector<1x128xf32> to vector<24x128xf32>
    %5 = arith.addf %2, %4 : vector<24x128xf32>
    %cst_5 = arith.constant 0.000000e+00 : f32
    %6 = vector.broadcast %cst_5 : f32 to vector<24x128xf32>
    %7 = arith.maximumf %5, %6 : vector<24x128xf32>
    %8 = arith.truncf %7 : vector<24x128xf32> to vector<24x128xbf16>
    %c0_6 = arith.constant 0 : index
    %c0_7 = arith.constant 0 : index
    %9 = vector.load %arg3[%c0_6, %c0_7] : memref<24x128xbf16, #tpu.memory_space<vmem>>, vector<24x128xbf16>
    tpu.vector_store %arg3[%c0_6, %c0_7], %8 {strides = array<i32>} : memref<24x128xbf16, #tpu.memory_space<vmem>>, vector<24x128xbf16>,
    return
  }
}

module attributes {stable_mosaic.version = 11 : i64} {
  func.func @_head_kernel(%arg0: memref<8x1152xbf16, #tpu.memory_space<vmem>>, %arg1: memref<8x128xbf16, #tpu.memory_space<vmem>>, %arg2: memref<1152x256xbf16, #tpu.memory_space<vmem>>, %arg3: memref<1x256xf32, #tpu.memory_space<vmem>>, %arg4: memref<256x1024xbf16, #tpu.memory_space<vmem>>, %arg5: memref<128x1024xbf16, #tpu.memory_space<vmem>>, %arg6: memref<1x1024xf32, #tpu.memory_space<vmem>>, %arg7: memref<1024x512xbf16, #tpu.memory_space<vmem>>, %arg8: memref<1x512xf32, #tpu.memory_space<vmem>>, %arg9: memref<512x128xbf16, #tpu.memory_space<vmem>>, %arg10: memref<1x128xf32, #tpu.memory_space<vmem>>, %arg11: memref<8x128xf32, #tpu.memory_space<vmem>>) attributes {dimension_semantics = [], scalar_prefetch = 0 : i64, scratch_operands = 0 : i64, tpu.core_type = #tpu.core_type<tc>} {
    %c0 = arith.constant 0 : index
    %c0_0 = arith.constant 0 : index
    %0 = vector.load %arg0[%c0, %c0_0] : memref<8x1152xbf16, #tpu.memory_space<vmem>>, vector<8x1152xbf16>
    %c0_1 = arith.constant 0 : index
    %c0_2 = arith.constant 0 : index
    %1 = vector.load %arg2[%c0_1, %c0_2] : memref<1152x256xbf16, #tpu.memory_space<vmem>>, vector<1152x256xbf16>
    %cst = arith.constant dense<0.000000e+00> : vector<8x256xf32>
    %2 = tpu.matmul %0, %1, %cst {dimension_numbers = #tpu.dot_dimension_numbers<[1], [0], [0], [1], [0, 0, 1, 1], [], []>} : vector<8x1152xbf16>, vector<1152x256xbf16>, vector<8x256xf32> -> vector<8x256xf32>
    %c0_3 = arith.constant 0 : index
    %c0_4 = arith.constant 0 : index
    %3 = vector.load %arg3[%c0_3, %c0_4] : memref<1x256xf32, #tpu.memory_space<vmem>>, vector<1x256xf32>
    %4 = vector.broadcast %3 : vector<1x256xf32> to vector<8x256xf32>
    %5 = arith.addf %2, %4 : vector<8x256xf32>
    %cst_5 = arith.constant 0.000000e+00 : f32
    %6 = vector.broadcast %cst_5 : f32 to vector<8x256xf32>
    %7 = arith.maximumf %5, %6 : vector<8x256xf32>
    %8 = arith.truncf %7 : vector<8x256xf32> to vector<8x256xbf16>
    %c0_6 = arith.constant 0 : index
    %c0_7 = arith.constant 0 : index
    %9 = vector.load %arg4[%c0_6, %c0_7] : memref<256x1024xbf16, #tpu.memory_space<vmem>>, vector<256x1024xbf16>
    %cst_8 = arith.constant dense<0.000000e+00> : vector<8x1024xf32>
    %10 = tpu.matmul %8, %9, %cst_8 {dimension_numbers = #tpu.dot_dimension_numbers<[1], [0], [0], [1], [0, 0, 1, 1], [], []>} : vector<8x256xbf16>, vector<256x1024xbf16>, vector<8x1024xf32> -> vector<8x1024xf32>
    %c0_9 = arith.constant 0 : index
    %c0_10 = arith.constant 0 : index
    %11 = vector.load %arg1[%c0_9, %c0_10] : memref<8x128xbf16, #tpu.memory_space<vmem>>, vector<8x128xbf16>
    %c0_11 = arith.constant 0 : index
    %c0_12 = arith.constant 0 : index
    %12 = vector.load %arg5[%c0_11, %c0_12] : memref<128x1024xbf16, #tpu.memory_space<vmem>>, vector<128x1024xbf16>
    %cst_13 = arith.constant dense<0.000000e+00> : vector<8x1024xf32>
    %13 = tpu.matmul %11, %12, %cst_13 {dimension_numbers = #tpu.dot_dimension_numbers<[1], [0], [0], [1], [0, 0, 1, 1], [], []>} : vector<8x128xbf16>, vector<128x1024xbf16>, vector<8x1024xf32> -> vector<8x1024xf32>
    %14 = arith.addf %10, %13 : vector<8x1024xf32>
    %c0_14 = arith.constant 0 : index
    %c0_15 = arith.constant 0 : index
    %15 = vector.load %arg6[%c0_14, %c0_15] : memref<1x1024xf32, #tpu.memory_space<vmem>>, vector<1x1024xf32>
    %16 = vector.broadcast %15 : vector<1x1024xf32> to vector<8x1024xf32>
    %17 = arith.addf %14, %16 : vector<8x1024xf32>
    %cst_16 = arith.constant 0.000000e+00 : f32
    %18 = vector.broadcast %cst_16 : f32 to vector<8x1024xf32>
    %19 = arith.maximumf %17, %18 : vector<8x1024xf32>
    %20 = arith.truncf %19 : vector<8x1024xf32> to vector<8x1024xbf16>
    %c0_17 = arith.constant 0 : index
    %c0_18 = arith.constant 0 : index
    %21 = vector.load %arg7[%c0_17, %c0_18] : memref<1024x512xbf16, #tpu.memory_space<vmem>>, vector<1024x512xbf16>
    %cst_19 = arith.constant dense<0.000000e+00> : vector<8x512xf32>
    %22 = tpu.matmul %20, %21, %cst_19 {dimension_numbers = #tpu.dot_dimension_numbers<[1], [0], [0], [1], [0, 0, 1, 1], [], []>} : vector<8x1024xbf16>, vector<1024x512xbf16>, vector<8x512xf32> -> vector<8x512xf32>
    %c0_20 = arith.constant 0 : index
    %c0_21 = arith.constant 0 : index
    %23 = vector.load %arg8[%c0_20, %c0_21] : memref<1x512xf32, #tpu.memory_space<vmem>>, vector<1x512xf32>
    %24 = vector.broadcast %23 : vector<1x512xf32> to vector<8x512xf32>
    %25 = arith.addf %22, %24 : vector<8x512xf32>
    %cst_22 = arith.constant 0.000000e+00 : f32
    %26 = vector.broadcast %cst_22 : f32 to vector<8x512xf32>
    %27 = arith.maximumf %25, %26 : vector<8x512xf32>
    %28 = arith.truncf %27 : vector<8x512xf32> to vector<8x512xbf16>
    %c0_23 = arith.constant 0 : index
    %c0_24 = arith.constant 0 : index
    %29 = vector.load %arg9[%c0_23, %c0_24] : memref<512x128xbf16, #tpu.memory_space<vmem>>, vector<512x128xbf16>
    %cst_25 = arith.constant dense<0.000000e+00> : vector<8x128xf32>
    %30 = tpu.matmul %28, %29, %cst_25 {dimension_numbers = #tpu.dot_dimension_numbers<[1], [0], [0], [1], [0, 0, 1, 1], [], []>} : vector<8x512xbf16>, vector<512x128xbf16>, vector<8x128xf32> -> vector<8x128xf32>
    %c0_26 = arith.constant 0 : index
    %c0_27 = arith.constant 0 : index
    %31 = vector.load %arg10[%c0_26, %c0_27] : memref<1x128xf32, #tpu.memory_space<vmem>>, vector<1x128xf32>
    %32 = vector.broadcast %31 : vector<1x128xf32> to vector<8x128xf32>
    %33 = arith.addf %30, %32 : vector<8x128xf32>
    %c0_28 = arith.constant 0 : index
    %c0_29 = arith.constant 0 : index
    %34 = vector.load %arg11[%c0_28, %c0_29] : memref<8x128xf32, #tpu.memory_space<vmem>>, vector<8x128xf32>
    tpu.vector_store %arg11[%c0_28, %c0_29], %33 {strides = array<i32>} : memref<8x128xf32, #tpu.memory_space<vmem>>, vector<8x128xf32>,
    return
  }
}

</mosaic_0001>

<llo_original>
// kernel: critic_forward.3
$region0: #{critic_forward.3}
  #allocation0 [shape = 'u32[]', space=smem, size = 0x4, offset = 0x4, fixed_abs, tag = 'smem constant byte address 0x4 - core index']
  #allocation1 [shape = 'u32[144,128]{1,0:T(1,128)}', space=vmem, size = 0x12000, scoped, tag = 'internal scratch']
  %s0 = inlined_call_operand.vmem [shape: bf16[168,256], index: 0, kind: input, shape index: {}]
  %s1 = inlined_call_operand.vmem [shape: bf16[256,128], index: 1, kind: input, shape index: {}]
  %s2 = inlined_call_operand.vmem [shape: f32[1,128], index: 2, kind: input, shape index: {}]
  %s3 = inlined_call_operand.vmem [shape: bf16[168,128], index: 3, kind: output, shape index: {}]
  %s4 = sld [smem:[#allocation0]]
  $region22: #{critic_forward.3} parent=0
    _
  %s6 = ssub.s32 1, %s4
  %s7 = scalar_select 0, %s6, %s4
  // Predicated region
  $region2: #{critic_forward.3} parent=0 // pred_check
    _
  $region3: #{critic_forward.3} parent=0 // pred_check_branch
    %9 = sbr.rel (0) target = $region5
  $region4: #{critic_forward.3} parent=0 // pred_region
    _
  $region5: #{critic_forward.3} parent=0 // pred_fallthru
    _
  // Predicated region
  $region6: #{critic_forward.3} parent=0 // pred_check
    _
  $region7: #{critic_forward.3} parent=0 // pred_check_branch
    %11 = sbr.rel (0) target = $region9
  $region8: #{critic_forward.3} parent=0 // pred_region
    _
  $region9: #{critic_forward.3} parent=0 // pred_fallthru
    _
  // Predicated region
  $region10: #{critic_forward.3} parent=0 // pred_check
    _
  $region11: #{critic_forward.3} parent=0 // pred_check_branch
    %13 = sbr.rel (0) target = $region13
  $region12: #{critic_forward.3} parent=0 // pred_region
    _
  $region13: #{critic_forward.3} parent=0 // pred_fallthru
    _
  %v15 = vld [vmem:[%s0] sm:$0xff]
  %v16 = vld [vmem:[%s0 + $0x8] sm:$0xff]
  %v17 = vld [vmem:[%s0 + $0x10] sm:$0xff]
  %v18 = vld [vmem:[%s0 + $0x18] sm:$0xff]
  %v19 = vld [vmem:[%s0 + $0x20] sm:$0xff]
  %v20 = vld [vmem:[%s0 + $0x28] sm:$0xff]
  %v21 = vld [vmem:[%s0 + $0x30] sm:$0xff]
  %v22 = vld [vmem:[%s0 + $0x38] sm:$0xff]
  %v23 = vld [vmem:[%s0 + $0x40] sm:$0xff]
  %v24 = vld [vmem:[%s0 + $0x48] sm:$0xff]
  %v25 = vld [vmem:[%s0 + $0x50] sm:$0xff]
  %v26 = vld [vmem:[%s0 + $0x58] sm:$0xff]
  %v27 = vld [vmem:[%s0 + $0x60] sm:$0xff]
  %v28 = vld [vmem:[%s0 + $0x68] sm:$0xff]
  %v29 = vld [vmem:[%s0 + $0x70] sm:$0xff]
  %v30 = vld [vmem:[%s0 + $0x78] sm:$0xff]
  %v31 = vld [vmem:[%s0 + $0x80] sm:$0xff]
  %v32 = vld [vmem:[%s0 + $0x88] sm:$0xff]
  %v33 = vld [vmem:[%s0 + $0x90] sm:$0xff]
  %v34 = vld [vmem:[%s0 + $0x98] sm:$0xff]
  %v35 = vld [vmem:[%s0 + $0xa0] sm:$0xff]
  %v36 = vld [vmem:[%s1] sm:$0xf]
  %v37 = vld [vmem:[%s1 + $0x4] sm:$0xf]
  %v38 = vld [vmem:[%s1 + $0x8] sm:$0xf]
  %v39 = vld [vmem:[%s1 + $0xc] sm:$0xf]
  %v40 = vld [vmem:[%s1 + $0x10] sm:$0xf]
  %v41 = vld [vmem:[%s1 + $0x14] sm:$0xf]
  %v42 = vld [vmem:[%s1 + $0x18] sm:$0xf]
  %v43 = vld [vmem:[%s1 + $0x1c] sm:$0xf]
  %v44 = vld [vmem:[%s1 + $0x20] sm:$0xf]
  %v45 = vld [vmem:[%s1 + $0x24] sm:$0xf]
  %v46 = vld [vmem:[%s1 + $0x28] sm:$0xf]
  %v47 = vld [vmem:[%s1 + $0x2c] sm:$0xf]
  %v48 = vld [vmem:[%s1 + $0x30] sm:$0xf]
  %v49 = vld [vmem:[%s1 + $0x34] sm:$0xf]
  %v50 = vld [vmem:[%s1 + $0x38] sm:$0xf]
  %v51 = vld [vmem:[%s1 + $0x3c] sm:$0xf]
  %v52 = vld [vmem:[%s1 + $0x40] sm:$0xf]
  %v53 = vld [vmem:[%s1 + $0x44] sm:$0xf]
  %v54 = vld [vmem:[%s1 + $0x48] sm:$0xf]
  %v55 = vld [vmem:[%s1 + $0x4c] sm:$0xf]
  %v56 = vld [vmem:[%s1 + $0x50] sm:$0xf]
  %v57 = vld [vmem:[%s1 + $0x54] sm:$0xf]
  %v58 = vld [vmem:[%s1 + $0x58] sm:$0xf]
  %v59 = vld [vmem:[%s1 + $0x5c] sm:$0xf]
  %v60 = vld [vmem:[%s1 + $0x60] sm:$0xf]
  %v61 = vld [vmem:[%s1 + $0x64] sm:$0xf]
  %v62 = vld [vmem:[%s1 + $0x68] sm:$0xf]
  %v63 = vld [vmem:[%s1 + $0x6c] sm:$0xf]
  %v64 = vld [vmem:[%s1 + $0x70] sm:$0xf]
  %v65 = vld [vmem:[%s1 + $0x74] sm:$0xf]
  %v66 = vld [vmem:[%s1 + $0x78] sm:$0xf]
  %v67 = vld [vmem:[%s1 + $0x7c] sm:$0xf]
  %v68 = vld [vmem:[%s2] sm:$0x1]
  %v70 = vlaneseq
  %v71 = vshrl.u32 %v70, 7
  %v72 = vsub.s32 0, %v71
  %v73 = vrot.slane %v68, %v72
  %v96 = vunpack.c.l.b16 %v15
  %v97 = vunpack.c.h.b16 %v15
  %v98 = vunpack.c.l.b16 %v16
  %v99 = vunpack.c.h.b16 %v16
  %v100 = vunpack.c.l.b16 %v17
  %v101 = vunpack.c.h.b16 %v17
  %v102 = vunpack.c.l.b16 %v18
  %v103 = vunpack.c.h.b16 %v18
  %v104 = vunpack.c.l.b16 %v19
  %v105 = vunpack.c.h.b16 %v19
  %v106 = vunpack.c.l.b16 %v20
  %v107 = vunpack.c.h.b16 %v20
  %v108 = vunpack.c.l.b16 %v21
  %v109 = vunpack.c.h.b16 %v21
  %v110 = vunpack.c.l.b16 %v22
  %v111 = vunpack.c.h.b16 %v22
  %v112 = vunpack.c.l.b16 %v23
  %v113 = vunpack.c.h.b16 %v23
  %v114 = vunpack.c.l.b16 %v24
  %v115 = vunpack.c.h.b16 %v24
  %v116 = vunpack.c.l.b16 %v25
  %v117 = vunpack.c.h.b16 %v25
  %v118 = vunpack.c.l.b16 %v26
  %v119 = vunpack.c.h.b16 %v26
  %v120 = vunpack.c.l.b16 %v27
  %v121 = vunpack.c.h.b16 %v27
  %v122 = vunpack.c.l.b16 %v28
  %v123 = vunpack.c.h.b16 %v28
  %v124 = vunpack.c.l.b16 %v29
  %v125 = vunpack.c.h.b16 %v29
  %v126 = vunpack.c.l.b16 %v30
  %v127 = vunpack.c.h.b16 %v30
  %v128 = vunpack.c.l.b16 %v31
  %v129 = vunpack.c.h.b16 %v31
  %v130 = vunpack.c.l.b16 %v32
  %v131 = vunpack.c.h.b16 %v32
  %v132 = vunpack.c.l.b16 %v33
  %v133 = vunpack.c.h.b16 %v33
  %v134 = vunpack.c.l.b16 %v34
  %v135 = vunpack.c.h.b16 %v34
  %v136 = vunpack.c.l.b16 %v35
  %v137 = vunpack.c.h.b16 %v35
  %v138 = vpack.c.b16 %v98, %v96
  %v139 = vpack.c.b16 %v99, %v97
  %v140 = vpack.c.b16 %v102, %v100
  %v141 = vpack.c.b16 %v103, %v101
  %v142 = vpack.c.b16 %v106, %v104
  %v143 = vpack.c.b16 %v107, %v105
  %v144 = vpack.c.b16 %v110, %v108
  %v145 = vpack.c.b16 %v111, %v109
  %v146 = vpack.c.b16 %v114, %v112
  %v147 = vpack.c.b16 %v115, %v113
  %v148 = vpack.c.b16 %v118, %v116
  %v149 = vpack.c.b16 %v119, %v117
  %v150 = vpack.c.b16 %v122, %v120
  %v151 = vpack.c.b16 %v123, %v121
  %v152 = vpack.c.b16 %v126, %v124
  %v153 = vpack.c.b16 %v127, %v125
  %v154 = vpack.c.b16 %v130, %v128
  %v155 = vpack.c.b16 %v131, %v129
  %v156 = vpack.c.b16 %v134, %v132
  %v157 = vpack.c.b16 %v135, %v133
  %v158 = vpack.c.b16 %v136, %v136
  %v159 = vpack.c.b16 %v137, %v137
  %v214 = vunpack.c.l.b16 %v36
  %v215 = vunpack.c.l.b16 %v37
  %v216 = vunpack.c.l.b16 %v38
  %v217 = vunpack.c.l.b16 %v39
  %v218 = vunpack.c.l.b16 %v40
  %v219 = vunpack.c.l.b16 %v41
  %v220 = vunpack.c.l.b16 %v42
  %v221 = vunpack.c.l.b16 %v43
  %v222 = vunpack.c.l.b16 %v44
  %v223 = vunpack.c.l.b16 %v45
  %v224 = vunpack.c.l.b16 %v46
  %v225 = vunpack.c.l.b16 %v47
  %v226 = vunpack.c.l.b16 %v48
  %v227 = vunpack.c.l.b16 %v49
  %v228 = vunpack.c.l.b16 %v50
  %v229 = vunpack.c.l.b16 %v51
  %v230 = vunpack.c.l.b16 %v52
  %v231 = vunpack.c.l.b16 %v53
  %v232 = vunpack.c.l.b16 %v54
  %v233 = vunpack.c.l.b16 %v55
  %v234 = vunpack.c.l.b16 %v56
  %v235 = vunpack.c.l.b16 %v57
  %v236 = vunpack.c.l.b16 %v58
  %v237 = vunpack.c.l.b16 %v59
  %v238 = vunpack.c.l.b16 %v60
  %v239 = vunpack.c.l.b16 %v61
  %v240 = vunpack.c.l.b16 %v62
  %v241 = vunpack.c.l.b16 %v63
  %v242 = vunpack.c.l.b16 %v64
  %v243 = vunpack.c.l.b16 %v65
  %v244 = vunpack.c.l.b16 %v66
  %v245 = vunpack.c.l.b16 %v67
  %v246 = vpack.c.b16 %v215, %v214
  %v247 = vpack.c.b16 %v217, %v216
  %v248 = vpack.c.b16 %v219, %v218
  %v249 = vpack.c.b16 %v221, %v220
  %v250 = vpack.c.b16 %v223, %v222
  %v251 = vpack.c.b16 %v225, %v224
  %v252 = vpack.c.b16 %v227, %v226
  %v253 = vpack.c.b16 %v229, %v228
  %v254 = vpack.c.b16 %v231, %v230
  %v255 = vpack.c.b16 %v233, %v232
  %v256 = vpack.c.b16 %v235, %v234
  %v257 = vpack.c.b16 %v237, %v236
  %v258 = vpack.c.b16 %v239, %v238
  %v259 = vpack.c.b16 %v241, %v240
  %v260 = vpack.c.b16 %v243, %v242
  %v261 = vpack.c.b16 %v245, %v244
  %278 = vmatprep.subr.bf16.mxu0 0
  %279 = vmatpush1.bf16.msra.mxu0 %v246
  %280 = vmatprep.subr.bf16.mxu0 0
  %281 = vmatpush1.bf16.msra.mxu0 %v247
  %282 = vmatprep.subr.bf16.mxu0 0
  %283 = vmatpush1.bf16.msra.mxu0 %v248
  %284 = vmatprep.subr.bf16.mxu0 0
  %285 = vmatpush1.bf16.msra.mxu0 %v249
  %286 = vmatprep.subr.bf16.mxu0 0
  %287 = vmatpush1.bf16.msra.mxu0 %v250
  %288 = vmatprep.subr.bf16.mxu0 0
  %289 = vmatpush1.bf16.msra.mxu0 %v251
  %290 = vmatprep.subr.bf16.mxu0 0
  %291 = vmatpush1.bf16.msra.mxu0 %v252
  %292 = vmatprep.subr.bf16.mxu0 0
  %293 = vmatpush1.bf16.msra.mxu0 %v253
  %294 = vmatprep.subr.bf16.mxu0 0
  %295 = vmatpush1.bf16.msra.mxu0 %v254
  %296 = vmatprep.subr.bf16.mxu0 0
  %297 = vmatpush1.bf16.msra.mxu0 %v255
  %298 = vmatprep.subr.bf16.mxu0 0
  %299 = vmatpush1.bf16.msra.mxu0 %v256
  %300 = vmatprep.subr.bf16.mxu0 0
  %301 = vmatpush1.bf16.msra.mxu0 %v257
  %302 = vmatprep.subr.bf16.mxu0 0
  %303 = vmatpush1.bf16.msra.mxu0 %v258
  %304 = vmatprep.subr.bf16.mxu0 0
  %305 = vmatpush1.bf16.msra.mxu0 %v259
  %306 = vmatprep.subr.bf16.mxu0 0
  %307 = vmatpush1.bf16.msra.mxu0 %v260
  %308 = vmatprep.subr.bf16.mxu0 0
  %309 = vmatpush1.bf16.msra.mxu0 %v261
  %310 = vmatprep.mubr.bf16.mxu0 %v139
  %311 = vmatmul.mubr.bf16.gmra.mrb[0].mxu0 %v138
  %v312 = vpop.f32.mrb[0].mxu0
  %v313 = vadd.f32 %v73, %v312
  %v314 = vpop.f32.mrb[0].mxu0
  %v315 = vpop.f32.mrb[0].mxu0
  %v316 = vadd.f32 %v73, %v315
  %v317 = vpop.f32.mrb[0].mxu0
  %318 = vmatprep.mubr.bf16.mxu0 %v141
  %319 = vmatmul.mubr.bf16.gmra.mrb[0].mxu0 %v140
  %v320 = vpop.f32.mrb[0].mxu0
  %v321 = vadd.f32 %v73, %v320
  %v322 = vpop.f32.mrb[0].mxu0
  %v323 = vpop.f32.mrb[0].mxu0
  %v324 = vadd.f32 %v73, %v323
  %v325 = vpop.f32.mrb[0].mxu0
  %326 = vmatprep.mubr.bf16.mxu0 %v143
  %327 = vmatmul.mubr.bf16.gmra.mrb[0].mxu0 %v142
  %v328 = vpop.f32.mrb[0].mxu0
  %v329 = vadd.f32 %v73, %v328
  %v330 = vpop.f32.mrb[0].mxu0
  %v331 = vpop.f32.mrb[0].mxu0
  %v332 = vadd.f32 %v73, %v331
  %v333 = vpop.f32.mrb[0].mxu0
  %334 = vmatprep.mubr.bf16.mxu0 %v145
  %335 = vmatmul.mubr.bf16.gmra.mrb[0].mxu0 %v144
  %v336 = vpop.f32.mrb[0].mxu0
  %v337 = vadd.f32 %v73, %v336
  %v338 = vpop.f32.mrb[0].mxu0
  %v339 = vpop.f32.mrb[0].mxu0
  %v340 = vadd.f32 %v73, %v339
  %v341 = vpop.f32.mrb[0].mxu0
  %342 = vmatprep.mubr.bf16.mxu0 %v147
  %343 = vmatmul.mubr.bf16.gmra.mrb[0].mxu0 %v146
  %v344 = vpop.f32.mrb[0].mxu0
  %v345 = vadd.f32 %v73, %v344
  %v346 = vpop.f32.mrb[0].mxu0
  %v347 = vpop.f32.mrb[0].mxu0
  %v348 = vadd.f32 %v73, %v347
  %v349 = vpop.f32.mrb[0].mxu0
  %350 = vmatprep.mubr.bf16.mxu0 %v149
  %351 = vmatmul.mubr.bf16.gmra.mrb[0].mxu0 %v148
  %v352 = vpop.f32.mrb[0].mxu0
  %v353 = vadd.f32 %v73, %v352
  %v354 = vpop.f32.mrb[0].mxu0
  %v355 = vpop.f32.mrb[0].mxu0
  %v356 = vadd.f32 %v73, %v355
  %v357 = vpop.f32.mrb[0].mxu0
  %358 = vmatprep.mubr.bf16.mxu0 %v151
  %359 = vmatmul.mubr.bf16.gmra.mrb[0].mxu0 %v150
  %v360 = vpop.f32.mrb[0].mxu0
  %v361 = vadd.f32 %v73, %v360
  %v362 = vpop.f32.mrb[0].mxu0
  %v363 = vpop.f32.mrb[0].mxu0
  %v364 = vadd.f32 %v73, %v363
  %v365 = vpop.f32.mrb[0].mxu0
  %366 = vmatprep.mubr.bf16.mxu0 %v153
  %367 = vmatmul.mubr.bf16.gmra.mrb[0].mxu0 %v152
  %v368 = vpop.f32.mrb[0].mxu0
  %v369 = vadd.f32 %v73, %v368
  %v370 = vpop.f32.mrb[0].mxu0
  %v371 = vpop.f32.mrb[0].mxu0
  %v372 = vadd.f32 %v73, %v371
  %v373 = vpop.f32.mrb[0].mxu0
  %374 = vmatprep.mubr.bf16.mxu0 %v155
  %375 = vmatmul.mubr.bf16.gmra.mrb[0].mxu0 %v154
  %v376 = vpop.f32.mrb[0].mxu0
  %v377 = vadd.f32 %v73, %v376
  %v378 = vpop.f32.mrb[0].mxu0
  %v379 = vpop.f32.mrb[0].mxu0
  %v380 = vadd.f32 %v73, %v379
  %v381 = vpop.f32.mrb[0].mxu0
  %382 = vmatprep.mubr.bf16.mxu0 %v157
  %383 = vmatmul.mubr.bf16.gmra.mrb[0].mxu0 %v156
  %v384 = vpop.f32.mrb[0].mxu0
  %v385 = vadd.f32 %v73, %v384
  %v386 = vpop.f32.mrb[0].mxu0
  %v387 = vpop.f32.mrb[0].mxu0
  %v388 = vadd.f32 %v73, %v387
  %v389 = vpop.f32.mrb[0].mxu0
  %390 = vmatprep.mubr.bf16.mxu0 %v159
  %391 = vmatmul.mubr.bf16.gmra.mrb[0].mxu0 %v158
  %v392 = vpop.f32.mrb[0].mxu0
  %v393 = vadd.f32 %v73, %v392
  %v394 = vpop.f32.mrb[0].mxu0
  %v395 = vpop.f32.mrb[0].mxu0
  %v396 = vpop.f32.mrb[0].mxu0
  %397 = vdwg.mxu0
  %v398 = vmax.f32 %v313, 0.0
  %v399 = vmax.f32 %v316, 0.0
  %v400 = vmax.f32 %v321, 0.0
  %v401 = vmax.f32 %v324, 0.0
  %v402 = vmax.f32 %v329, 0.0
  %v403 = vmax.f32 %v332, 0.0
  %v404 = vmax.f32 %v337, 0.0
  %v405 = vmax.f32 %v340, 0.0
  %v406 = vmax.f32 %v345, 0.0
  %v407 = vmax.f32 %v348, 0.0
  %v408 = vmax.f32 %v353, 0.0
  %v409 = vmax.f32 %v356, 0.0
  %v410 = vmax.f32 %v361, 0.0
  %v411 = vmax.f32 %v364, 0.0
  %v412 = vmax.f32 %v369, 0.0
  %v413 = vmax.f32 %v372, 0.0
  %v414 = vmax.f32 %v377, 0.0
  %v415 = vmax.f32 %v380, 0.0
  %v416 = vmax.f32 %v385, 0.0
  %v417 = vmax.f32 %v388, 0.0
  %v418 = vmax.f32 %v393, 0.0
  %v419 = vpack.c.bf16 %v399, %v398
  %v420 = vpack.c.bf16 %v401, %v400
  %v421 = vpack.c.bf16 %v403, %v402
  %v422 = vpack.c.bf16 %v405, %v404
  %v423 = vpack.c.bf16 %v407, %v406
  %v424 = vpack.c.bf16 %v409, %v408
  %v425 = vpack.c.bf16 %v411, %v410
  %v426 = vpack.c.bf16 %v413, %v412
  %v427 = vpack.c.bf16 %v415, %v414
  %v428 = vpack.c.bf16 %v417, %v416
  %v429 = vpack.c.bf16 %v418, %v418
  %v441 = vunpack.c.l.b16 %v419
  %v442 = vunpack.c.h.b16 %v419
  %v443 = vunpack.c.l.b16 %v420
  %v444 = vunpack.c.h.b16 %v420
  %v445 = vunpack.c.l.b16 %v421
  %v446 = vunpack.c.h.b16 %v421
  %v447 = vunpack.c.l.b16 %v422
  %v448 = vunpack.c.h.b16 %v422
  %v449 = vunpack.c.l.b16 %v423
  %v450 = vunpack.c.h.b16 %v423
  %v451 = vunpack.c.l.b16 %v424
  %v452 = vunpack.c.h.b16 %v424
  %v453 = vunpack.c.l.b16 %v425
  %v454 = vunpack.c.h.b16 %v425
  %v455 = vunpack.c.l.b16 %v426
  %v456 = vunpack.c.h.b16 %v426
  %v457 = vunpack.c.l.b16 %v427
  %v458 = vunpack.c.h.b16 %v427
  %v459 = vunpack.c.l.b16 %v428
  %v460 = vunpack.c.h.b16 %v428
  %v461 = vunpack.c.l.b16 %v429
  %v462 = vpack.c.b16 %v441, %v441
  %v463 = vpack.c.b16 %v442, %v442
  %v464 = vpack.c.b16 %v443, %v443
  %v465 = vpack.c.b16 %v444, %v444
  %v466 = vpack.c.b16 %v445, %v445
  %v467 = vpack.c.b16 %v446, %v446
  %v468 = vpack.c.b16 %v447, %v447
  %v469 = vpack.c.b16 %v448, %v448
  %v470 = vpack.c.b16 %v449, %v449
  %v471 = vpack.c.b16 %v450, %v450
  %v472 = vpack.c.b16 %v451, %v451
  %v473 = vpack.c.b16 %v452, %v452
  %v474 = vpack.c.b16 %v453, %v453
  %v475 = vpack.c.b16 %v454, %v454
  %v476 = vpack.c.b16 %v455, %v455
  %v477 = vpack.c.b16 %v456, %v456
  %v478 = vpack.c.b16 %v457, %v457
  %v479 = vpack.c.b16 %v458, %v458
  %v480 = vpack.c.b16 %v459, %v459
  %v481 = vpack.c.b16 %v460, %v460
  %v482 = vpack.c.b16 %v461, %v461
  %504 = vst [vmem:[%s3] sm:$0xf] %v462
  %505 = vst [vmem:[%s3 + $0x4] sm:$0xf] %v463
  %506 = vst [vmem:[%s3 + $0x8] sm:$0xf] %v464
  %507 = vst [vmem:[%s3 + $0xc] sm:$0xf] %v465
  %508 = vst [vmem:[%s3 + $0x10] sm:$0xf] %v466
  %509 = vst [vmem:[%s3 + $0x14] sm:$0xf] %v467
  %510 = vst [vmem:[%s3 + $0x18] sm:$0xf] %v468
  %511 = vst [vmem:[%s3 + $0x1c] sm:$0xf] %v469
  %512 = vst [vmem:[%s3 + $0x20] sm:$0xf] %v470
  %513 = vst [vmem:[%s3 + $0x24] sm:$0xf] %v471
  %514 = vst [vmem:[%s3 + $0x28] sm:$0xf] %v472
  %515 = vst [vmem:[%s3 + $0x2c] sm:$0xf] %v473
  %516 = vst [vmem:[%s3 + $0x30] sm:$0xf] %v474
  %517 = vst [vmem:[%s3 + $0x34] sm:$0xf] %v475
  %518 = vst [vmem:[%s3 + $0x38] sm:$0xf] %v476
  %519 = vst [vmem:[%s3 + $0x3c] sm:$0xf] %v477
  %520 = vst [vmem:[%s3 + $0x40] sm:$0xf] %v478
  %521 = vst [vmem:[%s3 + $0x44] sm:$0xf] %v479
  %522 = vst [vmem:[%s3 + $0x48] sm:$0xf] %v480
  %523 = vst [vmem:[%s3 + $0x4c] sm:$0xf] %v481
  %524 = vst [vmem:[%s3 + $0x50] sm:$0xf] %v482
  // Predicated region
  $region14: #{critic_forward.3} parent=0 // pred_check
    _
  $region15: #{critic_forward.3} parent=0 // pred_check_branch
    %526 = sbr.rel (0) target = $region17
  $region16: #{critic_forward.3} parent=0 // pred_region
    _
  $region17: #{critic_forward.3} parent=0 // pred_fallthru
    _
  // Predicated region
  $region18: #{critic_forward.3} parent=0 // pred_check
    _
  $region19: #{critic_forward.3} parent=0 // pred_check_branch
    %528 = sbr.rel (0) target = $region21
  $region20: #{critic_forward.3} parent=0 // pred_region
    _
  $region21: #{critic_forward.3} parent=0 // pred_fallthru
    _

// kernel: critic_forward.4
$region0: #{critic_forward.4}
  #allocation0 [shape = 'u32[]', space=smem, size = 0x4, offset = 0x4, fixed_abs, tag = 'smem constant byte address 0x4 - core index']
  #allocation1 [shape = 'u32[144,128]{1,0:T(1,128)}', space=vmem, size = 0x12000, scoped, tag = 'internal scratch']
  %s0 = inlined_call_operand.vmem [shape: bf16[24,2048], index: 0, kind: input, shape index: {}]
  %s1 = inlined_call_operand.vmem [shape: bf16[2048,128], index: 1, kind: input, shape index: {}]
  %s2 = inlined_call_operand.vmem [shape: f32[1,128], index: 2, kind: input, shape index: {}]
  %s3 = inlined_call_operand.vmem [shape: bf16[24,128], index: 3, kind: output, shape index: {}]
  %s4 = sld [smem:[#allocation0]]
  $region22: #{critic_forward.4} parent=0
    _
  %s6 = ssub.s32 1, %s4
  %s7 = scalar_select 0, %s6, %s4
  // Predicated region
  $region2: #{critic_forward.4} parent=0 // pred_check
    _
  $region3: #{critic_forward.4} parent=0 // pred_check_branch
    %9 = sbr.rel (0) target = $region5
  $region4: #{critic_forward.4} parent=0 // pred_region
    _
  $region5: #{critic_forward.4} parent=0 // pred_fallthru
    _
  // Predicated region
  $region6: #{critic_forward.4} parent=0 // pred_check
    _
  $region7: #{critic_forward.4} parent=0 // pred_check_branch
    %11 = sbr.rel (0) target = $region9
  $region8: #{critic_forward.4} parent=0 // pred_region
    _
  $region9: #{critic_forward.4} parent=0 // pred_fallthru
    _
  // Predicated region
  $region10: #{critic_forward.4} parent=0 // pred_check
    _
  $region11: #{critic_forward.4} parent=0 // pred_check_branch
    %13 = sbr.rel (0) target = $region13
  $region12: #{critic_forward.4} parent=0 // pred_region
    _
  $region13: #{critic_forward.4} parent=0 // pred_fallthru
    _
  %v15 = vld [vmem:[%s0] sm:$0xff]
  %v16 = vld [vmem:[%s0 + $0x8] sm:$0xff]
  %v17 = vld [vmem:[%s0 + $0x10] sm:$0xff]
  %v18 = vld [vmem:[%s0 + $0x18] sm:$0xff]
  %v19 = vld [vmem:[%s0 + $0x20] sm:$0xff]
  %v20 = vld [vmem:[%s0 + $0x28] sm:$0xff]
  %v21 = vld [vmem:[%s0 + $0x30] sm:$0xff]
  %v22 = vld [vmem:[%s0 + $0x38] sm:$0xff]
  %v23 = vld [vmem:[%s0 + $0x40] sm:$0xff]
  %v24 = vld [vmem:[%s0 + $0x48] sm:$0xff]
  %v25 = vld [vmem:[%s0 + $0x50] sm:$0xff]
  %v26 = vld [vmem:[%s0 + $0x58] sm:$0xff]
  %v27 = vld [vmem:[%s0 + $0x60] sm:$0xff]
  %v28 = vld [vmem:[%s0 + $0x68] sm:$0xff]
  %v29 = vld [vmem:[%s0 + $0x70] sm:$0xff]
  %v30 = vld [vmem:[%s0 + $0x78] sm:$0xff]
  %v31 = vld [vmem:[%s0 + $0x80] sm:$0xff]
  %v32 = vld [vmem:[%s0 + $0x88] sm:$0xff]
  %v33 = vld [vmem:[%s0 + $0x90] sm:$0xff]
  %v34 = vld [vmem:[%s0 + $0x98] sm:$0xff]
  %v35 = vld [vmem:[%s0 + $0xa0] sm:$0xff]
  %v36 = vld [vmem:[%s0 + $0xa8] sm:$0xff]
  %v37 = vld [vmem:[%s0 + $0xb0] sm:$0xff]
  %v38 = vld [vmem:[%s0 + $0xb8] sm:$0xff]
  %v39 = vld [vmem:[%s1] sm:$0xf]
  %v40 = vld [vmem:[%s1 + $0x4] sm:$0xf]
  %v41 = vld [vmem:[%s1 + $0x8] sm:$0xf]
  %v42 = vld [vmem:[%s1 + $0xc] sm:$0xf]
  %v43 = vld [vmem:[%s1 + $0x10] sm:$0xf]
  %v44 = vld [vmem:[%s1 + $0x14] sm:$0xf]
  %v45 = vld [vmem:[%s1 + $0x18] sm:$0xf]
  %v46 = vld [vmem:[%s1 + $0x1c] sm:$0xf]
  %v47 = vld [vmem:[%s1 + $0x20] sm:$0xf]
  %v48 = vld [vmem:[%s1 + $0x24] sm:$0xf]
  %v49 = vld [vmem:[%s1 + $0x28] sm:$0xf]
  %v50 = vld [vmem:[%s1 + $0x2c] sm:$0xf]
  %v51 = vld [vmem:[%s1 + $0x30] sm:$0xf]
  %v52 = vld [vmem:[%s1 + $0x34] sm:$0xf]
  %v53 = vld [vmem:[%s1 + $0x38] sm:$0xf]
  %v54 = vld [vmem:[%s1 + $0x3c] sm:$0xf]
  %v55 = vld [vmem:[%s1 + $0x40] sm:$0xf]
  %v56 = vld [vmem:[%s1 + $0x44] sm:$0xf]
  %v57 = vld [vmem:[%s1 + $0x48] sm:$0xf]
  %v58 = vld [vmem:[%s1 + $0x4c] sm:$0xf]
  %v59 = vld [vmem:[%s1 + $0x50] sm:$0xf]
  %v60 = vld [vmem:[%s1 + $0x54] sm:$0xf]
  %v61 = vld [vmem:[%s1 + $0x58] sm:$0xf]
  %v62 = vld [vmem:[%s1 + $0x5c] sm:$0xf]
  %v63 = vld [vmem:[%s1 + $0x60] sm:$0xf]
  %v64 = vld [vmem:[%s1 + $0x64] sm:$0xf]
  %v65 = vld [vmem:[%s1 + $0x68] sm:$0xf]
  %v66 = vld [vmem:[%s1 + $0x6c] sm:$0xf]
  %v67 = vld [vmem:[%s1 + $0x70] sm:$0xf]
  %v68 = vld [vmem:[%s1 + $0x74] sm:$0xf]
  %v69 = vld [vmem:[%s1 + $0x78] sm:$0xf]
  %v70 = vld [vmem:[%s1 + $0x7c] sm:$0xf]
  %v71 = vld [vmem:[%s1 + $0x80] sm:$0xf]
  %v72 = vld [vmem:[%s1 + $0x84] sm:$0xf]
  %v73 = vld [vmem:[%s1 + $0x88] sm:$0xf]
  %v74 = vld [vmem:[%s1 + $0x8c] sm:$0xf]
  %v75 = vld [vmem:[%s1 + $0x90] sm:$0xf]
  %v76 = vld [vmem:[%s1 + $0x94] sm:$0xf]
  %v77 = vld [vmem:[%s1 + $0x98] sm:$0xf]
  %v78 = vld [vmem:[%s1 + $0x9c] sm:$0xf]
  %v79 = vld [vmem:[%s1 + $0xa0] sm:$0xf]
  %v80 = vld [vmem:[%s1 + $0xa4] sm:$0xf]
  %v81 = vld [vmem:[%s1 + $0xa8] sm:$0xf]
  %v82 = vld [vmem:[%s1 + $0xac] sm:$0xf]
  %v83 = vld [vmem:[%s1 + $0xb0] sm:$0xf]
  %v84 = vld [vmem:[%s1 + $0xb4] sm:$0xf]
  %v85 = vld [vmem:[%s1 + $0xb8] sm:$0xf]
  %v86 = vld [vmem:[%s1 + $0xbc] sm:$0xf]
  %v87 = vld [vmem:[%s1 + $0xc0] sm:$0xf]
  %v88 = vld [vmem:[%s1 + $0xc4] sm:$0xf]
  %v89 = vld [vmem:[%s1 + $0xc8] sm:$0xf]
  %v90 = vld [vmem:[%s1 + $0xcc] sm:$0xf]
  %v91 = vld [vmem:[%s1 + $0xd0] sm:$0xf]
  %v92 = vld [vmem:[%s1 + $0xd4] sm:$0xf]
  %v93 = vld [vmem:[%s1 + $0xd8] sm:$0xf]
  %v94 = vld [vmem:[%s1 + $0xdc] sm:$0xf]
  %v95 = vld [vmem:[%s1 + $0xe0] sm:$0xf]
  %v96 = vld [vmem:[%s1 + $0xe4] sm:$0xf]
  %v97 = vld [vmem:[%s1 + $0xe8] sm:$0xf]
  %v98 = vld [vmem:[%s1 + $0xec] sm:$0xf]
  %v99 = vld [vmem:[%s1 + $0xf0] sm:$0xf]
  %v100 = vld [vmem:[%s1 + $0xf4] sm:$0xf]
  %v101 = vld [vmem:[%s1 + $0xf8] sm:$0xf]
  %v102 = vld [vmem:[%s1 + $0xfc] sm:$0xf]
  %v103 = vld [vmem:[%s1 + $0x100] sm:$0xf]
  %v104 = vld [vmem:[%s1 + $0x104] sm:$0xf]
  %v105 = vld [vmem:[%s1 + $0x108] sm:$0xf]
  %v106 = vld [vmem:[%s1 + $0x10c] sm:$0xf]
  %v107 = vld [vmem:[%s1 + $0x110] sm:$0xf]
  %v108 = vld [vmem:[%s1 + $0x114] sm:$0xf]
  %v109 = vld [vmem:[%s1 + $0x118] sm:$0xf]
  %v110 = vld [vmem:[%s1 + $0x11c] sm:$0xf]
  %v111 = vld [vmem:[%s1 + $0x120] sm:$0xf]
  %v112 = vld [vmem:[%s1 + $0x124] sm:$0xf]
  %v113 = vld [vmem:[%s1 + $0x128] sm:$0xf]
  %v114 = vld [vmem:[%s1 + $0x12c] sm:$0xf]
  %v115 = vld [vmem:[%s1 + $0x130] sm:$0xf]
  %v116 = vld [vmem:[%s1 + $0x134] sm:$0xf]
  %v117 = vld [vmem:[%s1 + $0x138] sm:$0xf]
  %v118 = vld [vmem:[%s1 + $0x13c] sm:$0xf]
  %v119 = vld [vmem:[%s1 + $0x140] sm:$0xf]
  %v120 = vld [vmem:[%s1 + $0x144] sm:$0xf]
  %v121 = vld [vmem:[%s1 + $0x148] sm:$0xf]
  %v122 = vld [vmem:[%s1 + $0x14c] sm:$0xf]
  %v123 = vld [vmem:[%s1 + $0x150] sm:$0xf]
  %v124 = vld [vmem:[%s1 + $0x154] sm:$0xf]
  %v125 = vld [vmem:[%s1 + $0x158] sm:$0xf]
  %v126 = vld [vmem:[%s1 + $0x15c] sm:$0xf]
  %v127 = vld [vmem:[%s1 + $0x160] sm:$0xf]
  %v128 = vld [vmem:[%s1 + $0x164] sm:$0xf]
  %v129 = vld [vmem:[%s1 + $0x168] sm:$0xf]
  %v130 = vld [vmem:[%s1 + $0x16c] sm:$0xf]
  %v131 = vld [vmem:[%s1 + $0x170] sm:$0xf]
  %v132 = vld [vmem:[%s1 + $0x174] sm:$0xf]
  %v133 = vld [vmem:[%s1 + $0x178] sm:$0xf]
  %v134 = vld [vmem:[%s1 + $0x17c] sm:$0xf]
  %v135 = vld [vmem:[%s1 + $0x180] sm:$0xf]
  %v136 = vld [vmem:[%s1 + $0x184] sm:$0xf]
  %v137 = vld [vmem:[%s1 + $0x188] sm:$0xf]
  %v138 = vld [vmem:[%s1 + $0x18c] sm:$0xf]
  %v139 = vld [vmem:[%s1 + $0x190] sm:$0xf]
  %v140 = vld [vmem:[%s1 + $0x194] sm:$0xf]
  %v141 = vld [vmem:[%s1 + $0x198] sm:$0xf]
  %v142 = vld [vmem:[%s1 + $0x19c] sm:$0xf]
  %v143 = vld [vmem:[%s1 + $0x1a0] sm:$0xf]
  %v144 = vld [vmem:[%s1 + $0x1a4] sm:$0xf]
  %v145 = vld [vmem:[%s1 + $0x1a8] sm:$0xf]
  %v146 = vld [vmem:[%s1 + $0x1ac] sm:$0xf]
  %v147 = vld [vmem:[%s1 + $0x1b0] sm:$0xf]
  %v148 = vld [vmem:[%s1 + $0x1b4] sm:$0xf]
  %v149 = vld [vmem:[%s1 + $0x1b8] sm:$0xf]
  %v150 = vld [vmem:[%s1 + $0x1bc] sm:$0xf]
  %v151 = vld [vmem:[%s1 + $0x1c0] sm:$0xf]
  %v152 = vld [vmem:[%s1 + $0x1c4] sm:$0xf]
  %v153 = vld [vmem:[%s1 + $0x1c8] sm:$0xf]
  %v154 = vld [vmem:[%s1 + $0x1cc] sm:$0xf]
  %v155 = vld [vmem:[%s1 + $0x1d0] sm:$0xf]
  %v156 = vld [vmem:[%s1 + $0x1d4] sm:$0xf]
  %v157 = vld [vmem:[%s1 + $0x1d8] sm:$0xf]
  %v158 = vld [vmem:[%s1 + $0x1dc] sm:$0xf]
  %v159 = vld [vmem:[%s1 + $0x1e0] sm:$0xf]
  %v160 = vld [vmem:[%s1 + $0x1e4] sm:$0xf]
  %v161 = vld [vmem:[%s1 + $0x1e8] sm:$0xf]
  %v162 = vld [vmem:[%s1 + $0x1ec] sm:$0xf]
  %v163 = vld [vmem:[%s1 + $0x1f0] sm:$0xf]
  %v164 = vld [vmem:[%s1 + $0x1f4] sm:$0xf]
  %v165 = vld [vmem:[%s1 + $0x1f8] sm:$0xf]
  %v166 = vld [vmem:[%s1 + $0x1fc] sm:$0xf]
  %v167 = vld [vmem:[%s1 + $0x200] sm:$0xf]
  %v168 = vld [vmem:[%s1 + $0x204] sm:$0xf]
  %v169 = vld [vmem:[%s1 + $0x208] sm:$0xf]
  %v170 = vld [vmem:[%s1 + $0x20c] sm:$0xf]
  %v171 = vld [vmem:[%s1 + $0x210] sm:$0xf]
  %v172 = vld [vmem:[%s1 + $0x214] sm:$0xf]
  %v173 = vld [vmem:[%s1 + $0x218] sm:$0xf]
  %v174 = vld [vmem:[%s1 + $0x21c] sm:$0xf]
  %v175 = vld [vmem:[%s1 + $0x220] sm:$0xf]
  %v176 = vld [vmem:[%s1 + $0x224] sm:$0xf]
  %v177 = vld [vmem:[%s1 + $0x228] sm:$0xf]
  %v178 = vld [vmem:[%s1 + $0x22c] sm:$0xf]
  %v179 = vld [vmem:[%s1 + $0x230] sm:$0xf]
  %v180 = vld [vmem:[%s1 + $0x234] sm:$0xf]
  %v181 = vld [vmem:[%s1 + $0x238] sm:$0xf]
  %v182 = vld [vmem:[%s1 + $0x23c] sm:$0xf]
  %v183 = vld [vmem:[%s1 + $0x240] sm:$0xf]
  %v184 = vld [vmem:[%s1 + $0x244] sm:$0xf]
  %v185 = vld [vmem:[%s1 + $0x248] sm:$0xf]
  %v186 = vld [vmem:[%s1 + $0x24c] sm:$0xf]
  %v187 = vld [vmem:[%s1 + $0x250] sm:$0xf]
  %v188 = vld [vmem:[%s1 + $0x254] sm:$0xf]
  %v189 = vld [vmem:[%s1 + $0x258] sm:$0xf]
  %v190 = vld [vmem:[%s1 + $0x25c] sm:$0xf]
  %v191 = vld [vmem:[%s1 + $0x260] sm:$0xf]
  %v192 = vld [vmem:[%s1 + $0x264] sm:$0xf]
  %v193 = vld [vmem:[%s1 + $0x268] sm:$0xf]
  %v194 = vld [vmem:[%s1 + $0x26c] sm:$0xf]
  %v195 = vld [vmem:[%s1 + $0x270] sm:$0xf]
  %v196 = vld [vmem:[%s1 + $0x274] sm:$0xf]
  %v197 = vld [vmem:[%s1 + $0x278] sm:$0xf]
  %v198 = vld [vmem:[%s1 + $0x27c] sm:$0xf]
  %v199 = vld [vmem:[%s1 + $0x280] sm:$0xf]
  %v200 = vld [vmem:[%s1 + $0x284] sm:$0xf]
  %v201 = vld [vmem:[%s1 + $0x288] sm:$0xf]
  %v202 = vld [vmem:[%s1 + $0x28c] sm:$0xf]
  %v203 = vld [vmem:[%s1 + $0x290] sm:$0xf]
  %v204 = vld [vmem:[%s1 + $0x294] sm:$0xf]
  %v205 = vld [vmem:[%s1 + $0x298] sm:$0xf]
  %v206 = vld [vmem:[%s1 + $0x29c] sm:$0xf]
  %v207 = vld [vmem:[%s1 + $0x2a0] sm:$0xf]
  %v208 = vld [vmem:[%s1 + $0x2a4] sm:$0xf]
  %v209 = vld [vmem:[%s1 + $0x2a8] sm:$0xf]
  %v210 = vld [vmem:[%s1 + $0x2ac] sm:$0xf]
  %v211 = vld [vmem:[%s1 + $0x2b0] sm:$0xf]
  %v212 = vld [vmem:[%s1 + $0x2b4] sm:$0xf]
  %v213 = vld [vmem:[%s1 + $0x2b8] sm:$0xf]
  %v214 = vld [vmem:[%s1 + $0x2bc] sm:$0xf]
  %v215 = vld [vmem:[%s1 + $0x2c0] sm:$0xf]
  %v216 = vld [vmem:[%s1 + $0x2c4] sm:$0xf]
  %v217 = vld [vmem:[%s1 + $0x2c8] sm:$0xf]
  %v218 = vld [vmem:[%s1 + $0x2cc] sm:$0xf]
  %v219 = vld [vmem:[%s1 + $0x2d0] sm:$0xf]
  %v220 = vld [vmem:[%s1 + $0x2d4] sm:$0xf]
  %v221 = vld [vmem:[%s1 + $0x2d8] sm:$0xf]
  %v222 = vld [vmem:[%s1 + $0x2dc] sm:$0xf]
  %v223 = vld [vmem:[%s1 + $0x2e0] sm:$0xf]
  %v224 = vld [vmem:[%s1 + $0x2e4] sm:$0xf]
  %v225 = vld [vmem:[%s1 + $0x2e8] sm:$0xf]
  %v226 = vld [vmem:[%s1 + $0x2ec] sm:$0xf]
  %v227 = vld [vmem:[%s1 + $0x2f0] sm:$0xf]
  %v228 = vld [vmem:[%s1 + $0x2f4] sm:$0xf]
  %v229 = vld [vmem:[%s1 + $0x2f8] sm:$0xf]
  %v230 = vld [vmem:[%s1 + $0x2fc] sm:$0xf]
  %v231 = vld [vmem:[%s1 + $0x300] sm:$0xf]
  %v232 = vld [vmem:[%s1 + $0x304] sm:$0xf]
  %v233 = vld [vmem:[%s1 + $0x308] sm:$0xf]
  %v234 = vld [vmem:[%s1 + $0x30c] sm:$0xf]
  %v235 = vld [vmem:[%s1 + $0x310] sm:$0xf]
  %v236 = vld [vmem:[%s1 + $0x314] sm:$0xf]
  %v237 = vld [vmem:[%s1 + $0x318] sm:$0xf]
  %v238 = vld [vmem:[%s1 + $0x31c] sm:$0xf]
  %v239 = vld [vmem:[%s1 + $0x320] sm:$0xf]
  %v240 = vld [vmem:[%s1 + $0x324] sm:$0xf]
  %v241 = vld [vmem:[%s1 + $0x328] sm:$0xf]
  %v242 = vld [vmem:[%s1 + $0x32c] sm:$0xf]
  %v243 = vld [vmem:[%s1 + $0x330] sm:$0xf]
  %v244 = vld [vmem:[%s1 + $0x334] sm:$0xf]
  %v245 = vld [vmem:[%s1 + $0x338] sm:$0xf]
  %v246 = vld [vmem:[%s1 + $0x33c] sm:$0xf]
  %v247 = vld [vmem:[%s1 + $0x340] sm:$0xf]
  %v248 = vld [vmem:[%s1 + $0x344] sm:$0xf]
  %v249 = vld [vmem:[%s1 + $0x348] sm:$0xf]
  %v250 = vld [vmem:[%s1 + $0x34c] sm:$0xf]
  %v251 = vld [vmem:[%s1 + $0x350] sm:$0xf]
  %v252 = vld [vmem:[%s1 + $0x354] sm:$0xf]
  %v253 = vld [vmem:[%s1 + $0x358] sm:$0xf]
  %v254 = vld [vmem:[%s1 + $0x35c] sm:$0xf]
  %v255 = vld [vmem:[%s1 + $0x360] sm:$0xf]
  %v256 = vld [vmem:[%s1 + $0x364] sm:$0xf]
  %v257 = vld [vmem:[%s1 + $0x368] sm:$0xf]
  %v258 = vld [vmem:[%s1 + $0x36c] sm:$0xf]
  %v259 = vld [vmem:[%s1 + $0x370] sm:$0xf]
  %v260 = vld [vmem:[%s1 + $0x374] sm:$0xf]
  %v261 = vld [vmem:[%s1 + $0x378] sm:$0xf]
  %v262 = vld [vmem:[%s1 + $0x37c] sm:$0xf]
  %v263 = vld [vmem:[%s1 + $0x380] sm:$0xf]
  %v264 = vld [vmem:[%s1 + $0x384] sm:$0xf]
  %v265 = vld [vmem:[%s1 + $0x388] sm:$0xf]
  %v266 = vld [vmem:[%s1 + $0x38c] sm:$0xf]
  %v267 = vld [vmem:[%s1 + $0x390] sm:$0xf]
  %v268 = vld [vmem:[%s1 + $0x394] sm:$0xf]
  %v269 = vld [vmem:[%s1 + $0x398] sm:$0xf]
  %v270 = vld [vmem:[%s1 + $0x39c] sm:$0xf]
  %v271 = vld [vmem:[%s1 + $0x3a0] sm:$0xf]
  %v272 = vld [vmem:[%s1 + $0x3a4] sm:$0xf]
  %v273 = vld [vmem:[%s1 + $0x3a8] sm:$0xf]
  %v274 = vld [vmem:[%s1 + $0x3ac] sm:$0xf]
  %v275 = vld [vmem:[%s1 + $0x3b0] sm:$0xf]
  %v276 = vld [vmem:[%s1 + $0x3b4] sm:$0xf]
  %v277 = vld [vmem:[%s1 + $0x3b8] sm:$0xf]
  %v278 = vld [vmem:[%s1 + $0x3bc] sm:$0xf]
  %v279 = vld [vmem:[%s1 + $0x3c0] sm:$0xf]
  %v280 = vld [vmem:[%s1 + $0x3c4] sm:$0xf]
  %v281 = vld [vmem:[%s1 + $0x3c8] sm:$0xf]
  %v282 = vld [vmem:[%s1 + $0x3cc] sm:$0xf]
  %v283 = vld [vmem:[%s1 + $0x3d0] sm:$0xf]
  %v284 = vld [vmem:[%s1 + $0x3d4] sm:$0xf]
  %v285 = vld [vmem:[%s1 + $0x3d8] sm:$0xf]
  %v286 = vld [vmem:[%s1 + $0x3dc] sm:$0xf]
  %v287 = vld [vmem:[%s1 + $0x3e0] sm:$0xf]
  %v288 = vld [vmem:[%s1 + $0x3e4] sm:$0xf]
  %v289 = vld [vmem:[%s1 + $0x3e8] sm:$0xf]
  %v290 = vld [vmem:[%s1 + $0x3ec] sm:$0xf]
  %v291 = vld [vmem:[%s1 + $0x3f0] sm:$0xf]
  %v292 = vld [vmem:[%s1 + $0x3f4] sm:$0xf]
  %v293 = vld [vmem:[%s1 + $0x3f8] sm:$0xf]
  %v294 = vld [vmem:[%s1 + $0x3fc] sm:$0xf]
  %v295 = vld [vmem:[%s2] sm:$0x1]
  %v297 = vlaneseq
  %v298 = vshrl.u32 %v297, 7
  %v299 = vsub.s32 0, %v298
  %v300 = vrot.slane %v295, %v299
  %v326 = vunpack.c.l.b16 %v15
  %v327 = vunpack.c.h.b16 %v15
  %v328 = vunpack.c.l.b16 %v16
  %v329 = vunpack.c.h.b16 %v16
  %v330 = vunpack.c.l.b16 %v17
  %v331 = vunpack.c.h.b16 %v17
  %v332 = vunpack.c.l.b16 %v18
  %v333 = vunpack.c.h.b16 %v18
  %v334 = vunpack.c.l.b16 %v19
  %v335 = vunpack.c.h.b16 %v19
  %v336 = vunpack.c.l.b16 %v20
  %v337 = vunpack.c.h.b16 %v20
  %v338 = vunpack.c.l.b16 %v21
  %v339 = vunpack.c.h.b16 %v21
  %v340 = vunpack.c.l.b16 %v22
  %v341 = vunpack.c.h.b16 %v22
  %v342 = vunpack.c.l.b16 %v23
  %v343 = vunpack.c.h.b16 %v23
  %v344 = vunpack.c.l.b16 %v24
  %v345 = vunpack.c.h.b16 %v24
  %v346 = vunpack.c.l.b16 %v25
  %v347 = vunpack.c.h.b16 %v25
  %v348 = vunpack.c.l.b16 %v26
  %v349 = vunpack.c.h.b16 %v26
  %v350 = vunpack.c.l.b16 %v27
  %v351 = vunpack.c.h.b16 %v27
  %v352 = vunpack.c.l.b16 %v28
  %v353 = vunpack.c.h.b16 %v28
  %v354 = vunpack.c.l.b16 %v29
  %v355 = vunpack.c.h.b16 %v29
  %v356 = vunpack.c.l.b16 %v30
  %v357 = vunpack.c.h.b16 %v30
  %v358 = vunpack.c.l.b16 %v31
  %v359 = vunpack.c.h.b16 %v31
  %v360 = vunpack.c.l.b16 %v32
  %v361 = vunpack.c.h.b16 %v32
  %v362 = vunpack.c.l.b16 %v33
  %v363 = vunpack.c.h.b16 %v33
  %v364 = vunpack.c.l.b16 %v34
  %v365 = vunpack.c.h.b16 %v34
  %v366 = vunpack.c.l.b16 %v35
  %v367 = vunpack.c.h.b16 %v35
  %v368 = vunpack.c.l.b16 %v36
  %v369 = vunpack.c.h.b16 %v36
  %v370 = vunpack.c.l.b16 %v37
  %v371 = vunpack.c.h.b16 %v37
  %v372 = vunpack.c.l.b16 %v38
  %v373 = vunpack.c.h.b16 %v38
  %v374 = vpack.c.b16 %v342, %v326
  %v375 = vpack.c.b16 %v343, %v327
  %v376 = vpack.c.b16 %v344, %v328
  %v377 = vpack.c.b16 %v345, %v329
  %v378 = vpack.c.b16 %v346, %v330
  %v379 = vpack.c.b16 %v347, %v331
  %v380 = vpack.c.b16 %v348, %v332
  %v381 = vpack.c.b16 %v349, %v333
  %v382 = vpack.c.b16 %v350, %v334
  %v383 = vpack.c.b16 %v351, %v335
  %v384 = vpack.c.b16 %v352, %v336
  %v385 = vpack.c.b16 %v353, %v337
  %v386 = vpack.c.b16 %v354, %v338
  %v387 = vpack.c.b16 %v355, %v339
  %v388 = vpack.c.b16 %v356, %v340
  %v389 = vpack.c.b16 %v357, %v341
  %v390 = vpack.c.b16 %v358, %v358
  %v391 = vpack.c.b16 %v359, %v359
  %v392 = vpack.c.b16 %v360, %v360
  %v393 = vpack.c.b16 %v361, %v361
  %v394 = vpack.c.b16 %v362, %v362
  %v395 = vpack.c.b16 %v363, %v363
  %v396 = vpack.c.b16 %v364, %v364
  %v397 = vpack.c.b16 %v365, %v365
  %v398 = vpack.c.b16 %v366, %v366
  %v399 = vpack.c.b16 %v367, %v367
  %v400 = vpack.c.b16 %v368, %v368
  %v401 = vpack.c.b16 %v369, %v369
  %v402 = vpack.c.b16 %v370, %v370
  %v403 = vpack.c.b16 %v371, %v371
  %v404 = vpack.c.b16 %v372, %v372
  %v405 = vpack.c.b16 %v373, %v373
  %v694 = vunpack.c.l.b16 %v39
  %v695 = vunpack.c.l.b16 %v40
  %v696 = vunpack.c.l.b16 %v41
  %v697 = vunpack.c.l.b16 %v42
  %v698 = vunpack.c.l.b16 %v43
  %v699 = vunpack.c.l.b16 %v44
  %v700 = vunpack.c.l.b16 %v45
  %v701 = vunpack.c.l.b16 %v46
  %v702 = vunpack.c.l.b16 %v47
  %v703 = vunpack.c.l.b16 %v48
  %v704 = vunpack.c.l.b16 %v49
  %v705 = vunpack.c.l.b16 %v50
  %v706 = vunpack.c.l.b16 %v51
  %v707 = vunpack.c.l.b16 %v52
  %v708 = vunpack.c.l.b16 %v53
  %v709 = vunpack.c.l.b16 %v54
  %v710 = vunpack.c.l.b16 %v55
  %v711 = vunpack.c.l.b16 %v56
  %v712 = vunpack.c.l.b16 %v57
  %v713 = vunpack.c.l.b16 %v58
  %v714 = vunpack.c.l.b16 %v59
  %v715 = vunpack.c.l.b16 %v60
  %v716 = vunpack.c.l.b16 %v61
  %v717 = vunpack.c.l.b16 %v62
  %v718 = vunpack.c.l.b16 %v63
  %v719 = vunpack.c.l.b16 %v64
  %v720 = vunpack.c.l.b16 %v65
  %v721 = vunpack.c.l.b16 %v66
  %v722 = vunpack.c.l.b16 %v67
  %v723 = vunpack.c.l.b16 %v68
  %v724 = vunpack.c.l.b16 %v69
  %v725 = vunpack.c.l.b16 %v70
  %v726 = vunpack.c.l.b16 %v71
  %v727 = vunpack.c.l.b16 %v72
  %v728 = vunpack.c.l.b16 %v73
  %v729 = vunpack.c.l.b16 %v74
  %v730 = vunpack.c.l.b16 %v75
  %v731 = vunpack.c.l.b16 %v76
  %v732 = vunpack.c.l.b16 %v77
  %v733 = vunpack.c.l.b16 %v78
  %v734 = vunpack.c.l.b16 %v79
  %v735 = vunpack.c.l.b16 %v80
  %v736 = vunpack.c.l.b16 %v81
  %v737 = vunpack.c.l.b16 %v82
  %v738 = vunpack.c.l.b16 %v83
  %v739 = vunpack.c.l.b16 %v84
  %v740 = vunpack.c.l.b16 %v85
  %v741 = vunpack.c.l.b16 %v86
  %v742 = vunpack.c.l.b16 %v87
  %v743 = vunpack.c.l.b16 %v88
  %v744 = vunpack.c.l.b16 %v89
  %v745 = vunpack.c.l.b16 %v90
  %v746 = vunpack.c.l.b16 %v91
  %v747 = vunpack.c.l.b16 %v92
  %v748 = vunpack.c.l.b16 %v93
  %v749 = vunpack.c.l.b16 %v94
  %v750 = vunpack.c.l.b16 %v95
  %v751 = vunpack.c.l.b16 %v96
  %v752 = vunpack.c.l.b16 %v97
  %v753 = vunpack.c.l.b16 %v98
  %v754 = vunpack.c.l.b16 %v99
  %v755 = vunpack.c.l.b16 %v100
  %v756 = vunpack.c.l.b16 %v101
  %v757 = vunpack.c.l.b16 %v102
  %v758 = vunpack.c.l.b16 %v103
  %v759 = vunpack.c.l.b16 %v104
  %v760 = vunpack.c.l.b16 %v105
  %v761 = vunpack.c.l.b16 %v106
  %v762 = vunpack.c.l.b16 %v107
  %v763 = vunpack.c.l.b16 %v108
  %v764 = vunpack.c.l.b16 %v109
  %v765 = vunpack.c.l.b16 %v110
  %v766 = vunpack.c.l.b16 %v111
  %v767 = vunpack.c.l.b16 %v112
  %v768 = vunpack.c.l.b16 %v113
  %v769 = vunpack.c.l.b16 %v114
  %v770 = vunpack.c.l.b16 %v115
  %v771 = vunpack.c.l.b16 %v116
  %v772 = vunpack.c.l.b16 %v117
  %v773 = vunpack.c.l.b16 %v118
  %v774 = vunpack.c.l.b16 %v119
  %v775 = vunpack.c.l.b16 %v120
  %v776 = vunpack.c.l.b16 %v121
  %v777 = vunpack.c.l.b16 %v122
  %v778 = vunpack.c.l.b16 %v123
  %v779 = vunpack.c.l.b16 %v124
  %v780 = vunpack.c.l.b16 %v125
  %v781 = vunpack.c.l.b16 %v126
  %v782 = vunpack.c.l.b16 %v127
  %v783 = vunpack.c.l.b16 %v128
  %v784 = vunpack.c.l.b16 %v129
  %v785 = vunpack.c.l.b16 %v130
  %v786 = vunpack.c.l.b16 %v131
  %v787 = vunpack.c.l.b16 %v132
  %v788 = vunpack.c.l.b16 %v133
  %v789 = vunpack.c.l.b16 %v134
  %v790 = vunpack.c.l.b16 %v135
  %v791 = vunpack.c.l.b16 %v136
  %v792 = vunpack.c.l.b16 %v137
  %v793 = vunpack.c.l.b16 %v138
  %v794 = vunpack.c.l.b16 %v139
  %v795 = vunpack.c.l.b16 %v140
  %v796 = vunpack.c.l.b16 %v141
  %v797 = vunpack.c.l.b16 %v142
  %v798 = vunpack.c.l.b16 %v143
  %v799 = vunpack.c.l.b16 %v144
  %v800 = vunpack.c.l.b16 %v145
  %v801 = vunpack.c.l.b16 %v146
  %v802 = vunpack.c.l.b16 %v147
  %v803 = vunpack.c.l.b16 %v148
  %v804 = vunpack.c.l.b16 %v149
  %v805 = vunpack.c.l.b16 %v150
  %v806 = vunpack.c.l.b16 %v151
  %v807 = vunpack.c.l.b16 %v152
  %v808 = vunpack.c.l.b16 %v153
  %v809 = vunpack.c.l.b16 %v154
  %v810 = vunpack.c.l.b16 %v155
  %v811 = vunpack.c.l.b16 %v156
  %v812 = vunpack.c.l.b16 %v157
  %v813 = vunpack.c.l.b16 %v158
  %v814 = vunpack.c.l.b16 %v159
  %v815 = vunpack.c.l.b16 %v160
  %v816 = vunpack.c.l.b16 %v161
  %v817 = vunpack.c.l.b16 %v162
  %v818 = vunpack.c.l.b16 %v163
  %v819 = vunpack.c.l.b16 %v164
  %v820 = vunpack.c.l.b16 %v165
  %v821 = vunpack.c.l.b16 %v166
  %v822 = vunpack.c.l.b16 %v167
  %v823 = vunpack.c.l.b16 %v168
  %v824 = vunpack.c.l.b16 %v169
  %v825 = vunpack.c.l.b16 %v170
  %v826 = vunpack.c.l.b16 %v171
  %v827 = vunpack.c.l.b16 %v172
  %v828 = vunpack.c.l.b16 %v173
  %v829 = vunpack.c.l.b16 %v174
  %v830 = vunpack.c.l.b16 %v175
  %v831 = vunpack.c.l.b16 %v176
  %v832 = vunpack.c.l.b16 %v177
  %v833 = vunpack.c.l.b16 %v178
  %v834 = vunpack.c.l.b16 %v179
  %v835 = vunpack.c.l.b16 %v180
  %v836 = vunpack.c.l.b16 %v181
  %v837 = vunpack.c.l.b16 %v182
  %v838 = vunpack.c.l.b16 %v183
  %v839 = vunpack.c.l.b16 %v184
  %v840 = vunpack.c.l.b16 %v185
  %v841 = vunpack.c.l.b16 %v186
  %v842 = vunpack.c.l.b16 %v187
  %v843 = vunpack.c.l.b16 %v188
  %v844 = vunpack.c.l.b16 %v189
  %v845 = vunpack.c.l.b16 %v190
  %v846 = vunpack.c.l.b16 %v191
  %v847 = vunpack.c.l.b16 %v192
  %v848 = vunpack.c.l.b16 %v193
  %v849 = vunpack.c.l.b16 %v194
  %v850 = vunpack.c.l.b16 %v195
  %v851 = vunpack.c.l.b16 %v196
  %v852 = vunpack.c.l.b16 %v197
  %v853 = vunpack.c.l.b16 %v198
  %v854 = vunpack.c.l.b16 %v199
  %v855 = vunpack.c.l.b16 %v200
  %v856 = vunpack.c.l.b16 %v201
  %v857 = vunpack.c.l.b16 %v202
  %v858 = vunpack.c.l.b16 %v203
  %v859 = vunpack.c.l.b16 %v204
  %v860 = vunpack.c.l.b16 %v205
  %v861 = vunpack.c.l.b16 %v206
  %v862 = vunpack.c.l.b16 %v207
  %v863 = vunpack.c.l.b16 %v208
  %v864 = vunpack.c.l.b16 %v209
  %v865 = vunpack.c.l.b16 %v210
  %v866 = vunpack.c.l.b16 %v211
  %v867 = vunpack.c.l.b16 %v212
  %v868 = vunpack.c.l.b16 %v213
  %v869 = vunpack.c.l.b16 %v214
  %v870 = vunpack.c.l.b16 %v215
  %v871 = vunpack.c.l.b16 %v216
  %v872 = vunpack.c.l.b16 %v217
  %v873 = vunpack.c.l.b16 %v218
  %v874 = vunpack.c.l.b16 %v219
  %v875 = vunpack.c.l.b16 %v220
  %v876 = vunpack.c.l.b16 %v221
  %v877 = vunpack.c.l.b16 %v222
  %v878 = vunpack.c.l.b16 %v223
  %v879 = vunpack.c.l.b16 %v224
  %v880 = vunpack.c.l.b16 %v225
  %v881 = vunpack.c.l.b16 %v226
  %v882 = vunpack.c.l.b16 %v227
  %v883 = vunpack.c.l.b16 %v228
  %v884 = vunpack.c.l.b16 %v229
  %v885 = vunpack.c.l.b16 %v230
  %v886 = vunpack.c.l.b16 %v231
  %v887 = vunpack.c.l.b16 %v232
  %v888 = vunpack.c.l.b16 %v233
  %v889 = vunpack.c.l.b16 %v234
  %v890 = vunpack.c.l.b16 %v235
  %v891 = vunpack.c.l.b16 %v236
  %v892 = vunpack.c.l.b16 %v237
  %v893 = vunpack.c.l.b16 %v238
  %v894 = vunpack.c.l.b16 %v239
  %v895 = vunpack.c.l.b16 %v240
  %v896 = vunpack.c.l.b16 %v241
  %v897 = vunpack.c.l.b16 %v242
  %v898 = vunpack.c.l.b16 %v243
  %v899 = vunpack.c.l.b16 %v244
  %v900 = vunpack.c.l.b16 %v245
  %v901 = vunpack.c.l.b16 %v246
  %v902 = vunpack.c.l.b16 %v247
  %v903 = vunpack.c.l.b16 %v248
  %v904 = vunpack.c.l.b16 %v249
  %v905 = vunpack.c.l.b16 %v250
  %v906 = vunpack.c.l.b16 %v251
  %v907 = vunpack.c.l.b16 %v252
  %v908 = vunpack.c.l.b16 %v253
  %v909 = vunpack.c.l.b16 %v254
  %v910 = vunpack.c.l.b16 %v255
  %v911 = vunpack.c.l.b16 %v256
  %v912 = vunpack.c.l.b16 %v257
  %v913 = vunpack.c.l.b16 %v258
  %v914 = vunpack.c.l.b16 %v259
  %v915 = vunpack.c.l.b16 %v260
  %v916 = vunpack.c.l.b16 %v261
  %v917 = vunpack.c.l.b16 %v262
  %v918 = vunpack.c.l.b16 %v263
  %v919 = vunpack.c.l.b16 %v264
  %v920 = vunpack.c.l.b16 %v265
  %v921 = vunpack.c.l.b16 %v266
  %v922 = vunpack.c.l.b16 %v267
  %v923 = vunpack.c.l.b16 %v268
  %v924 = vunpack.c.l.b16 %v269
  %v925 = vunpack.c.l.b16 %v270
  %v926 = vunpack.c.l.b16 %v271
  %v927 = vunpack.c.l.b16 %v272
  %v928 = vunpack.c.l.b16 %v273
  %v929 = vunpack.c.l.b16 %v274
  %v930 = vunpack.c.l.b16 %v275
  %v931 = vunpack.c.l.b16 %v276
  %v932 = vunpack.c.l.b16 %v277
  %v933 = vunpack.c.l.b16 %v278
  %v934 = vunpack.c.l.b16 %v279
  %v935 = vunpack.c.l.b16 %v280
  %v936 = vunpack.c.l.b16 %v281
  %v937 = vunpack.c.l.b16 %v282
  %v938 = vunpack.c.l.b16 %v283
  %v939 = vunpack.c.l.b16 %v284
  %v940 = vunpack.c.l.b16 %v285
  %v941 = vunpack.c.l.b16 %v286
  %v942 = vunpack.c.l.b16 %v287
  %v943 = vunpack.c.l.b16 %v288
  %v944 = vunpack.c.l.b16 %v289
  %v945 = vunpack.c.l.b16 %v290
  %v946 = vunpack.c.l.b16 %v291
  %v947 = vunpack.c.l.b16 %v292
  %v948 = vunpack.c.l.b16 %v293
  %v949 = vunpack.c.l.b16 %v294
  %v950 = vpack.c.b16 %v695, %v694
  %v951 = vpack.c.b16 %v697, %v696
  %v952 = vpack.c.b16 %v699, %v698
  %v953 = vpack.c.b16 %v701, %v700
  %v954 = vpack.c.b16 %v703, %v702
  %v955 = vpack.c.b16 %v705, %v704
  %v956 = vpack.c.b16 %v707, %v706
  %v957 = vpack.c.b16 %v709, %v708
  %v958 = vpack.c.b16 %v711, %v710
  %v959 = vpack.c.b16 %v713, %v712
  %v960 = vpack.c.b16 %v715, %v714
  %v961 = vpack.c.b16 %v717, %v716
  %v962 = vpack.c.b16 %v719, %v718
  %v963 = vpack.c.b16 %v721, %v720
  %v964 = vpack.c.b16 %v723, %v722
  %v965 = vpack.c.b16 %v725, %v724
  %v966 = vpack.c.b16 %v727, %v726
  %v967 = vpack.c.b16 %v729, %v728
  %v968 = vpack.c.b16 %v731, %v730
  %v969 = vpack.c.b16 %v733, %v732
  %v970 = vpack.c.b16 %v735, %v734
  %v971 = vpack.c.b16 %v737, %v736
  %v972 = vpack.c.b16 %v739, %v738
  %v973 = vpack.c.b16 %v741, %v740
  %v974 = vpack.c.b16 %v743, %v742
  %v975 = vpack.c.b16 %v745, %v744
  %v976 = vpack.c.b16 %v747, %v746
  %v977 = vpack.c.b16 %v749, %v748
  %v978 = vpack.c.b16 %v751, %v750
  %v979 = vpack.c.b16 %v753, %v752
  %v980 = vpack.c.b16 %v755, %v754
  %v981 = vpack.c.b16 %v757, %v756
  %v982 = vpack.c.b16 %v759, %v758
  %v983 = vpack.c.b16 %v761, %v760
  %v984 = vpack.c.b16 %v763, %v762
  %v985 = vpack.c.b16 %v765, %v764
  %v986 = vpack.c.b16 %v767, %v766
  %v987 = vpack.c.b16 %v769, %v768
  %v988 = vpack.c.b16 %v771, %v770
  %v989 = vpack.c.b16 %v773, %v772
  %v990 = vpack.c.b16 %v775, %v774
  %v991 = vpack.c.b16 %v777, %v776
  %v992 = vpack.c.b16 %v779, %v778
  %v993 = vpack.c.b16 %v781, %v780
  %v994 = vpack.c.b16 %v783, %v782
  %v995 = vpack.c.b16 %v785, %v784
  %v996 = vpack.c.b16 %v787, %v786
  %v997 = vpack.c.b16 %v789, %v788
  %v998 = vpack.c.b16 %v791, %v790
  %v999 = vpack.c.b16 %v793, %v792
  %v1000 = vpack.c.b16 %v795, %v794
  %v1001 = vpack.c.b16 %v797, %v796
  %v1002 = vpack.c.b16 %v799, %v798
  %v1003 = vpack.c.b16 %v801, %v800
  %v1004 = vpack.c.b16 %v803, %v802
  %v1005 = vpack.c.b16 %v805, %v804
  %v1006 = vpack.c.b16 %v807, %v806
  %v1007 = vpack.c.b16 %v809, %v808
  %v1008 = vpack.c.b16 %v811, %v810
  %v1009 = vpack.c.b16 %v813, %v812
  %v1010 = vpack.c.b16 %v815, %v814
  %v1011 = vpack.c.b16 %v817, %v816
  %v1012 = vpack.c.b16 %v819, %v818
  %v1013 = vpack.c.b16 %v821, %v820
  %v1014 = vpack.c.b16 %v823, %v822
  %v1015 = vpack.c.b16 %v825, %v824
  %v1016 = vpack.c.b16 %v827, %v826
  %v1017 = vpack.c.b16 %v829, %v828
  %v1018 = vpack.c.b16 %v831, %v830
  %v1019 = vpack.c.b16 %v833, %v832
  %v1020 = vpack.c.b16 %v835, %v834
  %v1021 = vpack.c.b16 %v837, %v836
  %v1022 = vpack.c.b16 %v839, %v838
  %v1023 = vpack.c.b16 %v841, %v840
  %v1024 = vpack.c.b16 %v843, %v842
  %v1025 = vpack.c.b16 %v845, %v844
  %v1026 = vpack.c.b16 %v847, %v846
  %v1027 = vpack.c.b16 %v849, %v848
  %v1028 = vpack.c.b16 %v851, %v850
  %v1029 = vpack.c.b16 %v853, %v852
  %v1030 = vpack.c.b16 %v855, %v854
  %v1031 = vpack.c.b16 %v857, %v856
  %v1032 = vpack.c.b16 %v859, %v858
  %v1033 = vpack.c.b16 %v861, %v860
  %v1034 = vpack.c.b16 %v863, %v862
  %v1035 = vpack.c.b16 %v865, %v864
  %v1036 = vpack.c.b16 %v867, %v866
  %v1037 = vpack.c.b16 %v869, %v868
  %v1038 = vpack.c.b16 %v871, %v870
  %v1039 = vpack.c.b16 %v873, %v872
  %v1040 = vpack.c.b16 %v875, %v874
  %v1041 = vpack.c.b16 %v877, %v876
  %v1042 = vpack.c.b16 %v879, %v878
  %v1043 = vpack.c.b16 %v881, %v880
  %v1044 = vpack.c.b16 %v883, %v882
  %v1045 = vpack.c.b16 %v885, %v884
  %v1046 = vpack.c.b16 %v887, %v886
  %v1047 = vpack.c.b16 %v889, %v888
  %v1048 = vpack.c.b16 %v891, %v890
  %v1049 = vpack.c.b16 %v893, %v892
  %v1050 = vpack.c.b16 %v895, %v894
  %v1051 = vpack.c.b16 %v897, %v896
  %v1052 = vpack.c.b16 %v899, %v898
  %v1053 = vpack.c.b16 %v901, %v900
  %v1054 = vpack.c.b16 %v903, %v902
  %v1055 = vpack.c.b16 %v905, %v904
  %v1056 = vpack.c.b16 %v907, %v906
  %v1057 = vpack.c.b16 %v909, %v908
  %v1058 = vpack.c.b16 %v911, %v910
  %v1059 = vpack.c.b16 %v913, %v912
  %v1060 = vpack.c.b16 %v915, %v914
  %v1061 = vpack.c.b16 %v917, %v916
  %v1062 = vpack.c.b16 %v919, %v918
  %v1063 = vpack.c.b16 %v921, %v920
  %v1064 = vpack.c.b16 %v923, %v922
  %v1065 = vpack.c.b16 %v925, %v924
  %v1066 = vpack.c.b16 %v927, %v926
  %v1067 = vpack.c.b16 %v929, %v928
  %v1068 = vpack.c.b16 %v931, %v930
  %v1069 = vpack.c.b16 %v933, %v932
  %v1070 = vpack.c.b16 %v935, %v934
  %v1071 = vpack.c.b16 %v937, %v936
  %v1072 = vpack.c.b16 %v939, %v938
  %v1073 = vpack.c.b16 %v941, %v940
  %v1074 = vpack.c.b16 %v943, %v942
  %v1075 = vpack.c.b16 %v945, %v944
  %v1076 = vpack.c.b16 %v947, %v946
  %v1077 = vpack.c.b16 %v949, %v948
  %1206 = vmatprep.subr.bf16.mxu0 0
  %1207 = vmatpush1.bf16.msra.mxu0 %v950
  %1208 = vmatprep.subr.bf16.mxu0 0
  %1209 = vmatpush1.bf16.msra.mxu0 %v951
  %1210 = vmatprep.subr.bf16.mxu0 0
  %1211 = vmatpush1.bf16.msra.mxu0 %v952
  %1212 = vmatprep.subr.bf16.mxu0 0
  %1213 = vmatpush1.bf16.msra.mxu0 %v953
  %1214 = vmatprep.subr.bf16.mxu0 0
  %1215 = vmatpush1.bf16.msra.mxu0 %v954
  %1216 = vmatprep.subr.bf16.mxu0 0
  %1217 = vmatpush1.bf16.msra.mxu0 %v955
  %1218 = vmatprep.subr.bf16.mxu0 0
  %1219 = vmatpush1.bf16.msra.mxu0 %v956
  %1220 = vmatprep.subr.bf16.mxu0 0
  %1221 = vmatpush1.bf16.msra.mxu0 %v957
  %1222 = vmatprep.subr.bf16.mxu0 0
  %1223 = vmatpush1.bf16.msra.mxu0 %v958
  %1224 = vmatprep.subr.bf16.mxu0 0
  %1225 = vmatpush1.bf16.msra.mxu0 %v959
  %1226 = vmatprep.subr.bf16.mxu0 0
  %1227 = vmatpush1.bf16.msra.mxu0 %v960
  %1228 = vmatprep.subr.bf16.mxu0 0
  %1229 = vmatpush1.bf16.msra.mxu0 %v961
  %1230 = vmatprep.subr.bf16.mxu0 0
  %1231 = vmatpush1.bf16.msra.mxu0 %v962
  %1232 = vmatprep.subr.bf16.mxu0 0
  %1233 = vmatpush1.bf16.msra.mxu0 %v963
  %1234 = vmatprep.subr.bf16.mxu0 0
  %1235 = vmatpush1.bf16.msra.mxu0 %v964
  %1236 = vmatprep.subr.bf16.mxu0 0
  %1237 = vmatpush1.bf16.msra.mxu0 %v965
  %1238 = vmatprep.mubr.bf16.mxu0 %v375
  %1239 = vmatmul.mubr.bf16.gmra.mrb[0].mxu0 %v374
  %v1240 = vpop.f32.mrb[0].mxu0
  %v1241 = vadd.f32 %v300, %v1240
  %v1242 = vpop.f32.mrb[0].mxu0
  %v1243 = vpop.f32.mrb[0].mxu0
  %v1244 = vadd.f32 %v300, %v1243
  %v1245 = vpop.f32.mrb[0].mxu0
  %1246 = vmatprep.mubr.bf16.mxu0 %v391
  %1247 = vmatmul.mubr.bf16.gmra.mrb[0].mxu0 %v390
  %v1248 = vpop.f32.mrb[0].mxu0
  %v1249 = vadd.f32 %v300, %v1248
  %v1250 = vpop.f32.mrb[0].mxu0
  %v1251 = vpop.f32.mrb[0].mxu0
  %v1252 = vpop.f32.mrb[0].mxu0
  %1253 = vdwg.mxu0
  %1254 = vmatprep.subr.bf16.mxu0 0
  %1255 = vmatpush1.bf16.msra.mxu0 %v966
  %1256 = vmatprep.subr.bf16.mxu0 0
  %1257 = vmatpush1.bf16.msra.mxu0 %v967
  %1258 = vmatprep.subr.bf16.mxu0 0
  %1259 = vmatpush1.bf16.msra.mxu0 %v968
  %1260 = vmatprep.subr.bf16.mxu0 0
  %1261 = vmatpush1.bf16.msra.mxu0 %v969
  %1262 = vmatprep.subr.bf16.mxu0 0
  %1263 = vmatpush1.bf16.msra.mxu0 %v970
  %1264 = vmatprep.subr.bf16.mxu0 0
  %1265 = vmatpush1.bf16.msra.mxu0 %v971
  %1266 = vmatprep.subr.bf16.mxu0 0
  %1267 = vmatpush1.bf16.msra.mxu0 %v972
  %1268 = vmatprep.subr.bf16.mxu0 0
  %1269 = vmatpush1.bf16.msra.mxu0 %v973
  %1270 = vmatprep.subr.bf16.mxu0 0
  %1271 = vmatpush1.bf16.msra.mxu0 %v974
  %1272 = vmatprep.subr.bf16.mxu0 0
  %1273 = vmatpush1.bf16.msra.mxu0 %v975
  %1274 = vmatprep.subr.bf16.mxu0 0
  %1275 = vmatpush1.bf16.msra.mxu0 %v976
  %1276 = vmatprep.subr.bf16.mxu0 0
  %1277 = vmatpush1.bf16.msra.mxu0 %v977
  %1278 = vmatprep.subr.bf16.mxu0 0
  %1279 = vmatpush1.bf16.msra.mxu0 %v978
  %1280 = vmatprep.subr.bf16.mxu0 0
  %1281 = vmatpush1.bf16.msra.mxu0 %v979
  %1282 = vmatprep.subr.bf16.mxu0 0
  %1283 = vmatpush1.bf16.msra.mxu0 %v980
  %1284 = vmatprep.subr.bf16.mxu0 0
  %1285 = vmatpush1.bf16.msra.mxu0 %v981
  %1286 = vmatprep.mubr.bf16.mxu0 %v377
  %1287 = vmatmul.mubr.bf16.gmra.mrb[0].mxu0 %v376
  %v1288 = vpop.f32.mrb[0].mxu0
  %v1289 = vadd.f32 %v1241, %v1288
  %v1290 = vpop.f32.mrb[0].mxu0
  %v1291 = vpop.f32.mrb[0].mxu0
  %v1292 = vadd.f32 %v1244, %v1291
  %v1293 = vpop.f32.mrb[0].mxu0
  %1294 = vmatprep.mubr.bf16.mxu0 %v393
  %1295 = vmatmul.mubr.bf16.gmra.mrb[0].mxu0 %v392
  %v1296 = vpop.f32.mrb[0].mxu0
  %v1297 = vadd.f32 %v1249, %v1296
  %v1298 = vpop.f32.mrb[0].mxu0
  %v1299 = vpop.f32.mrb[0].mxu0
  %v1300 = vpop.f32.mrb[0].mxu0
  %1301 = vdwg.mxu0
  %1302 = vmatprep.subr.bf16.mxu0 0
  %1303 = vmatpush1.bf16.msra.mxu0 %v982
  %1304 = vmatprep.subr.bf16.mxu0 0
  %1305 = vmatpush1.bf16.msra.mxu0 %v983
  %1306 = vmatprep.subr.bf16.mxu0 0
  %1307 = vmatpush1.bf16.msra.mxu0 %v984
  %1308 = vmatprep.subr.bf16.mxu0 0
  %1309 = vmatpush1.bf16.msra.mxu0 %v985
  %1310 = vmatprep.subr.bf16.mxu0 0
  %1311 = vmatpush1.bf16.msra.mxu0 %v986
  %1312 = vmatprep.subr.bf16.mxu0 0
  %1313 = vmatpush1.bf16.msra.mxu0 %v987
  %1314 = vmatprep.subr.bf16.mxu0 0
  %1315 = vmatpush1.bf16.msra.mxu0 %v988
  %1316 = vmatprep.subr.bf16.mxu0 0
  %1317 = vmatpush1.bf16.msra.mxu0 %v989
  %1318 = vmatprep.subr.bf16.mxu0 0
  %1319 = vmatpush1.bf16.msra.mxu0 %v990
  %1320 = vmatprep.subr.bf16.mxu0 0
  %1321 = vmatpush1.bf16.msra.mxu0 %v991
  %1322 = vmatprep.subr.bf16.mxu0 0
  %1323 = vmatpush1.bf16.msra.mxu0 %v992
  %1324 = vmatprep.subr.bf16.mxu0 0
  %1325 = vmatpush1.bf16.msra.mxu0 %v993
  %1326 = vmatprep.subr.bf16.mxu0 0
  %1327 = vmatpush1.bf16.msra.mxu0 %v994
  %1328 = vmatprep.subr.bf16.mxu0 0
  %1329 = vmatpush1.bf16.msra.mxu0 %v995
  %1330 = vmatprep.subr.bf16.mxu0 0
  %1331 = vmatpush1.bf16.msra.mxu0 %v996
  %1332 = vmatprep.subr.bf16.mxu0 0
  %1333 = vmatpush1.bf16.msra.mxu0 %v997
  %1334 = vmatprep.mubr.bf16.mxu0 %v379
  %1335 = vmatmul.mubr.bf16.gmra.mrb[0].mxu0 %v378
  %v1336 = vpop.f32.mrb[0].mxu0
  %v1337 = vadd.f32 %v1289, %v1336
  %v1338 = vpop.f32.mrb[0].mxu0
  %v1339 = vpop.f32.mrb[0].mxu0
  %v1340 = vadd.f32 %v1292, %v1339
  %v1341 = vpop.f32.mrb[0].mxu0
  %1342 = vmatprep.mubr.bf16.mxu0 %v395
  %1343 = vmatmul.mubr.bf16.gmra.mrb[0].mxu0 %v394
  %v1344 = vpop.f32.mrb[0].mxu0
  %v1345 = vadd.f32 %v1297, %v1344
  %v1346 = vpop.f32.mrb[0].mxu0
  %v1347 = vpop.f32.mrb[0].mxu0
  %v1348 = vpop.f32.mrb[0].mxu0
  %1349 = vdwg.mxu0
  %1350 = vmatprep.subr.bf16.mxu0 0
  %1351 = vmatpush1.bf16.msra.mxu0 %v998
  %1352 = vmatprep.subr.bf16.mxu0 0
  %1353 = vmatpush1.bf16.msra.mxu0 %v999
  %1354 = vmatprep.subr.bf16.mxu0 0
  %1355 = vmatpush1.bf16.msra.mxu0 %v1000
  %1356 = vmatprep.subr.bf16.mxu0 0
  %1357 = vmatpush1.bf16.msra.mxu0 %v1001
  %1358 = vmatprep.subr.bf16.mxu0 0
  %1359 = vmatpush1.bf16.msra.mxu0 %v1002
  %1360 = vmatprep.subr.bf16.mxu0 0
  %1361 = vmatpush1.bf16.msra.mxu0 %v1003
  %1362 = vmatprep.subr.bf16.mxu0 0
  %1363 = vmatpush1.bf16.msra.mxu0 %v1004
  %1364 = vmatprep.subr.bf16.mxu0 0
  %1365 = vmatpush1.bf16.msra.mxu0 %v1005
  %1366 = vmatprep.subr.bf16.mxu0 0
  %1367 = vmatpush1.bf16.msra.mxu0 %v1006
  %1368 = vmatprep.subr.bf16.mxu0 0
  %1369 = vmatpush1.bf16.msra.mxu0 %v1007
  %1370 = vmatprep.subr.bf16.mxu0 0
  %1371 = vmatpush1.bf16.msra.mxu0 %v1008
  %1372 = vmatprep.subr.bf16.mxu0 0
  %1373 = vmatpush1.bf16.msra.mxu0 %v1009
  %1374 = vmatprep.subr.bf16.mxu0 0
  %1375 = vmatpush1.bf16.msra.mxu0 %v1010
  %1376 = vmatprep.subr.bf16.mxu0 0
  %1377 = vmatpush1.bf16.msra.mxu0 %v1011
  %1378 = vmatprep.subr.bf16.mxu0 0
  %1379 = vmatpush1.bf16.msra.mxu0 %v1012
  %1380 = vmatprep.subr.bf16.mxu0 0
  %1381 = vmatpush1.bf16.msra.mxu0 %v1013
  %1382 = vmatprep.mubr.bf16.mxu0 %v381
  %1383 = vmatmul.mubr.bf16.gmra.mrb[0].mxu0 %v380
  %v1384 = vpop.f32.mrb[0].mxu0
  %v1385 = vadd.f32 %v1337, %v1384
  %v1386 = vpop.f32.mrb[0].mxu0
  %v1387 = vpop.f32.mrb[0].mxu0
  %v1388 = vadd.f32 %v1340, %v1387
  %v1389 = vpop.f32.mrb[0].mxu0
  %1390 = vmatprep.mubr.bf16.mxu0 %v397
  %1391 = vmatmul.mubr.bf16.gmra.mrb[0].mxu0 %v396
  %v1392 = vpop.f32.mrb[0].mxu0
  %v1393 = vadd.f32 %v1345, %v1392
  %v1394 = vpop.f32.mrb[0].mxu0
  %v1395 = vpop.f32.mrb[0].mxu0
  %v1396 = vpop.f32.mrb[0].mxu0
  %1397 = vdwg.mxu0
  %1398 = vmatprep.subr.bf16.mxu0 0
  %1399 = vmatpush1.bf16.msra.mxu0 %v1014
  %1400 = vmatprep.subr.bf16.mxu0 0
  %1401 = vmatpush1.bf16.msra.mxu0 %v1015
  %1402 = vmatprep.subr.bf16.mxu0 0
  %1403 = vmatpush1.bf16.msra.mxu0 %v1016
  %1404 = vmatprep.subr.bf16.mxu0 0
  %1405 = vmatpush1.bf16.msra.mxu0 %v1017
  %1406 = vmatprep.subr.bf16.mxu0 0
  %1407 = vmatpush1.bf16.msra.mxu0 %v1018
  %1408 = vmatprep.subr.bf16.mxu0 0
  %1409 = vmatpush1.bf16.msra.mxu0 %v1019
  %1410 = vmatprep.subr.bf16.mxu0 0
  %1411 = vmatpush1.bf16.msra.mxu0 %v1020
  %1412 = vmatprep.subr.bf16.mxu0 0
  %1413 = vmatpush1.bf16.msra.mxu0 %v1021
  %1414 = vmatprep.subr.bf16.mxu0 0
  %1415 = vmatpush1.bf16.msra.mxu0 %v1022
  %1416 = vmatprep.subr.bf16.mxu0 0
  %1417 = vmatpush1.bf16.msra.mxu0 %v1023
  %1418 = vmatprep.subr.bf16.mxu0 0
  %1419 = vmatpush1.bf16.msra.mxu0 %v1024
  %1420 = vmatprep.subr.bf16.mxu0 0
  %1421 = vmatpush1.bf16.msra.mxu0 %v1025
  %1422 = vmatprep.subr.bf16.mxu0 0
  %1423 = vmatpush1.bf16.msra.mxu0 %v1026
  %1424 = vmatprep.subr.bf16.mxu0 0
  %1425 = vmatpush1.bf16.msra.mxu0 %v1027
  %1426 = vmatprep.subr.bf16.mxu0 0
  %1427 = vmatpush1.bf16.msra.mxu0 %v1028
  %1428 = vmatprep.subr.bf16.mxu0 0
  %1429 = vmatpush1.bf16.msra.mxu0 %v1029
  %1430 = vmatprep.mubr.bf16.mxu0 %v383
  %1431 = vmatmul.mubr.bf16.gmra.mrb[0].mxu0 %v382
  %v1432 = vpop.f32.mrb[0].mxu0
  %v1433 = vadd.f32 %v1385, %v1432
  %v1434 = vpop.f32.mrb[0].mxu0
  %v1435 = vpop.f32.mrb[0].mxu0
  %v1436 = vadd.f32 %v1388, %v1435
  %v1437 = vpop.f32.mrb[0].mxu0
  %1438 = vmatprep.mubr.bf16.mxu0 %v399
  %1439 = vmatmul.mubr.bf16.gmra.mrb[0].mxu0 %v398
  %v1440 = vpop.f32.mrb[0].mxu0
  %v1441 = vadd.f32 %v1393, %v1440
  %v1442 = vpop.f32.mrb[0].mxu0
  %v1443 = vpop.f32.mrb[0].mxu0
  %v1444 = vpop.f32.mrb[0].mxu0
  %1445 = vdwg.mxu0
  %1446 = vmatprep.subr.bf16.mxu0 0
  %1447 = vmatpush1.bf16.msra.mxu0 %v1030
  %1448 = vmatprep.subr.bf16.mxu0 0
  %1449 = vmatpush1.bf16.msra.mxu0 %v1031
  %1450 = vmatprep.subr.bf16.mxu0 0
  %1451 = vmatpush1.bf16.msra.mxu0 %v1032
  %1452 = vmatprep.subr.bf16.mxu0 0
  %1453 = vmatpush1.bf16.msra.mxu0 %v1033
  %1454 = vmatprep.subr.bf16.mxu0 0
  %1455 = vmatpush1.bf16.msra.mxu0 %v1034
  %1456 = vmatprep.subr.bf16.mxu0 0
  %1457 = vmatpush1.bf16.msra.mxu0 %v1035
  %1458 = vmatprep.subr.bf16.mxu0 0
  %1459 = vmatpush1.bf16.msra.mxu0 %v1036
  %1460 = vmatprep.subr.bf16.mxu0 0
  %1461 = vmatpush1.bf16.msra.mxu0 %v1037
  %1462 = vmatprep.subr.bf16.mxu0 0
  %1463 = vmatpush1.bf16.msra.mxu0 %v1038
  %1464 = vmatprep.subr.bf16.mxu0 0
  %1465 = vmatpush1.bf16.msra.mxu0 %v1039
  %1466 = vmatprep.subr.bf16.mxu0 0
  %1467 = vmatpush1.bf16.msra.mxu0 %v1040
  %1468 = vmatprep.subr.bf16.mxu0 0
  %1469 = vmatpush1.bf16.msra.mxu0 %v1041
  %1470 = vmatprep.subr.bf16.mxu0 0
  %1471 = vmatpush1.bf16.msra.mxu0 %v1042
  %1472 = vmatprep.subr.bf16.mxu0 0
  %1473 = vmatpush1.bf16.msra.mxu0 %v1043
  %1474 = vmatprep.subr.bf16.mxu0 0
  %1475 = vmatpush1.bf16.msra.mxu0 %v1044
  %1476 = vmatprep.subr.bf16.mxu0 0
  %1477 = vmatpush1.bf16.msra.mxu0 %v1045
  %1478 = vmatprep.mubr.bf16.mxu0 %v385
  %1479 = vmatmul.mubr.bf16.gmra.mrb[0].mxu0 %v384
  %v1480 = vpop.f32.mrb[0].mxu0
  %v1481 = vadd.f32 %v1433, %v1480
  %v1482 = vpop.f32.mrb[0].mxu0
  %v1483 = vpop.f32.mrb[0].mxu0
  %v1484 = vadd.f32 %v1436, %v1483
  %v1485 = vpop.f32.mrb[0].mxu0
  %1486 = vmatprep.mubr.bf16.mxu0 %v401
  %1487 = vmatmul.mubr.bf16.gmra.mrb[0].mxu0 %v400
  %v1488 = vpop.f32.mrb[0].mxu0
  %v1489 = vadd.f32 %v1441, %v1488
  %v1490 = vpop.f32.mrb[0].mxu0
  %v1491 = vpop.f32.mrb[0].mxu0
  %v1492 = vpop.f32.mrb[0].mxu0
  %1493 = vdwg.mxu0
  %1494 = vmatprep.subr.bf16.mxu0 0
  %1495 = vmatpush1.bf16.msra.mxu0 %v1046
  %1496 = vmatprep.subr.bf16.mxu0 0
  %1497 = vmatpush1.bf16.msra.mxu0 %v1047
  %1498 = vmatprep.subr.bf16.mxu0 0
  %1499 = vmatpush1.bf16.msra.mxu0 %v1048
  %1500 = vmatprep.subr.bf16.mxu0 0
  %1501 = vmatpush1.bf16.msra.mxu0 %v1049
  %1502 = vmatprep.subr.bf16.mxu0 0
  %1503 = vmatpush1.bf16.msra.mxu0 %v1050
  %1504 = vmatprep.subr.bf16.mxu0 0
  %1505 = vmatpush1.bf16.msra.mxu0 %v1051
  %1506 = vmatprep.subr.bf16.mxu0 0
  %1507 = vmatpush1.bf16.msra.mxu0 %v1052
  %1508 = vmatprep.subr.bf16.mxu0 0
  %1509 = vmatpush1.bf16.msra.mxu0 %v1053
  %1510 = vmatprep.subr.bf16.mxu0 0
  %1511 = vmatpush1.bf16.msra.mxu0 %v1054
  %1512 = vmatprep.subr.bf16.mxu0 0
  %1513 = vmatpush1.bf16.msra.mxu0 %v1055
  %1514 = vmatprep.subr.bf16.mxu0 0
  %1515 = vmatpush1.bf16.msra.mxu0 %v1056
  %1516 = vmatprep.subr.bf16.mxu0 0
  %1517 = vmatpush1.bf16.msra.mxu0 %v1057
  %1518 = vmatprep.subr.bf16.mxu0 0
  %1519 = vmatpush1.bf16.msra.mxu0 %v1058
  %1520 = vmatprep.subr.bf16.mxu0 0
  %1521 = vmatpush1.bf16.msra.mxu0 %v1059
  %1522 = vmatprep.subr.bf16.mxu0 0
  %1523 = vmatpush1.bf16.msra.mxu0 %v1060
  %1524 = vmatprep.subr.bf16.mxu0 0
  %1525 = vmatpush1.bf16.msra.mxu0 %v1061
  %1526 = vmatprep.mubr.bf16.mxu0 %v387
  %1527 = vmatmul.mubr.bf16.gmra.mrb[0].mxu0 %v386
  %v1528 = vpop.f32.mrb[0].mxu0
  %v1529 = vadd.f32 %v1481, %v1528
  %v1530 = vpop.f32.mrb[0].mxu0
  %v1531 = vpop.f32.mrb[0].mxu0
  %v1532 = vadd.f32 %v1484, %v1531
  %v1533 = vpop.f32.mrb[0].mxu0
  %1534 = vmatprep.mubr.bf16.mxu0 %v403
  %1535 = vmatmul.mubr.bf16.gmra.mrb[0].mxu0 %v402
  %v1536 = vpop.f32.mrb[0].mxu0
  %v1537 = vadd.f32 %v1489, %v1536
  %v1538 = vpop.f32.mrb[0].mxu0
  %v1539 = vpop.f32.mrb[0].mxu0
  %v1540 = vpop.f32.mrb[0].mxu0
  %1541 = vdwg.mxu0
  %1542 = vmatprep.subr.bf16.mxu0 0
  %1543 = vmatpush1.bf16.msra.mxu0 %v1062
  %1544 = vmatprep.subr.bf16.mxu0 0
  %1545 = vmatpush1.bf16.msra.mxu0 %v1063
  %1546 = vmatprep.subr.bf16.mxu0 0
  %1547 = vmatpush1.bf16.msra.mxu0 %v1064
  %1548 = vmatprep.subr.bf16.mxu0 0
  %1549 = vmatpush1.bf16.msra.mxu0 %v1065
  %1550 = vmatprep.subr.bf16.mxu0 0
  %1551 = vmatpush1.bf16.msra.mxu0 %v1066
  %1552 = vmatprep.subr.bf16.mxu0 0
  %1553 = vmatpush1.bf16.msra.mxu0 %v1067
  %1554 = vmatprep.subr.bf16.mxu0 0
  %1555 = vmatpush1.bf16.msra.mxu0 %v1068
  %1556 = vmatprep.subr.bf16.mxu0 0
  %1557 = vmatpush1.bf16.msra.mxu0 %v1069
  %1558 = vmatprep.subr.bf16.mxu0 0
  %1559 = vmatpush1.bf16.msra.mxu0 %v1070
  %1560 = vmatprep.subr.bf16.mxu0 0
  %1561 = vmatpush1.bf16.msra.mxu0 %v1071
  %1562 = vmatprep.subr.bf16.mxu0 0
  %1563 = vmatpush1.bf16.msra.mxu0 %v1072
  %1564 = vmatprep.subr.bf16.mxu0 0
  %1565 = vmatpush1.bf16.msra.mxu0 %v1073
  %1566 = vmatprep.subr.bf16.mxu0 0
  %1567 = vmatpush1.bf16.msra.mxu0 %v1074
  %1568 = vmatprep.subr.bf16.mxu0 0
  %1569 = vmatpush1.bf16.msra.mxu0 %v1075
  %1570 = vmatprep.subr.bf16.mxu0 0
  %1571 = vmatpush1.bf16.msra.mxu0 %v1076
  %1572 = vmatprep.subr.bf16.mxu0 0
  %1573 = vmatpush1.bf16.msra.mxu0 %v1077
  %1574 = vmatprep.mubr.bf16.mxu0 %v389
  %1575 = vmatmul.mubr.bf16.gmra.mrb[0].mxu0 %v388
  %v1576 = vpop.f32.mrb[0].mxu0
  %v1577 = vadd.f32 %v1529, %v1576
  %v1578 = vpop.f32.mrb[0].mxu0
  %v1579 = vpop.f32.mrb[0].mxu0
  %v1580 = vadd.f32 %v1532, %v1579
  %v1581 = vpop.f32.mrb[0].mxu0
  %1582 = vmatprep.mubr.bf16.mxu0 %v405
  %1583 = vmatmul.mubr.bf16.gmra.mrb[0].mxu0 %v404
  %v1584 = vpop.f32.mrb[0].mxu0
  %v1585 = vadd.f32 %v1537, %v1584
  %v1586 = vpop.f32.mrb[0].mxu0
  %v1587 = vpop.f32.mrb[0].mxu0
  %v1588 = vpop.f32.mrb[0].mxu0
  %1589 = vdwg.mxu0
  %v1590 = vmax.f32 %v1577, 0.0
  %v1591 = vmax.f32 %v1580, 0.0
  %v1592 = vmax.f32 %v1585, 0.0
  %v1593 = vpack.c.bf16 %v1591, %v1590
  %v1594 = vpack.c.bf16 %v1592, %v1592
  %v1597 = vunpack.c.l.b16 %v1593
  %v1598 = vunpack.c.h.b16 %v1593
  %v1599 = vunpack.c.l.b16 %v1594
  %v1600 = vpack.c.b16 %v1597, %v1597
  %v1601 = vpack.c.b16 %v1598, %v1598
  %v1602 = vpack.c.b16 %v1599, %v1599
  %1606 = vst [vmem:[%s3] sm:$0xf] %v1600
  %1607 = vst [vmem:[%s3 + $0x4] sm:$0xf] %v1601
  %1608 = vst [vmem:[%s3 + $0x8] sm:$0xf] %v1602
  // Predicated region
  $region14: #{critic_forward.4} parent=0 // pred_check
    _
  $region15: #{critic_forward.4} parent=0 // pred_check_branch
    %1610 = sbr.rel (0) target = $region17
  $region16: #{critic_forward.4} parent=0 // pred_region
    _
  $region17: #{critic_forward.4} parent=0 // pred_fallthru
    _
  // Predicated region
  $region18: #{critic_forward.4} parent=0 // pred_check
    _
  $region19: #{critic_forward.4} parent=0 // pred_check_branch
    %1612 = sbr.rel (0) target = $region21
  $region20: #{critic_forward.4} parent=0 // pred_region
    _
  $region21: #{critic_forward.4} parent=0 // pred_fallthru
    _

// kernel: critic_forward.5
$region0: #{critic_forward.5}
  #allocation0 [shape = 'u32[]', space=smem, size = 0x4, offset = 0x4, fixed_abs, tag = 'smem constant byte address 0x4 - core index']
  #allocation1 [shape = 'u32[144,128]{1,0:T(1,128)}', space=vmem, size = 0x12000, scoped, tag = 'internal scratch']
  %s0 = inlined_call_operand.vmem [shape: bf16[8,1152], index: 0, kind: input, shape index: {}]
  %s1 = inlined_call_operand.vmem [shape: bf16[8,128], index: 1, kind: input, shape index: {}]
  %s2 = inlined_call_operand.vmem [shape: bf16[1152,256], index: 2, kind: input, shape index: {}]
  %s3 = inlined_call_operand.vmem [shape: f32[1,256], index: 3, kind: input, shape index: {}]
  %s4 = inlined_call_operand.vmem [shape: bf16[256,1024], index: 4, kind: input, shape index: {}]
  %s5 = inlined_call_operand.vmem [shape: bf16[128,1024], index: 5, kind: input, shape index: {}]
  %s6 = inlined_call_operand.vmem [shape: f32[1,1024], index: 6, kind: input, shape index: {}]
  %s7 = inlined_call_operand.vmem [shape: bf16[1024,512], index: 7, kind: input, shape index: {}]
  %s8 = inlined_call_operand.vmem [shape: f32[1,512], index: 8, kind: input, shape index: {}]
  %s9 = inlined_call_operand.vmem [shape: bf16[512,128], index: 9, kind: input, shape index: {}]
  %s10 = inlined_call_operand.vmem [shape: f32[1,128], index: 10, kind: input, shape index: {}]
  %s11 = inlined_call_operand.vmem [shape: f32[8,128], index: 11, kind: output, shape index: {}]
  %s12 = sld [smem:[#allocation0]]
  $region54: #{critic_forward.5} parent=0
    _
  %s14 = ssub.s32 1, %s12
  %s15 = scalar_select 0, %s14, %s12
  // Predicated region
  $region2: #{critic_forward.5} parent=0 // pred_check
    _
  $region3: #{critic_forward.5} parent=0 // pred_check_branch
    %17 = sbr.rel (0) target = $region5
  $region4: #{critic_forward.5} parent=0 // pred_region
    _
  $region5: #{critic_forward.5} parent=0 // pred_fallthru
    _
  // Predicated region
  $region6: #{critic_forward.5} parent=0 // pred_check
    _
  $region7: #{critic_forward.5} parent=0 // pred_check_branch
    %19 = sbr.rel (0) target = $region9
  $region8: #{critic_forward.5} parent=0 // pred_region
    _
  $region9: #{critic_forward.5} parent=0 // pred_fallthru
    _
  // Predicated region
  $region10: #{critic_forward.5} parent=0 // pred_check
    _
  $region11: #{critic_forward.5} parent=0 // pred_check_branch
    %21 = sbr.rel (0) target = $region13
  $region12: #{critic_forward.5} parent=0 // pred_region
    _
  $region13: #{critic_forward.5} parent=0 // pred_fallthru
    _
  // Predicated region
  $region14: #{critic_forward.5} parent=0 // pred_check
    _
  $region15: #{critic_forward.5} parent=0 // pred_check_branch
    %23 = sbr.rel (0) target = $region17
  $region16: #{critic_forward.5} parent=0 // pred_region
    _
  $region17: #{critic_forward.5} parent=0 // pred_fallthru
    _
  // Predicated region
  $region18: #{critic_forward.5} parent=0 // pred_check
    _
  $region19: #{critic_forward.5} parent=0 // pred_check_branch
    %25 = sbr.rel (0) target = $region21
  $region20: #{critic_forward.5} parent=0 // pred_region
    _
  $region21: #{critic_forward.5} parent=0 // pred_fallthru
    _
  // Predicated region
  $region22: #{critic_forward.5} parent=0 // pred_check
    _
  $region23: #{critic_forward.5} parent=0 // pred_check_branch
    %27 = sbr.rel (0) target = $region25
  $region24: #{critic_forward.5} parent=0 // pred_region
    _
  $region25: #{critic_forward.5} parent=0 // pred_fallthru
    _
  // Predicated region
  $region26: #{critic_forward.5} parent=0 // pred_check
    _
  $region27: #{critic_forward.5} parent=0 // pred_check_branch
    %29 = sbr.rel (0) target = $region29
  $region28: #{critic_forward.5} parent=0 // pred_region
    _
  $region29: #{critic_forward.5} parent=0 // pred_fallthru
    _
  // Predicated region
  $region30: #{critic_forward.5} parent=0 // pred_check
    _
  $region31: #{critic_forward.5} parent=0 // pred_check_branch
    %31 = sbr.rel (0) target = $region33
  $region32: #{critic_forward.5} parent=0 // pred_region
    _
  $region33: #{critic_forward.5} parent=0 // pred_fallthru
    _
  // Predicated region
  $region34: #{critic_forward.5} parent=0 // pred_check
    _
  $region35: #{critic_forward.5} parent=0 // pred_check_branch
    %33 = sbr.rel (0) target = $region37
  $region36: #{critic_forward.5} parent=0 // pred_region
    _
  $region37: #{critic_forward.5} parent=0 // pred_fallthru
    _
  // Predicated region
  $region38: #{critic_forward.5} parent=0 // pred_check
    _
  $region39: #{critic_forward.5} parent=0 // pred_check_branch
    %35 = sbr.rel (0) target = $region41
  $region40: #{critic_forward.5} parent=0 // pred_region
    _
  $region41: #{critic_forward.5} parent=0 // pred_fallthru
    _
  // Predicated region
  $region42: #{critic_forward.5} parent=0 // pred_check
    _
  $region43: #{critic_forward.5} parent=0 // pred_check_branch
    %37 = sbr.rel (0) target = $region45
  $region44: #{critic_forward.5} parent=0 // pred_region
    _
  $region45: #{critic_forward.5} parent=0 // pred_fallthru
    _
  %v39 = vld [vmem:[%s0] sm:$0xff]
  %v40 = vld [vmem:[%s0 + $0x8] sm:$0xff]
  %v41 = vld [vmem:[%s0 + $0x10] sm:$0xff]
  %v42 = vld [vmem:[%s0 + $0x18] sm:$0xff]
  %v43 = vld [vmem:[%s0 + $0x20] sm:$0xf]
  %v44 = vld [vmem:[%s2] sm:$0xff]
  %v45 = vld [vmem:[%s2 + $0x8] sm:$0xff]
  %v46 = vld [vmem:[%s2 + $0x10] sm:$0xff]
  %v47 = vld [vmem:[%s2 + $0x18] sm:$0xff]
  %v48 = vld [vmem:[%s2 + $0x20] sm:$0xff]
  %v49 = vld [vmem:[%s2 + $0x28] sm:$0xff]
  %v50 = vld [vmem:[%s2 + $0x30] sm:$0xff]
  %v51 = vld [vmem:[%s2 + $0x38] sm:$0xff]
  %v52 = vld [vmem:[%s2 + $0x40] sm:$0xff]
  %v53 = vld [vmem:[%s2 + $0x48] sm:$0xff]
  %v54 = vld [vmem:[%s2 + $0x50] sm:$0xff]
  %v55 = vld [vmem:[%s2 + $0x58] sm:$0xff]
  %v56 = vld [vmem:[%s2 + $0x60] sm:$0xff]
  %v57 = vld [vmem:[%s2 + $0x68] sm:$0xff]
  %v58 = vld [vmem:[%s2 + $0x70] sm:$0xff]
  %v59 = vld [vmem:[%s2 + $0x78] sm:$0xff]
  %v60 = vld [vmem:[%s2 + $0x80] sm:$0xff]
  %v61 = vld [vmem:[%s2 + $0x88] sm:$0xff]
  %v62 = vld [vmem:[%s2 + $0x90] sm:$0xff]
  %v63 = vld [vmem:[%s2 + $0x98] sm:$0xff]
  %v64 = vld [vmem:[%s2 + $0xa0] sm:$0xff]
  %v65 = vld [vmem:[%s2 + $0xa8] sm:$0xff]
  %v66 = vld [vmem:[%s2 + $0xb0] sm:$0xff]
  %v67 = vld [vmem:[%s2 + $0xb8] sm:$0xff]
  %v68 = vld [vmem:[%s2 + $0xc0] sm:$0xff]
  %v69 = vld [vmem:[%s2 + $0xc8] sm:$0xff]
  %v70 = vld [vmem:[%s2 + $0xd0] sm:$0xff]
  %v71 = vld [vmem:[%s2 + $0xd8] sm:$0xff]
  %v72 = vld [vmem:[%s2 + $0xe0] sm:$0xff]
  %v73 = vld [vmem:[%s2 + $0xe8] sm:$0xff]
  %v74 = vld [vmem:[%s2 + $0xf0] sm:$0xff]
  %v75 = vld [vmem:[%s2 + $0xf8] sm:$0xff]
  %v76 = vld [vmem:[%s2 + $0x100] sm:$0xff]
  %v77 = vld [vmem:[%s2 + $0x108] sm:$0xff]
  %v78 = vld [vmem:[%s2 + $0x110] sm:$0xff]
  %v79 = vld [vmem:[%s2 + $0x118] sm:$0xff]
  %v80 = vld [vmem:[%s2 + $0x120] sm:$0xff]
  %v81 = vld [vmem:[%s2 + $0x128] sm:$0xff]
  %v82 = vld [vmem:[%s2 + $0x130] sm:$0xff]
  %v83 = vld [vmem:[%s2 + $0x138] sm:$0xff]
  %v84 = vld [vmem:[%s2 + $0x140] sm:$0xff]
  %v85 = vld [vmem:[%s2 + $0x148] sm:$0xff]
  %v86 = vld [vmem:[%s2 + $0x150] sm:$0xff]
  %v87 = vld [vmem:[%s2 + $0x158] sm:$0xff]
  %v88 = vld [vmem:[%s2 + $0x160] sm:$0xff]
  %v89 = vld [vmem:[%s2 + $0x168] sm:$0xff]
  %v90 = vld [vmem:[%s2 + $0x170] sm:$0xff]
  %v91 = vld [vmem:[%s2 + $0x178] sm:$0xff]
  %v92 = vld [vmem:[%s2 + $0x180] sm:$0xff]
  %v93 = vld [vmem:[%s2 + $0x188] sm:$0xff]
  %v94 = vld [vmem:[%s2 + $0x190] sm:$0xff]
  %v95 = vld [vmem:[%s2 + $0x198] sm:$0xff]
  %v96 = vld [vmem:[%s2 + $0x1a0] sm:$0xff]
  %v97 = vld [vmem:[%s2 + $0x1a8] sm:$0xff]
  %v98 = vld [vmem:[%s2 + $0x1b0] sm:$0xff]
  %v99 = vld [vmem:[%s2 + $0x1b8] sm:$0xff]
  %v100 = vld [vmem:[%s2 + $0x1c0] sm:$0xff]
  %v101 = vld [vmem:[%s2 + $0x1c8] sm:$0xff]
  %v102 = vld [vmem:[%s2 + $0x1d0] sm:$0xff]
  %v103 = vld [vmem:[%s2 + $0x1d8] sm:$0xff]
  %v104 = vld [vmem:[%s2 + $0x1e0] sm:$0xff]
  %v105 = vld [vmem:[%s2 + $0x1e8] sm:$0xff]
  %v106 = vld [vmem:[%s2 + $0x1f0] sm:$0xff]
  %v107 = vld [vmem:[%s2 + $0x1f8] sm:$0xff]
  %v108 = vld [vmem:[%s2 + $0x200] sm:$0xff]
  %v109 = vld [vmem:[%s2 + $0x208] sm:$0xff]
  %v110 = vld [vmem:[%s2 + $0x210] sm:$0xff]
  %v111 = vld [vmem:[%s2 + $0x218] sm:$0xff]
  %v112 = vld [vmem:[%s2 + $0x220] sm:$0xff]
  %v113 = vld [vmem:[%s2 + $0x228] sm:$0xff]
  %v114 = vld [vmem:[%s2 + $0x230] sm:$0xff]
  %v115 = vld [vmem:[%s2 + $0x238] sm:$0xff]
  %v116 = vld [vmem:[%s2 + $0x240] sm:$0xff]
  %v117 = vld [vmem:[%s2 + $0x248] sm:$0xff]
  %v118 = vld [vmem:[%s2 + $0x250] sm:$0xff]
  %v119 = vld [vmem:[%s2 + $0x258] sm:$0xff]
  %v120 = vld [vmem:[%s2 + $0x260] sm:$0xff]
  %v121 = vld [vmem:[%s2 + $0x268] sm:$0xff]
  %v122 = vld [vmem:[%s2 + $0x270] sm:$0xff]
  %v123 = vld [vmem:[%s2 + $0x278] sm:$0xff]
  %v124 = vld [vmem:[%s2 + $0x280] sm:$0xff]
  %v125 = vld [vmem:[%s2 + $0x288] sm:$0xff]
  %v126 = vld [vmem:[%s2 + $0x290] sm:$0xff]
  %v127 = vld [vmem:[%s2 + $0x298] sm:$0xff]
  %v128 = vld [vmem:[%s2 + $0x2a0] sm:$0xff]
  %v129 = vld [vmem:[%s2 + $0x2a8] sm:$0xff]
  %v130 = vld [vmem:[%s2 + $0x2b0] sm:$0xff]
  %v131 = vld [vmem:[%s2 + $0x2b8] sm:$0xff]
  %v132 = vld [vmem:[%s2 + $0x2c0] sm:$0xff]
  %v133 = vld [vmem:[%s2 + $0x2c8] sm:$0xff]
  %v134 = vld [vmem:[%s2 + $0x2d0] sm:$0xff]
  %v135 = vld [vmem:[%s2 + $0x2d8] sm:$0xff]
  %v136 = vld [vmem:[%s2 + $0x2e0] sm:$0xff]
  %v137 = vld [vmem:[%s2 + $0x2e8] sm:$0xff]
  %v138 = vld [vmem:[%s2 + $0x2f0] sm:$0xff]
  %v139 = vld [vmem:[%s2 + $0x2f8] sm:$0xff]
  %v140 = vld [vmem:[%s2 + $0x300] sm:$0xff]
  %v141 = vld [vmem:[%s2 + $0x308] sm:$0xff]
  %v142 = vld [vmem:[%s2 + $0x310] sm:$0xff]
  %v143 = vld [vmem:[%s2 + $0x318] sm:$0xff]
  %v144 = vld [vmem:[%s2 + $0x320] sm:$0xff]
  %v145 = vld [vmem:[%s2 + $0x328] sm:$0xff]
  %v146 = vld [vmem:[%s2 + $0x330] sm:$0xff]
  %v147 = vld [vmem:[%s2 + $0x338] sm:$0xff]
  %v148 = vld [vmem:[%s2 + $0x340] sm:$0xff]
  %v149 = vld [vmem:[%s2 + $0x348] sm:$0xff]
  %v150 = vld [vmem:[%s2 + $0x350] sm:$0xff]
  %v151 = vld [vmem:[%s2 + $0x358] sm:$0xff]
  %v152 = vld [vmem:[%s2 + $0x360] sm:$0xff]
  %v153 = vld [vmem:[%s2 + $0x368] sm:$0xff]
  %v154 = vld [vmem:[%s2 + $0x370] sm:$0xff]
  %v155 = vld [vmem:[%s2 + $0x378] sm:$0xff]
  %v156 = vld [vmem:[%s2 + $0x380] sm:$0xff]
  %v157 = vld [vmem:[%s2 + $0x388] sm:$0xff]
  %v158 = vld [vmem:[%s2 + $0x390] sm:$0xff]
  %v159 = vld [vmem:[%s2 + $0x398] sm:$0xff]
  %v160 = vld [vmem:[%s2 + $0x3a0] sm:$0xff]
  %v161 = vld [vmem:[%s2 + $0x3a8] sm:$0xff]
  %v162 = vld [vmem:[%s2 + $0x3b0] sm:$0xff]
  %v163 = vld [vmem:[%s2 + $0x3b8] sm:$0xff]
  %v164 = vld [vmem:[%s2 + $0x3c0] sm:$0xff]
  %v165 = vld [vmem:[%s2 + $0x3c8] sm:$0xff]
  %v166 = vld [vmem:[%s2 + $0x3d0] sm:$0xff]
  %v167 = vld [vmem:[%s2 + $0x3d8] sm:$0xff]
  %v168 = vld [vmem:[%s2 + $0x3e0] sm:$0xff]
  %v169 = vld [vmem:[%s2 + $0x3e8] sm:$0xff]
  %v170 = vld [vmem:[%s2 + $0x3f0] sm:$0xff]
  %v171 = vld [vmem:[%s2 + $0x3f8] sm:$0xff]
  %v172 = vld [vmem:[%s2 + $0x400] sm:$0xff]
  %v173 = vld [vmem:[%s2 + $0x408] sm:$0xff]
  %v174 = vld [vmem:[%s2 + $0x410] sm:$0xff]
  %v175 = vld [vmem:[%s2 + $0x418] sm:$0xff]
  %v176 = vld [vmem:[%s2 + $0x420] sm:$0xff]
  %v177 = vld [vmem:[%s2 + $0x428] sm:$0xff]
  %v178 = vld [vmem:[%s2 + $0x430] sm:$0xff]
  %v179 = vld [vmem:[%s2 + $0x438] sm:$0xff]
  %v180 = vld [vmem:[%s2 + $0x440] sm:$0xff]
  %v181 = vld [vmem:[%s2 + $0x448] sm:$0xff]
  %v182 = vld [vmem:[%s2 + $0x450] sm:$0xff]
  %v183 = vld [vmem:[%s2 + $0x458] sm:$0xff]
  %v184 = vld [vmem:[%s2 + $0x460] sm:$0xff]
  %v185 = vld [vmem:[%s2 + $0x468] sm:$0xff]
  %v186 = vld [vmem:[%s2 + $0x470] sm:$0xff]
  %v187 = vld [vmem:[%s2 + $0x478] sm:$0xff]
  %v188 = vld [vmem:[%s3] sm:$0x3]
  %v190 = vlaneseq
  %v191 = vshrl.u32 %v190, 7
  %v192 = vsub.s32 0, %v191
  %v193 = vrot.slane %v188, %v192
  %v194 = vlaneseq
  %v195 = vshrl.u32 %v194, 7
  %v196 = vsub.s32 1, %v195
  %v197 = vrot.slane %v188, %v196
  %v205 = vunpack.c.l.b16 %v39
  %v206 = vunpack.c.h.b16 %v39
  %v207 = vunpack.c.l.b16 %v40
  %v208 = vunpack.c.h.b16 %v40
  %v209 = vunpack.c.l.b16 %v41
  %v210 = vunpack.c.h.b16 %v41
  %v211 = vunpack.c.l.b16 %v42
  %v212 = vunpack.c.h.b16 %v42
  %v213 = vunpack.c.l.b16 %v43
  %v214 = vpack.c.b16 %v205, %v205
  %v215 = vpack.c.b16 %v206, %v206
  %v216 = vpack.c.b16 %v207, %v207
  %v217 = vpack.c.b16 %v208, %v208
  %v218 = vpack.c.b16 %v209, %v209
  %v219 = vpack.c.b16 %v210, %v210
  %v220 = vpack.c.b16 %v211, %v211
  %v221 = vpack.c.b16 %v212, %v212
  %v222 = vpack.c.b16 %v213, %v213
  %v376 = vunpack.c.l.b16 %v44
  %v377 = vunpack.c.h.b16 %v44
  %v378 = vunpack.c.l.b16 %v45
  %v379 = vunpack.c.h.b16 %v45
  %v380 = vunpack.c.l.b16 %v46
  %v381 = vunpack.c.h.b16 %v46
  %v382 = vunpack.c.l.b16 %v47
  %v383 = vunpack.c.h.b16 %v47
  %v384 = vunpack.c.l.b16 %v48
  %v385 = vunpack.c.h.b16 %v48
  %v386 = vunpack.c.l.b16 %v49
  %v387 = vunpack.c.h.b16 %v49
  %v388 = vunpack.c.l.b16 %v50
  %v389 = vunpack.c.h.b16 %v50
  %v390 = vunpack.c.l.b16 %v51
  %v391 = vunpack.c.h.b16 %v51
  %v392 = vunpack.c.l.b16 %v52
  %v393 = vunpack.c.h.b16 %v52
  %v394 = vunpack.c.l.b16 %v53
  %v395 = vunpack.c.h.b16 %v53
  %v396 = vunpack.c.l.b16 %v54
  %v397 = vunpack.c.h.b16 %v54
  %v398 = vunpack.c.l.b16 %v55
  %v399 = vunpack.c.h.b16 %v55
  %v400 = vunpack.c.l.b16 %v56
  %v401 = vunpack.c.h.b16 %v56
  %v402 = vunpack.c.l.b16 %v57
  %v403 = vunpack.c.h.b16 %v57
  %v404 = vunpack.c.l.b16 %v58
  %v405 = vunpack.c.h.b16 %v58
  %v406 = vunpack.c.l.b16 %v59
  %v407 = vunpack.c.h.b16 %v59
  %v408 = vunpack.c.l.b16 %v60
  %v409 = vunpack.c.h.b16 %v60
  %v410 = vunpack.c.l.b16 %v61
  %v411 = vunpack.c.h.b16 %v61
  %v412 = vunpack.c.l.b16 %v62
  %v413 = vunpack.c.h.b16 %v62
  %v414 = vunpack.c.l.b16 %v63
  %v415 = vunpack.c.h.b16 %v63
  %v416 = vunpack.c.l.b16 %v64
  %v417 = vunpack.c.h.b16 %v64
  %v418 = vunpack.c.l.b16 %v65
  %v419 = vunpack.c.h.b16 %v65
  %v420 = vunpack.c.l.b16 %v66
  %v421 = vunpack.c.h.b16 %v66
  %v422 = vunpack.c.l.b16 %v67
  %v423 = vunpack.c.h.b16 %v67
  %v424 = vunpack.c.l.b16 %v68
  %v425 = vunpack.c.h.b16 %v68
  %v426 = vunpack.c.l.b16 %v69
  %v427 = vunpack.c.h.b16 %v69
  %v428 = vunpack.c.l.b16 %v70
  %v429 = vunpack.c.h.b16 %v70
  %v430 = vunpack.c.l.b16 %v71
  %v431 = vunpack.c.h.b16 %v71
  %v432 = vunpack.c.l.b16 %v72
  %v433 = vunpack.c.h.b16 %v72
  %v434 = vunpack.c.l.b16 %v73
  %v435 = vunpack.c.h.b16 %v73
  %v436 = vunpack.c.l.b16 %v74
  %v437 = vunpack.c.h.b16 %v74
  %v438 = vunpack.c.l.b16 %v75
  %v439 = vunpack.c.h.b16 %v75
  %v440 = vunpack.c.l.b16 %v76
  %v441 = vunpack.c.h.b16 %v76
  %v442 = vunpack.c.l.b16 %v77
  %v443 = vunpack.c.h.b16 %v77
  %v444 = vunpack.c.l.b16 %v78
  %v445 = vunpack.c.h.b16 %v78
  %v446 = vunpack.c.l.b16 %v79
  %v447 = vunpack.c.h.b16 %v79
  %v448 = vunpack.c.l.b16 %v80
  %v449 = vunpack.c.h.b16 %v80
  %v450 = vunpack.c.l.b16 %v81
  %v451 = vunpack.c.h.b16 %v81
  %v452 = vunpack.c.l.b16 %v82
  %v453 = vunpack.c.h.b16 %v82
  %v454 = vunpack.c.l.b16 %v83
  %v455 = vunpack.c.h.b16 %v83
  %v456 = vunpack.c.l.b16 %v84
  %v457 = vunpack.c.h.b16 %v84
  %v458 = vunpack.c.l.b16 %v85
  %v459 = vunpack.c.h.b16 %v85
  %v460 = vunpack.c.l.b16 %v86
  %v461 = vunpack.c.h.b16 %v86
  %v462 = vunpack.c.l.b16 %v87
  %v463 = vunpack.c.h.b16 %v87
  %v464 = vunpack.c.l.b16 %v88
  %v465 = vunpack.c.h.b16 %v88
  %v466 = vunpack.c.l.b16 %v89
  %v467 = vunpack.c.h.b16 %v89
  %v468 = vunpack.c.l.b16 %v90
  %v469 = vunpack.c.h.b16 %v90
  %v470 = vunpack.c.l.b16 %v91
  %v471 = vunpack.c.h.b16 %v91
  %v472 = vunpack.c.l.b16 %v92
  %v473 = vunpack.c.h.b16 %v92
  %v474 = vunpack.c.l.b16 %v93
  %v475 = vunpack.c.h.b16 %v93
  %v476 = vunpack.c.l.b16 %v94
  %v477 = vunpack.c.h.b16 %v94
  %v478 = vunpack.c.l.b16 %v95
  %v479 = vunpack.c.h.b16 %v95
  %v480 = vunpack.c.l.b16 %v96
  %v481 = vunpack.c.h.b16 %v96
  %v482 = vunpack.c.l.b16 %v97
  %v483 = vunpack.c.h.b16 %v97
  %v484 = vunpack.c.l.b16 %v98
  %v485 = vunpack.c.h.b16 %v98
  %v486 = vunpack.c.l.b16 %v99
  %v487 = vunpack.c.h.b16 %v99
  %v488 = vunpack.c.l.b16 %v100
  %v489 = vunpack.c.h.b16 %v100
  %v490 = vunpack.c.l.b16 %v101
  %v491 = vunpack.c.h.b16 %v101
  %v492 = vunpack.c.l.b16 %v102
  %v493 = vunpack.c.h.b16 %v102
  %v494 = vunpack.c.l.b16 %v103
  %v495 = vunpack.c.h.b16 %v103
  %v496 = vunpack.c.l.b16 %v104
  %v497 = vunpack.c.h.b16 %v104
  %v498 = vunpack.c.l.b16 %v105
  %v499 = vunpack.c.h.b16 %v105
  %v500 = vunpack.c.l.b16 %v106
  %v501 = vunpack.c.h.b16 %v106
  %v502 = vunpack.c.l.b16 %v107
  %v503 = vunpack.c.h.b16 %v107
  %v504 = vunpack.c.l.b16 %v108
  %v505 = vunpack.c.h.b16 %v108
  %v506 = vunpack.c.l.b16 %v109
  %v507 = vunpack.c.h.b16 %v109
  %v508 = vunpack.c.l.b16 %v110
  %v509 = vunpack.c.h.b16 %v110
  %v510 = vunpack.c.l.b16 %v111
  %v511 = vunpack.c.h.b16 %v111
  %v512 = vunpack.c.l.b16 %v112
  %v513 = vunpack.c.h.b16 %v112
  %v514 = vunpack.c.l.b16 %v113
  %v515 = vunpack.c.h.b16 %v113
  %v516 = vunpack.c.l.b16 %v114
  %v517 = vunpack.c.h.b16 %v114
  %v518 = vunpack.c.l.b16 %v115
  %v519 = vunpack.c.h.b16 %v115
  %v520 = vunpack.c.l.b16 %v116
  %v521 = vunpack.c.h.b16 %v116
  %v522 = vunpack.c.l.b16 %v117
  %v523 = vunpack.c.h.b16 %v117
  %v524 = vunpack.c.l.b16 %v118
  %v525 = vunpack.c.h.b16 %v118
  %v526 = vunpack.c.l.b16 %v119
  %v527 = vunpack.c.h.b16 %v119
  %v528 = vunpack.c.l.b16 %v120
  %v529 = vunpack.c.h.b16 %v120
  %v530 = vunpack.c.l.b16 %v121
  %v531 = vunpack.c.h.b16 %v121
  %v532 = vunpack.c.l.b16 %v122
  %v533 = vunpack.c.h.b16 %v122
  %v534 = vunpack.c.l.b16 %v123
  %v535 = vunpack.c.h.b16 %v123
  %v536 = vunpack.c.l.b16 %v124
  %v537 = vunpack.c.h.b16 %v124
  %v538 = vunpack.c.l.b16 %v125
  %v539 = vunpack.c.h.b16 %v125
  %v540 = vunpack.c.l.b16 %v126
  %v541 = vunpack.c.h.b16 %v126
  %v542 = vunpack.c.l.b16 %v127
  %v543 = vunpack.c.h.b16 %v127
  %v544 = vunpack.c.l.b16 %v128
  %v545 = vunpack.c.h.b16 %v128
  %v546 = vunpack.c.l.b16 %v129
  %v547 = vunpack.c.h.b16 %v129
  %v548 = vunpack.c.l.b16 %v130
  %v549 = vunpack.c.h.b16 %v130
  %v550 = vunpack.c.l.b16 %v131
  %v551 = vunpack.c.h.b16 %v131
  %v552 = vunpack.c.l.b16 %v132
  %v553 = vunpack.c.h.b16 %v132
  %v554 = vunpack.c.l.b16 %v133
  %v555 = vunpack.c.h.b16 %v133
  %v556 = vunpack.c.l.b16 %v134
  %v557 = vunpack.c.h.b16 %v134
  %v558 = vunpack.c.l.b16 %v135
  %v559 = vunpack.c.h.b16 %v135
  %v560 = vunpack.c.l.b16 %v136
  %v561 = vunpack.c.h.b16 %v136
  %v562 = vunpack.c.l.b16 %v137
  %v563 = vunpack.c.h.b16 %v137
  %v564 = vunpack.c.l.b16 %v138
  %v565 = vunpack.c.h.b16 %v138
  %v566 = vunpack.c.l.b16 %v139
  %v567 = vunpack.c.h.b16 %v139
  %v568 = vunpack.c.l.b16 %v140
  %v569 = vunpack.c.h.b16 %v140
  %v570 = vunpack.c.l.b16 %v141
  %v571 = vunpack.c.h.b16 %v141
  %v572 = vunpack.c.l.b16 %v142
  %v573 = vunpack.c.h.b16 %v142
  %v574 = vunpack.c.l.b16 %v143
  %v575 = vunpack.c.h.b16 %v143
  %v576 = vunpack.c.l.b16 %v144
  %v577 = vunpack.c.h.b16 %v144
  %v578 = vunpack.c.l.b16 %v145
  %v579 = vunpack.c.h.b16 %v145
  %v580 = vunpack.c.l.b16 %v146
  %v581 = vunpack.c.h.b16 %v146
  %v582 = vunpack.c.l.b16 %v147
  %v583 = vunpack.c.h.b16 %v147
  %v584 = vunpack.c.l.b16 %v148
  %v585 = vunpack.c.h.b16 %v148
  %v586 = vunpack.c.l.b16 %v149
  %v587 = vunpack.c.h.b16 %v149
  %v588 = vunpack.c.l.b16 %v150
  %v589 = vunpack.c.h.b16 %v150
  %v590 = vunpack.c.l.b16 %v151
  %v591 = vunpack.c.h.b16 %v151
  %v592 = vunpack.c.l.b16 %v152
  %v593 = vunpack.c.h.b16 %v152
  %v594 = vunpack.c.l.b16 %v153
  %v595 = vunpack.c.h.b16 %v153
  %v596 = vunpack.c.l.b16 %v154
  %v597 = vunpack.c.h.b16 %v154
  %v598 = vunpack.c.l.b16 %v155
  %v599 = vunpack.c.h.b16 %v155
  %v600 = vunpack.c.l.b16 %v156
  %v601 = vunpack.c.h.b16 %v156
  %v602 = vunpack.c.l.b16 %v157
  %v603 = vunpack.c.h.b16 %v157
  %v604 = vunpack.c.l.b16 %v158
  %v605 = vunpack.c.h.b16 %v158
  %v606 = vunpack.c.l.b16 %v159
  %v607 = vunpack.c.h.b16 %v159
  %v608 = vunpack.c.l.b16 %v160
  %v609 = vunpack.c.h.b16 %v160
  %v610 = vunpack.c.l.b16 %v161
  %v611 = vunpack.c.h.b16 %v161
  %v612 = vunpack.c.l.b16 %v162
  %v613 = vunpack.c.h.b16 %v162
  %v614 = vunpack.c.l.b16 %v163
  %v615 = vunpack.c.h.b16 %v163
  %v616 = vunpack.c.l.b16 %v164
  %v617 = vunpack.c.h.b16 %v164
  %v618 = vunpack.c.l.b16 %v165
  %v619 = vunpack.c.h.b16 %v165
  %v620 = vunpack.c.l.b16 %v166
  %v621 = vunpack.c.h.b16 %v166
  %v622 = vunpack.c.l.b16 %v167
  %v623 = vunpack.c.h.b16 %v167
  %v624 = vunpack.c.l.b16 %v168
  %v625 = vunpack.c.h.b16 %v168
  %v626 = vunpack.c.l.b16 %v169
  %v627 = vunpack.c.h.b16 %v169
  %v628 = vunpack.c.l.b16 %v170
  %v629 = vunpack.c.h.b16 %v170
  %v630 = vunpack.c.l.b16 %v171
  %v631 = vunpack.c.h.b16 %v171
  %v632 = vunpack.c.l.b16 %v172
  %v633 = vunpack.c.h.b16 %v172
  %v634 = vunpack.c.l.b16 %v173
  %v635 = vunpack.c.h.b16 %v173
  %v636 = vunpack.c.l.b16 %v174
  %v637 = vunpack.c.h.b16 %v174
  %v638 = vunpack.c.l.b16 %v175
  %v639 = vunpack.c.h.b16 %v175
  %v640 = vunpack.c.l.b16 %v176
  %v641 = vunpack.c.h.b16 %v176
  %v642 = vunpack.c.l.b16 %v177
  %v643 = vunpack.c.h.b16 %v177
  %v644 = vunpack.c.l.b16 %v178
  %v645 = vunpack.c.h.b16 %v178
  %v646 = vunpack.c.l.b16 %v179
  %v647 = vunpack.c.h.b16 %v179
  %v648 = vunpack.c.l.b16 %v180
  %v649 = vunpack.c.h.b16 %v180
  %v650 = vunpack.c.l.b16 %v181
  %v651 = vunpack.c.h.b16 %v181
  %v652 = vunpack.c.l.b16 %v182
  %v653 = vunpack.c.h.b16 %v182
  %v654 = vunpack.c.l.b16 %v183
  %v655 = vunpack.c.h.b16 %v183
  %v656 = vunpack.c.l.b16 %v184
  %v657 = vunpack.c.h.b16 %v184
  %v658 = vunpack.c.l.b16 %v185
  %v659 = vunpack.c.h.b16 %v185
  %v660 = vunpack.c.l.b16 %v186
  %v661 = vunpack.c.h.b16 %v186
  %v662 = vunpack.c.l.b16 %v187
  %v663 = vunpack.c.h.b16 %v187
  %v664 = vpack.c.b16 %v378, %v376
  %v665 = vpack.c.b16 %v379, %v377
  %v666 = vpack.c.b16 %v382, %v380
  %v667 = vpack.c.b16 %v383, %v381
  %v668 = vpack.c.b16 %v386, %v384
  %v669 = vpack.c.b16 %v387, %v385
  %v670 = vpack.c.b16 %v390, %v388
  %v671 = vpack.c.b16 %v391, %v389
  %v672 = vpack.c.b16 %v394, %v392
  %v673 = vpack.c.b16 %v395, %v393
  %v674 = vpack.c.b16 %v398, %v396
  %v675 = vpack.c.b16 %v399, %v397
  %v676 = vpack.c.b16 %v402, %v400
  %v677 = vpack.c.b16 %v403, %v401
  %v678 = vpack.c.b16 %v406, %v404
  %v679 = vpack.c.b16 %v407, %v405
  %v680 = vpack.c.b16 %v410, %v408
  %v681 = vpack.c.b16 %v411, %v409
  %v682 = vpack.c.b16 %v414, %v412
  %v683 = vpack.c.b16 %v415, %v413
  %v684 = vpack.c.b16 %v418, %v416
  %v685 = vpack.c.b16 %v419, %v417
  %v686 = vpack.c.b16 %v422, %v420
  %v687 = vpack.c.b16 %v423, %v421
  %v688 = vpack.c.b16 %v426, %v424
  %v689 = vpack.c.b16 %v427, %v425
  %v690 = vpack.c.b16 %v430, %v428
  %v691 = vpack.c.b16 %v431, %v429
  %v692 = vpack.c.b16 %v434, %v432
  %v693 = vpack.c.b16 %v435, %v433
  %v694 = vpack.c.b16 %v438, %v436
  %v695 = vpack.c.b16 %v439, %v437
  %v696 = vpack.c.b16 %v442, %v440
  %v697 = vpack.c.b16 %v443, %v441
  %v698 = vpack.c.b16 %v446, %v444
  %v699 = vpack.c.b16 %v447, %v445
  %v700 = vpack.c.b16 %v450, %v448
  %v701 = vpack.c.b16 %v451, %v449
  %v702 = vpack.c.b16 %v454, %v452
  %v703 = vpack.c.b16 %v455, %v453
  %v704 = vpack.c.b16 %v458, %v456
  %v705 = vpack.c.b16 %v459, %v457
  %v706 = vpack.c.b16 %v462, %v460
  %v707 = vpack.c.b16 %v463, %v461
  %v708 = vpack.c.b16 %v466, %v464
  %v709 = vpack.c.b16 %v467, %v465
  %v710 = vpack.c.b16 %v470, %v468
  %v711 = vpack.c.b16 %v471, %v469
  %v712 = vpack.c.b16 %v474, %v472
  %v713 = vpack.c.b16 %v475, %v473
  %v714 = vpack.c.b16 %v478, %v476
  %v715 = vpack.c.b16 %v479, %v477
  %v716 = vpack.c.b16 %v482, %v480
  %v717 = vpack.c.b16 %v483, %v481
  %v718 = vpack.c.b16 %v486, %v484
  %v719 = vpack.c.b16 %v487, %v485
  %v720 = vpack.c.b16 %v490, %v488
  %v721 = vpack.c.b16 %v491, %v489
  %v722 = vpack.c.b16 %v494, %v492
  %v723 = vpack.c.b16 %v495, %v493
  %v724 = vpack.c.b16 %v498, %v496
  %v725 = vpack.c.b16 %v499, %v497
  %v726 = vpack.c.b16 %v502, %v500
  %v727 = vpack.c.b16 %v503, %v501
  %v728 = vpack.c.b16 %v506, %v504
  %v729 = vpack.c.b16 %v507, %v505
  %v730 = vpack.c.b16 %v510, %v508
  %v731 = vpack.c.b16 %v511, %v509
  %v732 = vpack.c.b16 %v514, %v512
  %v733 = vpack.c.b16 %v515, %v513
  %v734 = vpack.c.b16 %v518, %v516
  %v735 = vpack.c.b16 %v519, %v517
  %v736 = vpack.c.b16 %v522, %v520
  %v737 = vpack.c.b16 %v523, %v521
  %v738 = vpack.c.b16 %v526, %v524
  %v739 = vpack.c.b16 %v527, %v525
  %v740 = vpack.c.b16 %v530, %v528
  %v741 = vpack.c.b16 %v531, %v529
  %v742 = vpack.c.b16 %v534, %v532
  %v743 = vpack.c.b16 %v535, %v533
  %v744 = vpack.c.b16 %v538, %v536
  %v745 = vpack.c.b16 %v539, %v537
  %v746 = vpack.c.b16 %v542, %v540
  %v747 = vpack.c.b16 %v543, %v541
  %v748 = vpack.c.b16 %v546, %v544
  %v749 = vpack.c.b16 %v547, %v545
  %v750 = vpack.c.b16 %v550, %v548
  %v751 = vpack.c.b16 %v551, %v549
  %v752 = vpack.c.b16 %v554, %v552
  %v753 = vpack.c.b16 %v555, %v553
  %v754 = vpack.c.b16 %v558, %v556
  %v755 = vpack.c.b16 %v559, %v557
  %v756 = vpack.c.b16 %v562, %v560
  %v757 = vpack.c.b16 %v563, %v561
  %v758 = vpack.c.b16 %v566, %v564
  %v759 = vpack.c.b16 %v567, %v565
  %v760 = vpack.c.b16 %v570, %v568
  %v761 = vpack.c.b16 %v571, %v569
  %v762 = vpack.c.b16 %v574, %v572
  %v763 = vpack.c.b16 %v575, %v573
  %v764 = vpack.c.b16 %v578, %v576
  %v765 = vpack.c.b16 %v579, %v577
  %v766 = vpack.c.b16 %v582, %v580
  %v767 = vpack.c.b16 %v583, %v581
  %v768 = vpack.c.b16 %v586, %v584
  %v769 = vpack.c.b16 %v587, %v585
  %v770 = vpack.c.b16 %v590, %v588
  %v771 = vpack.c.b16 %v591, %v589
  %v772 = vpack.c.b16 %v594, %v592
  %v773 = vpack.c.b16 %v595, %v593
  %v774 = vpack.c.b16 %v598, %v596
  %v775 = vpack.c.b16 %v599, %v597
  %v776 = vpack.c.b16 %v602, %v600
  %v777 = vpack.c.b16 %v603, %v601
  %v778 = vpack.c.b16 %v606, %v604
  %v779 = vpack.c.b16 %v607, %v605
  %v780 = vpack.c.b16 %v610, %v608
  %v781 = vpack.c.b16 %v611, %v609
  %v782 = vpack.c.b16 %v614, %v612
  %v783 = vpack.c.b16 %v615, %v613
  %v784 = vpack.c.b16 %v618, %v616
  %v785 = vpack.c.b16 %v619, %v617
  %v786 = vpack.c.b16 %v622, %v620
  %v787 = vpack.c.b16 %v623, %v621
  %v788 = vpack.c.b16 %v626, %v624
  %v789 = vpack.c.b16 %v627, %v625
  %v790 = vpack.c.b16 %v630, %v628
  %v791 = vpack.c.b16 %v631, %v629
  %v792 = vpack.c.b16 %v634, %v632
  %v793 = vpack.c.b16 %v635, %v633
  %v794 = vpack.c.b16 %v638, %v636
  %v795 = vpack.c.b16 %v639, %v637
  %v796 = vpack.c.b16 %v642, %v640
  %v797 = vpack.c.b16 %v643, %v641
  %v798 = vpack.c.b16 %v646, %v644
  %v799 = vpack.c.b16 %v647, %v645
  %v800 = vpack.c.b16 %v650, %v648
  %v801 = vpack.c.b16 %v651, %v649
  %v802 = vpack.c.b16 %v654, %v652
  %v803 = vpack.c.b16 %v655, %v653
  %v804 = vpack.c.b16 %v658, %v656
  %v805 = vpack.c.b16 %v659, %v657
  %v806 = vpack.c.b16 %v662, %v660
  %v807 = vpack.c.b16 %v663, %v661
  %952 = vmatprep.subr.bf16.mxu0 %v665
  %953 = vmatpush1.bf16.msra.mxu0 %v664
  %954 = vmatprep.subr.bf16.mxu0 %v667
  %955 = vmatpush1.bf16.msra.mxu0 %v666
  %956 = vmatprep.subr.bf16.mxu0 %v669
  %957 = vmatpush1.bf16.msra.mxu0 %v668
  %958 = vmatprep.subr.bf16.mxu0 %v671
  %959 = vmatpush1.bf16.msra.mxu0 %v670
  %960 = vmatprep.subr.bf16.mxu0 %v673
  %961 = vmatpush1.bf16.msra.mxu0 %v672
  %962 = vmatprep.subr.bf16.mxu0 %v675
  %963 = vmatpush1.bf16.msra.mxu0 %v674
  %964 = vmatprep.subr.bf16.mxu0 %v677
  %965 = vmatpush1.bf16.msra.mxu0 %v676
  %966 = vmatprep.subr.bf16.mxu0 %v679
  %967 = vmatpush1.bf16.msra.mxu0 %v678
  %968 = vmatprep.subr.bf16.mxu0 %v681
  %969 = vmatpush1.bf16.msra.mxu0 %v680
  %970 = vmatprep.subr.bf16.mxu0 %v683
  %971 = vmatpush1.bf16.msra.mxu0 %v682
  %972 = vmatprep.subr.bf16.mxu0 %v685
  %973 = vmatpush1.bf16.msra.mxu0 %v684
  %974 = vmatprep.subr.bf16.mxu0 %v687
  %975 = vmatpush1.bf16.msra.mxu0 %v686
  %976 = vmatprep.subr.bf16.mxu0 %v689
  %977 = vmatpush1.bf16.msra.mxu0 %v688
  %978 = vmatprep.subr.bf16.mxu0 %v691
  %979 = vmatpush1.bf16.msra.mxu0 %v690
  %980 = vmatprep.subr.bf16.mxu0 %v693
  %981 = vmatpush1.bf16.msra.mxu0 %v692
  %982 = vmatprep.subr.bf16.mxu0 %v695
  %983 = vmatpush1.bf16.msra.mxu0 %v694
  %984 = vmatprep.mubr.bf16.mxu0 %v215
  %985 = vmatmul.mubr.bf16.gmra.mrb[0].mxu0 %v214
  %v986 = vpop.f32.mrb[0].mxu0
  %v987 = vadd.f32 %v193, %v986
  %v988 = vpop.f32.mrb[0].mxu0
  %v989 = vadd.f32 %v197, %v988
  %v990 = vpop.f32.mrb[0].mxu0
  %v991 = vpop.f32.mrb[0].mxu0
  %992 = vdwg.mxu0
  %993 = vmatprep.subr.bf16.mxu0 %v697
  %994 = vmatpush1.bf16.msra.mxu0 %v696
  %995 = vmatprep.subr.bf16.mxu0 %v699
  %996 = vmatpush1.bf16.msra.mxu0 %v698
  %997 = vmatprep.subr.bf16.mxu0 %v701
  %998 = vmatpush1.bf16.msra.mxu0 %v700
  %999 = vmatprep.subr.bf16.mxu0 %v703
  %1000 = vmatpush1.bf16.msra.mxu0 %v702
  %1001 = vmatprep.subr.bf16.mxu0 %v705
  %1002 = vmatpush1.bf16.msra.mxu0 %v704
  %1003 = vmatprep.subr.bf16.mxu0 %v707
  %1004 = vmatpush1.bf16.msra.mxu0 %v706
  %1005 = vmatprep.subr.bf16.mxu0 %v709
  %1006 = vmatpush1.bf16.msra.mxu0 %v708
  %1007 = vmatprep.subr.bf16.mxu0 %v711
  %1008 = vmatpush1.bf16.msra.mxu0 %v710
  %1009 = vmatprep.subr.bf16.mxu0 %v713
  %1010 = vmatpush1.bf16.msra.mxu0 %v712
  %1011 = vmatprep.subr.bf16.mxu0 %v715
  %1012 = vmatpush1.bf16.msra.mxu0 %v714
  %1013 = vmatprep.subr.bf16.mxu0 %v717
  %1014 = vmatpush1.bf16.msra.mxu0 %v716
  %1015 = vmatprep.subr.bf16.mxu0 %v719
  %1016 = vmatpush1.bf16.msra.mxu0 %v718
  %1017 = vmatprep.subr.bf16.mxu0 %v721
  %1018 = vmatpush1.bf16.msra.mxu0 %v720
  %1019 = vmatprep.subr.bf16.mxu0 %v723
  %1020 = vmatpush1.bf16.msra.mxu0 %v722
  %1021 = vmatprep.subr.bf16.mxu0 %v725
  %1022 = vmatpush1.bf16.msra.mxu0 %v724
  %1023 = vmatprep.subr.bf16.mxu0 %v727
  %1024 = vmatpush1.bf16.msra.mxu0 %v726
  %1025 = vmatprep.mubr.bf16.mxu0 %v217
  %1026 = vmatmul.mubr.bf16.gmra.mrb[0].mxu0 %v216
  %v1027 = vpop.f32.mrb[0].mxu0
  %v1028 = vadd.f32 %v987, %v1027
  %v1029 = vpop.f32.mrb[0].mxu0
  %v1030 = vadd.f32 %v989, %v1029
  %v1031 = vpop.f32.mrb[0].mxu0
  %v1032 = vpop.f32.mrb[0].mxu0
  %1033 = vdwg.mxu0
  %1034 = vmatprep.subr.bf16.mxu0 %v729
  %1035 = vmatpush1.bf16.msra.mxu0 %v728
  %1036 = vmatprep.subr.bf16.mxu0 %v731
  %1037 = vmatpush1.bf16.msra.mxu0 %v730
  %1038 = vmatprep.subr.bf16.mxu0 %v733
  %1039 = vmatpush1.bf16.msra.mxu0 %v732
  %1040 = vmatprep.subr.bf16.mxu0 %v735
  %1041 = vmatpush1.bf16.msra.mxu0 %v734
  %1042 = vmatprep.subr.bf16.mxu0 %v737
  %1043 = vmatpush1.bf16.msra.mxu0 %v736
  %1044 = vmatprep.subr.bf16.mxu0 %v739
  %1045 = vmatpush1.bf16.msra.mxu0 %v738
  %1046 = vmatprep.subr.bf16.mxu0 %v741
  %1047 = vmatpush1.bf16.msra.mxu0 %v740
  %1048 = vmatprep.subr.bf16.mxu0 %v743
  %1049 = vmatpush1.bf16.msra.mxu0 %v742
  %1050 = vmatprep.subr.bf16.mxu0 %v745
  %1051 = vmatpush1.bf16.msra.mxu0 %v744
  %1052 = vmatprep.subr.bf16.mxu0 %v747
  %1053 = vmatpush1.bf16.msra.mxu0 %v746
  %1054 = vmatprep.subr.bf16.mxu0 %v749
  %1055 = vmatpush1.bf16.msra.mxu0 %v748
  %1056 = vmatprep.subr.bf16.mxu0 %v751
  %1057 = vmatpush1.bf16.msra.mxu0 %v750
  %1058 = vmatprep.subr.bf16.mxu0 %v753
  %1059 = vmatpush1.bf16.msra.mxu0 %v752
  %1060 = vmatprep.subr.bf16.mxu0 %v755
  %1061 = vmatpush1.bf16.msra.mxu0 %v754
  %1062 = vmatprep.subr.bf16.mxu0 %v757
  %1063 = vmatpush1.bf16.msra.mxu0 %v756
  %1064 = vmatprep.subr.bf16.mxu0 %v759
  %1065 = vmatpush1.bf16.msra.mxu0 %v758
  %1066 = vmatprep.mubr.bf16.mxu0 %v219
  %1067 = vmatmul.mubr.bf16.gmra.mrb[0].mxu0 %v218
  %v1068 = vpop.f32.mrb[0].mxu0
  %v1069 = vadd.f32 %v1028, %v1068
  %v1070 = vpop.f32.mrb[0].mxu0
  %v1071 = vadd.f32 %v1030, %v1070
  %v1072 = vpop.f32.mrb[0].mxu0
  %v1073 = vpop.f32.mrb[0].mxu0
  %1074 = vdwg.mxu0
  %1075 = vmatprep.subr.bf16.mxu0 %v761
  %1076 = vmatpush1.bf16.msra.mxu0 %v760
  %1077 = vmatprep.subr.bf16.mxu0 %v763
  %1078 = vmatpush1.bf16.msra.mxu0 %v762
  %1079 = vmatprep.subr.bf16.mxu0 %v765
  %1080 = vmatpush1.bf16.msra.mxu0 %v764
  %1081 = vmatprep.subr.bf16.mxu0 %v767
  %1082 = vmatpush1.bf16.msra.mxu0 %v766
  %1083 = vmatprep.subr.bf16.mxu0 %v769
  %1084 = vmatpush1.bf16.msra.mxu0 %v768
  %1085 = vmatprep.subr.bf16.mxu0 %v771
  %1086 = vmatpush1.bf16.msra.mxu0 %v770
  %1087 = vmatprep.subr.bf16.mxu0 %v773
  %1088 = vmatpush1.bf16.msra.mxu0 %v772
  %1089 = vmatprep.subr.bf16.mxu0 %v775
  %1090 = vmatpush1.bf16.msra.mxu0 %v774
  %1091 = vmatprep.subr.bf16.mxu0 %v777
  %1092 = vmatpush1.bf16.msra.mxu0 %v776
  %1093 = vmatprep.subr.bf16.mxu0 %v779
  %1094 = vmatpush1.bf16.msra.mxu0 %v778
  %1095 = vmatprep.subr.bf16.mxu0 %v781
  %1096 = vmatpush1.bf16.msra.mxu0 %v780
  %1097 = vmatprep.subr.bf16.mxu0 %v783
  %1098 = vmatpush1.bf16.msra.mxu0 %v782
  %1099 = vmatprep.subr.bf16.mxu0 %v785
  %1100 = vmatpush1.bf16.msra.mxu0 %v784
  %1101 = vmatprep.subr.bf16.mxu0 %v787
  %1102 = vmatpush1.bf16.msra.mxu0 %v786
  %1103 = vmatprep.subr.bf16.mxu0 %v789
  %1104 = vmatpush1.bf16.msra.mxu0 %v788
  %1105 = vmatprep.subr.bf16.mxu0 %v791
  %1106 = vmatpush1.bf16.msra.mxu0 %v790
  %1107 = vmatprep.mubr.bf16.mxu0 %v221
  %1108 = vmatmul.mubr.bf16.gmra.mrb[0].mxu0 %v220
  %v1109 = vpop.f32.mrb[0].mxu0
  %v1110 = vadd.f32 %v1069, %v1109
  %v1111 = vpop.f32.mrb[0].mxu0
  %v1112 = vadd.f32 %v1071, %v1111
  %v1113 = vpop.f32.mrb[0].mxu0
  %v1114 = vpop.f32.mrb[0].mxu0
  %1115 = vdwg.mxu0
  %1116 = vmatprep.subr.bf16.mxu0 %v793
  %1117 = vmatpush1.bf16.msra.mxu0 %v792
  %1118 = vmatprep.subr.bf16.mxu0 %v795
  %1119 = vmatpush1.bf16.msra.mxu0 %v794
  %1120 = vmatprep.subr.bf16.mxu0 %v797
  %1121 = vmatpush1.bf16.msra.mxu0 %v796
  %1122 = vmatprep.subr.bf16.mxu0 %v799
  %1123 = vmatpush1.bf16.msra.mxu0 %v798
  %1124 = vmatprep.subr.bf16.mxu0 %v801
  %1125 = vmatpush1.bf16.msra.mxu0 %v800
  %1126 = vmatprep.subr.bf16.mxu0 %v803
  %1127 = vmatpush1.bf16.msra.mxu0 %v802
  %1128 = vmatprep.subr.bf16.mxu0 %v805
  %1129 = vmatpush1.bf16.msra.mxu0 %v804
  %1130 = vmatprep.subr.bf16.mxu0 %v807
  %1131 = vmatpush1.bf16.msra.mxu0 %v806
  %1132 = vmatprep.subr.bf16.mxu0 0
  %1133 = vmatpush1.bf16.msra.mxu0 0
  %1134 = vmatprep.subr.bf16.mxu0 0
  %1135 = vmatpush1.bf16.msra.mxu0 0
  %1136 = vmatprep.subr.bf16.mxu0 0
  %1137 = vmatpush1.bf16.msra.mxu0 0
  %1138 = vmatprep.subr.bf16.mxu0 0
  %1139 = vmatpush1.bf16.msra.mxu0 0
  %1140 = vmatprep.subr.bf16.mxu0 0
  %1141 = vmatpush1.bf16.msra.mxu0 0
  %1142 = vmatprep.subr.bf16.mxu0 0
  %1143 = vmatpush1.bf16.msra.mxu0 0
  %1144 = vmatprep.subr.bf16.mxu0 0
  %1145 = vmatpush1.bf16.msra.mxu0 0
  %1146 = vmatprep.subr.bf16.mxu0 0
  %1147 = vmatpush1.bf16.msra.mxu0 0
  %1148 = vmatprep.mubr.bf16.mxu0 0
  %1149 = vmatmul.mubr.bf16.gmra.mrb[0].mxu0 %v222
  %v1150 = vpop.f32.mrb[0].mxu0
  %v1151 = vadd.f32 %v1110, %v1150
  %v1152 = vpop.f32.mrb[0].mxu0
  %v1153 = vadd.f32 %v1112, %v1152
  %v1154 = vpop.f32.mrb[0].mxu0
  %v1155 = vpop.f32.mrb[0].mxu0
  %1156 = vdwg.mxu0
  %v1157 = vmax.f32 %v1151, 0.0
  %v1158 = vmax.f32 %v1153, 0.0
  %v1159 = vpack.c.bf16 %v1157, %v1157
  %v1160 = vpack.c.bf16 %v1158, %v1158
  %v1161 = vld [vmem:[%s4] sm:$0xff]
  %v1162 = vld [vmem:[%s4 + $0x8] sm:$0xff]
  %v1163 = vld [vmem:[%s4 + $0x10] sm:$0xff]
  %v1164 = vld [vmem:[%s4 + $0x18] sm:$0xff]
  %v1165 = vld [vmem:[%s4 + $0x20] sm:$0xff]
  %v1166 = vld [vmem:[%s4 + $0x28] sm:$0xff]
  %v1167 = vld [vmem:[%s4 + $0x30] sm:$0xff]
  %v1168 = vld [vmem:[%s4 + $0x38] sm:$0xff]
  %v1169 = vld [vmem:[%s4 + $0x40] sm:$0xff]
  %v1170 = vld [vmem:[%s4 + $0x48] sm:$0xff]
  %v1171 = vld [vmem:[%s4 + $0x50] sm:$0xff]
  %v1172 = vld [vmem:[%s4 + $0x58] sm:$0xff]
  %v1173 = vld [vmem:[%s4 + $0x60] sm:$0xff]
  %v1174 = vld [vmem:[%s4 + $0x68] sm:$0xff]
  %v1175 = vld [vmem:[%s4 + $0x70] sm:$0xff]
  %v1176 = vld [vmem:[%s4 + $0x78] sm:$0xff]
  %v1177 = vld [vmem:[%s4 + $0x80] sm:$0xff]
  %v1178 = vld [vmem:[%s4 + $0x88] sm:$0xff]
  %v1179 = vld [vmem:[%s4 + $0x90] sm:$0xff]
  %v1180 = vld [vmem:[%s4 + $0x98] sm:$0xff]
  %v1181 = vld [vmem:[%s4 + $0xa0] sm:$0xff]
  %v1182 = vld [vmem:[%s4 + $0xa8] sm:$0xff]
  %v1183 = vld [vmem:[%s4 + $0xb0] sm:$0xff]
  %v1184 = vld [vmem:[%s4 + $0xb8] sm:$0xff]
  %v1185 = vld [vmem:[%s4 + $0xc0] sm:$0xff]
  %v1186 = vld [vmem:[%s4 + $0xc8] sm:$0xff]
  %v1187 = vld [vmem:[%s4 + $0xd0] sm:$0xff]
  %v1188 = vld [vmem:[%s4 + $0xd8] sm:$0xff]
  %v1189 = vld [vmem:[%s4 + $0xe0] sm:$0xff]
  %v1190 = vld [vmem:[%s4 + $0xe8] sm:$0xff]
  %v1191 = vld [vmem:[%s4 + $0xf0] sm:$0xff]
  %v1192 = vld [vmem:[%s4 + $0xf8] sm:$0xff]
  %v1193 = vld [vmem:[%s4 + $0x100] sm:$0xff]
  %v1194 = vld [vmem:[%s4 + $0x108] sm:$0xff]
  %v1195 = vld [vmem:[%s4 + $0x110] sm:$0xff]
  %v1196 = vld [vmem:[%s4 + $0x118] sm:$0xff]
  %v1197 = vld [vmem:[%s4 + $0x120] sm:$0xff]
  %v1198 = vld [vmem:[%s4 + $0x128] sm:$0xff]
  %v1199 = vld [vmem:[%s4 + $0x130] sm:$0xff]
  %v1200 = vld [vmem:[%s4 + $0x138] sm:$0xff]
  %v1201 = vld [vmem:[%s4 + $0x140] sm:$0xff]
  %v1202 = vld [vmem:[%s4 + $0x148] sm:$0xff]
  %v1203 = vld [vmem:[%s4 + $0x150] sm:$0xff]
  %v1204 = vld [vmem:[%s4 + $0x158] sm:$0xff]
  %v1205 = vld [vmem:[%s4 + $0x160] sm:$0xff]
  %v1206 = vld [vmem:[%s4 + $0x168] sm:$0xff]
  %v1207 = vld [vmem:[%s4 + $0x170] sm:$0xff]
  %v1208 = vld [vmem:[%s4 + $0x178] sm:$0xff]
  %v1209 = vld [vmem:[%s4 + $0x180] sm:$0xff]
  %v1210 = vld [vmem:[%s4 + $0x188] sm:$0xff]
  %v1211 = vld [vmem:[%s4 + $0x190] sm:$0xff]
  %v1212 = vld [vmem:[%s4 + $0x198] sm:$0xff]
  %v1213 = vld [vmem:[%s4 + $0x1a0] sm:$0xff]
  %v1214 = vld [vmem:[%s4 + $0x1a8] sm:$0xff]
  %v1215 = vld [vmem:[%s4 + $0x1b0] sm:$0xff]
  %v1216 = vld [vmem:[%s4 + $0x1b8] sm:$0xff]
  %v1217 = vld [vmem:[%s4 + $0x1c0] sm:$0xff]
  %v1218 = vld [vmem:[%s4 + $0x1c8] sm:$0xff]
  %v1219 = vld [vmem:[%s4 + $0x1d0] sm:$0xff]
  %v1220 = vld [vmem:[%s4 + $0x1d8] sm:$0xff]
  %v1221 = vld [vmem:[%s4 + $0x1e0] sm:$0xff]
  %v1222 = vld [vmem:[%s4 + $0x1e8] sm:$0xff]
  %v1223 = vld [vmem:[%s4 + $0x1f0] sm:$0xff]
  %v1224 = vld [vmem:[%s4 + $0x1f8] sm:$0xff]
  %v1225 = vld [vmem:[%s4 + $0x200] sm:$0xff]
  %v1226 = vld [vmem:[%s4 + $0x208] sm:$0xff]
  %v1227 = vld [vmem:[%s4 + $0x210] sm:$0xff]
  %v1228 = vld [vmem:[%s4 + $0x218] sm:$0xff]
  %v1229 = vld [vmem:[%s4 + $0x220] sm:$0xff]
  %v1230 = vld [vmem:[%s4 + $0x228] sm:$0xff]
  %v1231 = vld [vmem:[%s4 + $0x230] sm:$0xff]
  %v1232 = vld [vmem:[%s4 + $0x238] sm:$0xff]
  %v1233 = vld [vmem:[%s4 + $0x240] sm:$0xff]
  %v1234 = vld [vmem:[%s4 + $0x248] sm:$0xff]
  %v1235 = vld [vmem:[%s4 + $0x250] sm:$0xff]
  %v1236 = vld [vmem:[%s4 + $0x258] sm:$0xff]
  %v1237 = vld [vmem:[%s4 + $0x260] sm:$0xff]
  %v1238 = vld [vmem:[%s4 + $0x268] sm:$0xff]
  %v1239 = vld [vmem:[%s4 + $0x270] sm:$0xff]
  %v1240 = vld [vmem:[%s4 + $0x278] sm:$0xff]
  %v1241 = vld [vmem:[%s4 + $0x280] sm:$0xff]
  %v1242 = vld [vmem:[%s4 + $0x288] sm:$0xff]
  %v1243 = vld [vmem:[%s4 + $0x290] sm:$0xff]
  %v1244 = vld [vmem:[%s4 + $0x298] sm:$0xff]
  %v1245 = vld [vmem:[%s4 + $0x2a0] sm:$0xff]
  %v1246 = vld [vmem:[%s4 + $0x2a8] sm:$0xff]
  %v1247 = vld [vmem:[%s4 + $0x2b0] sm:$0xff]
  %v1248 = vld [vmem:[%s4 + $0x2b8] sm:$0xff]
  %v1249 = vld [vmem:[%s4 + $0x2c0] sm:$0xff]
  %v1250 = vld [vmem:[%s4 + $0x2c8] sm:$0xff]
  %v1251 = vld [vmem:[%s4 + $0x2d0] sm:$0xff]
  %v1252 = vld [vmem:[%s4 + $0x2d8] sm:$0xff]
  %v1253 = vld [vmem:[%s4 + $0x2e0] sm:$0xff]
  %v1254 = vld [vmem:[%s4 + $0x2e8] sm:$0xff]
  %v1255 = vld [vmem:[%s4 + $0x2f0] sm:$0xff]
  %v1256 = vld [vmem:[%s4 + $0x2f8] sm:$0xff]
  %v1257 = vld [vmem:[%s4 + $0x300] sm:$0xff]
  %v1258 = vld [vmem:[%s4 + $0x308] sm:$0xff]
  %v1259 = vld [vmem:[%s4 + $0x310] sm:$0xff]
  %v1260 = vld [vmem:[%s4 + $0x318] sm:$0xff]
  %v1261 = vld [vmem:[%s4 + $0x320] sm:$0xff]
  %v1262 = vld [vmem:[%s4 + $0x328] sm:$0xff]
  %v1263 = vld [vmem:[%s4 + $0x330] sm:$0xff]
  %v1264 = vld [vmem:[%s4 + $0x338] sm:$0xff]
  %v1265 = vld [vmem:[%s4 + $0x340] sm:$0xff]
  %v1266 = vld [vmem:[%s4 + $0x348] sm:$0xff]
  %v1267 = vld [vmem:[%s4 + $0x350] sm:$0xff]
  %v1268 = vld [vmem:[%s4 + $0x358] sm:$0xff]
  %v1269 = vld [vmem:[%s4 + $0x360] sm:$0xff]
  %v1270 = vld [vmem:[%s4 + $0x368] sm:$0xff]
  %v1271 = vld [vmem:[%s4 + $0x370] sm:$0xff]
  %v1272 = vld [vmem:[%s4 + $0x378] sm:$0xff]
  %v1273 = vld [vmem:[%s4 + $0x380] sm:$0xff]
  %v1274 = vld [vmem:[%s4 + $0x388] sm:$0xff]
  %v1275 = vld [vmem:[%s4 + $0x390] sm:$0xff]
  %v1276 = vld [vmem:[%s4 + $0x398] sm:$0xff]
  %v1277 = vld [vmem:[%s4 + $0x3a0] sm:$0xff]
  %v1278 = vld [vmem:[%s4 + $0x3a8] sm:$0xff]
  %v1279 = vld [vmem:[%s4 + $0x3b0] sm:$0xff]
  %v1280 = vld [vmem:[%s4 + $0x3b8] sm:$0xff]
  %v1281 = vld [vmem:[%s4 + $0x3c0] sm:$0xff]
  %v1282 = vld [vmem:[%s4 + $0x3c8] sm:$0xff]
  %v1283 = vld [vmem:[%s4 + $0x3d0] sm:$0xff]
  %v1284 = vld [vmem:[%s4 + $0x3d8] sm:$0xff]
  %v1285 = vld [vmem:[%s4 + $0x3e0] sm:$0xff]
  %v1286 = vld [vmem:[%s4 + $0x3e8] sm:$0xff]
  %v1287 = vld [vmem:[%s4 + $0x3f0] sm:$0xff]
  %v1288 = vld [vmem:[%s4 + $0x3f8] sm:$0xff]
  %v1289 = vld [vmem:[%s1] sm:$0xf]
  %v1290 = vld [vmem:[%s5] sm:$0xff]
  %v1291 = vld [vmem:[%s5 + $0x8] sm:$0xff]
  %v1292 = vld [vmem:[%s5 + $0x10] sm:$0xff]
  %v1293 = vld [vmem:[%s5 + $0x18] sm:$0xff]
  %v1294 = vld [vmem:[%s5 + $0x20] sm:$0xff]
  %v1295 = vld [vmem:[%s5 + $0x28] sm:$0xff]
  %v1296 = vld [vmem:[%s5 + $0x30] sm:$0xff]
  %v1297 = vld [vmem:[%s5 + $0x38] sm:$0xff]
  %v1298 = vld [vmem:[%s5 + $0x40] sm:$0xff]
  %v1299 = vld [vmem:[%s5 + $0x48] sm:$0xff]
  %v1300 = vld [vmem:[%s5 + $0x50] sm:$0xff]
  %v1301 = vld [vmem:[%s5 + $0x58] sm:$0xff]
  %v1302 = vld [vmem:[%s5 + $0x60] sm:$0xff]
  %v1303 = vld [vmem:[%s5 + $0x68] sm:$0xff]
  %v1304 = vld [vmem:[%s5 + $0x70] sm:$0xff]
  %v1305 = vld [vmem:[%s5 + $0x78] sm:$0xff]
  %v1306 = vld [vmem:[%s5 + $0x80] sm:$0xff]
  %v1307 = vld [vmem:[%s5 + $0x88] sm:$0xff]
  %v1308 = vld [vmem:[%s5 + $0x90] sm:$0xff]
  %v1309 = vld [vmem:[%s5 + $0x98] sm:$0xff]
  %v1310 = vld [vmem:[%s5 + $0xa0] sm:$0xff]
  %v1311 = vld [vmem:[%s5 + $0xa8] sm:$0xff]
  %v1312 = vld [vmem:[%s5 + $0xb0] sm:$0xff]
  %v1313 = vld [vmem:[%s5 + $0xb8] sm:$0xff]
  %v1314 = vld [vmem:[%s5 + $0xc0] sm:$0xff]
  %v1315 = vld [vmem:[%s5 + $0xc8] sm:$0xff]
  %v1316 = vld [vmem:[%s5 + $0xd0] sm:$0xff]
  %v1317 = vld [vmem:[%s5 + $0xd8] sm:$0xff]
  %v1318 = vld [vmem:[%s5 + $0xe0] sm:$0xff]
  %v1319 = vld [vmem:[%s5 + $0xe8] sm:$0xff]
  %v1320 = vld [vmem:[%s5 + $0xf0] sm:$0xff]
  %v1321 = vld [vmem:[%s5 + $0xf8] sm:$0xff]
  %v1322 = vld [vmem:[%s5 + $0x100] sm:$0xff]
  %v1323 = vld [vmem:[%s5 + $0x108] sm:$0xff]
  %v1324 = vld [vmem:[%s5 + $0x110] sm:$0xff]
  %v1325 = vld [vmem:[%s5 + $0x118] sm:$0xff]
  %v1326 = vld [vmem:[%s5 + $0x120] sm:$0xff]
  %v1327 = vld [vmem:[%s5 + $0x128] sm:$0xff]
  %v1328 = vld [vmem:[%s5 + $0x130] sm:$0xff]
  %v1329 = vld [vmem:[%s5 + $0x138] sm:$0xff]
  %v1330 = vld [vmem:[%s5 + $0x140] sm:$0xff]
  %v1331 = vld [vmem:[%s5 + $0x148] sm:$0xff]
  %v1332 = vld [vmem:[%s5 + $0x150] sm:$0xff]
  %v1333 = vld [vmem:[%s5 + $0x158] sm:$0xff]
  %v1334 = vld [vmem:[%s5 + $0x160] sm:$0xff]
  %v1335 = vld [vmem:[%s5 + $0x168] sm:$0xff]
  %v1336 = vld [vmem:[%s5 + $0x170] sm:$0xff]
  %v1337 = vld [vmem:[%s5 + $0x178] sm:$0xff]
  %v1338 = vld [vmem:[%s5 + $0x180] sm:$0xff]
  %v1339 = vld [vmem:[%s5 + $0x188] sm:$0xff]
  %v1340 = vld [vmem:[%s5 + $0x190] sm:$0xff]
  %v1341 = vld [vmem:[%s5 + $0x198] sm:$0xff]
  %v1342 = vld [vmem:[%s5 + $0x1a0] sm:$0xff]
  %v1343 = vld [vmem:[%s5 + $0x1a8] sm:$0xff]
  %v1344 = vld [vmem:[%s5 + $0x1b0] sm:$0xff]
  %v1345 = vld [vmem:[%s5 + $0x1b8] sm:$0xff]
  %v1346 = vld [vmem:[%s5 + $0x1c0] sm:$0xff]
  %v1347 = vld [vmem:[%s5 + $0x1c8] sm:$0xff]
  %v1348 = vld [vmem:[%s5 + $0x1d0] sm:$0xff]
  %v1349 = vld [vmem:[%s5 + $0x1d8] sm:$0xff]
  %v1350 = vld [vmem:[%s5 + $0x1e0] sm:$0xff]
  %v1351 = vld [vmem:[%s5 + $0x1e8] sm:$0xff]
  %v1352 = vld [vmem:[%s5 + $0x1f0] sm:$0xff]
  %v1353 = vld [vmem:[%s5 + $0x1f8] sm:$0xff]
  %v1418 = vunpack.c.l.b16 %v1290
  %v1419 = vunpack.c.h.b16 %v1290
  %v1420 = vunpack.c.l.b16 %v1291
  %v1421 = vunpack.c.h.b16 %v1291
  %v1422 = vunpack.c.l.b16 %v1292
  %v1423 = vunpack.c.h.b16 %v1292
  %v1424 = vunpack.c.l.b16 %v1293
  %v1425 = vunpack.c.h.b16 %v1293
  %v1426 = vunpack.c.l.b16 %v1294
  %v1427 = vunpack.c.h.b16 %v1294
  %v1428 = vunpack.c.l.b16 %v1295
  %v1429 = vunpack.c.h.b16 %v1295
  %v1430 = vunpack.c.l.b16 %v1296
  %v1431 = vunpack.c.h.b16 %v1296
  %v1432 = vunpack.c.l.b16 %v1297
  %v1433 = vunpack.c.h.b16 %v1297
  %v1434 = vunpack.c.l.b16 %v1298
  %v1435 = vunpack.c.h.b16 %v1298
  %v1436 = vunpack.c.l.b16 %v1299
  %v1437 = vunpack.c.h.b16 %v1299
  %v1438 = vunpack.c.l.b16 %v1300
  %v1439 = vunpack.c.h.b16 %v1300
  %v1440 = vunpack.c.l.b16 %v1301
  %v1441 = vunpack.c.h.b16 %v1301
  %v1442 = vunpack.c.l.b16 %v1302
  %v1443 = vunpack.c.h.b16 %v1302
  %v1444 = vunpack.c.l.b16 %v1303
  %v1445 = vunpack.c.h.b16 %v1303
  %v1446 = vunpack.c.l.b16 %v1304
  %v1447 = vunpack.c.h.b16 %v1304
  %v1448 = vunpack.c.l.b16 %v1305
  %v1449 = vunpack.c.h.b16 %v1305
  %v1450 = vunpack.c.l.b16 %v1306
  %v1451 = vunpack.c.h.b16 %v1306
  %v1452 = vunpack.c.l.b16 %v1307
  %v1453 = vunpack.c.h.b16 %v1307
  %v1454 = vunpack.c.l.b16 %v1308
  %v1455 = vunpack.c.h.b16 %v1308
  %v1456 = vunpack.c.l.b16 %v1309
  %v1457 = vunpack.c.h.b16 %v1309
  %v1458 = vunpack.c.l.b16 %v1310
  %v1459 = vunpack.c.h.b16 %v1310
  %v1460 = vunpack.c.l.b16 %v1311
  %v1461 = vunpack.c.h.b16 %v1311
  %v1462 = vunpack.c.l.b16 %v1312
  %v1463 = vunpack.c.h.b16 %v1312
  %v1464 = vunpack.c.l.b16 %v1313
  %v1465 = vunpack.c.h.b16 %v1313
  %v1466 = vunpack.c.l.b16 %v1314
  %v1467 = vunpack.c.h.b16 %v1314
  %v1468 = vunpack.c.l.b16 %v1315
  %v1469 = vunpack.c.h.b16 %v1315
  %v1470 = vunpack.c.l.b16 %v1316
  %v1471 = vunpack.c.h.b16 %v1316
  %v1472 = vunpack.c.l.b16 %v1317
  %v1473 = vunpack.c.h.b16 %v1317
  %v1474 = vunpack.c.l.b16 %v1318
  %v1475 = vunpack.c.h.b16 %v1318
  %v1476 = vunpack.c.l.b16 %v1319
  %v1477 = vunpack.c.h.b16 %v1319
  %v1478 = vunpack.c.l.b16 %v1320
  %v1479 = vunpack.c.h.b16 %v1320
  %v1480 = vunpack.c.l.b16 %v1321
  %v1481 = vunpack.c.h.b16 %v1321
  %v1482 = vunpack.c.l.b16 %v1322
  %v1483 = vunpack.c.h.b16 %v1322
  %v1484 = vunpack.c.l.b16 %v1323
  %v1485 = vunpack.c.h.b16 %v1323
  %v1486 = vunpack.c.l.b16 %v1324
  %v1487 = vunpack.c.h.b16 %v1324
  %v1488 = vunpack.c.l.b16 %v1325
  %v1489 = vunpack.c.h.b16 %v1325
  %v1490 = vunpack.c.l.b16 %v1326
  %v1491 = vunpack.c.h.b16 %v1326
  %v1492 = vunpack.c.l.b16 %v1327
  %v1493 = vunpack.c.h.b16 %v1327
  %v1494 = vunpack.c.l.b16 %v1328
  %v1495 = vunpack.c.h.b16 %v1328
  %v1496 = vunpack.c.l.b16 %v1329
  %v1497 = vunpack.c.h.b16 %v1329
  %v1498 = vunpack.c.l.b16 %v1330
  %v1499 = vunpack.c.h.b16 %v1330
  %v1500 = vunpack.c.l.b16 %v1331
  %v1501 = vunpack.c.h.b16 %v1331
  %v1502 = vunpack.c.l.b16 %v1332
  %v1503 = vunpack.c.h.b16 %v1332
  %v1504 = vunpack.c.l.b16 %v1333
  %v1505 = vunpack.c.h.b16 %v1333
  %v1506 = vunpack.c.l.b16 %v1334
  %v1507 = vunpack.c.h.b16 %v1334
  %v1508 = vunpack.c.l.b16 %v1335
  %v1509 = vunpack.c.h.b16 %v1335
  %v1510 = vunpack.c.l.b16 %v1336
  %v1511 = vunpack.c.h.b16 %v1336
  %v1512 = vunpack.c.l.b16 %v1337
  %v1513 = vunpack.c.h.b16 %v1337
  %v1514 = vunpack.c.l.b16 %v1338
  %v1515 = vunpack.c.h.b16 %v1338
  %v1516 = vunpack.c.l.b16 %v1339
  %v1517 = vunpack.c.h.b16 %v1339
  %v1518 = vunpack.c.l.b16 %v1340
  %v1519 = vunpack.c.h.b16 %v1340
  %v1520 = vunpack.c.l.b16 %v1341
  %v1521 = vunpack.c.h.b16 %v1341
  %v1522 = vunpack.c.l.b16 %v1342
  %v1523 = vunpack.c.h.b16 %v1342
  %v1524 = vunpack.c.l.b16 %v1343
  %v1525 = vunpack.c.h.b16 %v1343
  %v1526 = vunpack.c.l.b16 %v1344
  %v1527 = vunpack.c.h.b16 %v1344
  %v1528 = vunpack.c.l.b16 %v1345
  %v1529 = vunpack.c.h.b16 %v1345
  %v1530 = vunpack.c.l.b16 %v1346
  %v1531 = vunpack.c.h.b16 %v1346
  %v1532 = vunpack.c.l.b16 %v1347
  %v1533 = vunpack.c.h.b16 %v1347
  %v1534 = vunpack.c.l.b16 %v1348
  %v1535 = vunpack.c.h.b16 %v1348
  %v1536 = vunpack.c.l.b16 %v1349
  %v1537 = vunpack.c.h.b16 %v1349
  %v1538 = vunpack.c.l.b16 %v1350
  %v1539 = vunpack.c.h.b16 %v1350
  %v1540 = vunpack.c.l.b16 %v1351
  %v1541 = vunpack.c.h.b16 %v1351
  %v1542 = vunpack.c.l.b16 %v1352
  %v1543 = vunpack.c.h.b16 %v1352
  %v1544 = vunpack.c.l.b16 %v1353
  %v1545 = vunpack.c.h.b16 %v1353
  %v1546 = vpack.c.b16 %v1426, %v1418
  %v1547 = vpack.c.b16 %v1427, %v1419
  %v1548 = vpack.c.b16 %v1428, %v1420
  %v1549 = vpack.c.b16 %v1429, %v1421
  %v1550 = vpack.c.b16 %v1430, %v1422
  %v1551 = vpack.c.b16 %v1431, %v1423
  %v1552 = vpack.c.b16 %v1432, %v1424
  %v1553 = vpack.c.b16 %v1433, %v1425
  %v1554 = vpack.c.b16 %v1442, %v1434
  %v1555 = vpack.c.b16 %v1443, %v1435
  %v1556 = vpack.c.b16 %v1444, %v1436
  %v1557 = vpack.c.b16 %v1445, %v1437
  %v1558 = vpack.c.b16 %v1446, %v1438
  %v1559 = vpack.c.b16 %v1447, %v1439
  %v1560 = vpack.c.b16 %v1448, %v1440
  %v1561 = vpack.c.b16 %v1449, %v1441
  %v1562 = vpack.c.b16 %v1458, %v1450
  %v1563 = vpack.c.b16 %v1459, %v1451
  %v1564 = vpack.c.b16 %v1460, %v1452
  %v1565 = vpack.c.b16 %v1461, %v1453
  %v1566 = vpack.c.b16 %v1462, %v1454
  %v1567 = vpack.c.b16 %v1463, %v1455
  %v1568 = vpack.c.b16 %v1464, %v1456
  %v1569 = vpack.c.b16 %v1465, %v1457
  %v1570 = vpack.c.b16 %v1474, %v1466
  %v1571 = vpack.c.b16 %v1475, %v1467
  %v1572 = vpack.c.b16 %v1476, %v1468
  %v1573 = vpack.c.b16 %v1477, %v1469
  %v1574 = vpack.c.b16 %v1478, %v1470
  %v1575 = vpack.c.b16 %v1479, %v1471
  %v1576 = vpack.c.b16 %v1480, %v1472
  %v1577 = vpack.c.b16 %v1481, %v1473
  %v1578 = vpack.c.b16 %v1490, %v1482
  %v1579 = vpack.c.b16 %v1491, %v1483
  %v1580 = vpack.c.b16 %v1492, %v1484
  %v1581 = vpack.c.b16 %v1493, %v1485
  %v1582 = vpack.c.b16 %v1494, %v1486
  %v1583 = vpack.c.b16 %v1495, %v1487
  %v1584 = vpack.c.b16 %v1496, %v1488
  %v1585 = vpack.c.b16 %v1497, %v1489
  %v1586 = vpack.c.b16 %v1506, %v1498
  %v1587 = vpack.c.b16 %v1507, %v1499
  %v1588 = vpack.c.b16 %v1508, %v1500
  %v1589 = vpack.c.b16 %v1509, %v1501
  %v1590 = vpack.c.b16 %v1510, %v1502
  %v1591 = vpack.c.b16 %v1511, %v1503
  %v1592 = vpack.c.b16 %v1512, %v1504
  %v1593 = vpack.c.b16 %v1513, %v1505
  %v1594 = vpack.c.b16 %v1522, %v1514
  %v1595 = vpack.c.b16 %v1523, %v1515
  %v1596 = vpack.c.b16 %v1524, %v1516
  %v1597 = vpack.c.b16 %v1525, %v1517
  %v1598 = vpack.c.b16 %v1526, %v1518
  %v1599 = vpack.c.b16 %v1527, %v1519
  %v1600 = vpack.c.b16 %v1528, %v1520
  %v1601 = vpack.c.b16 %v1529, %v1521
  %v1602 = vpack.c.b16 %v1538, %v1530
  %v1603 = vpack.c.b16 %v1539, %v1531
  %v1604 = vpack.c.b16 %v1540, %v1532
  %v1605 = vpack.c.b16 %v1541, %v1533
  %v1606 = vpack.c.b16 %v1542, %v1534
  %v1607 = vpack.c.b16 %v1543, %v1535
  %v1608 = vpack.c.b16 %v1544, %v1536
  %v1609 = vpack.c.b16 %v1545, %v1537
  %1674 = vmatprep.subr.bf16.mxu0 %v1547
  %1675 = vmatpush1.bf16.msra.mxu0 %v1546
  %1676 = vmatprep.subr.bf16.mxu0 %v1555
  %1677 = vmatpush1.bf16.msra.mxu0 %v1554
  %1678 = vmatprep.subr.bf16.mxu0 %v1563
  %1679 = vmatpush1.bf16.msra.mxu0 %v1562
  %1680 = vmatprep.subr.bf16.mxu0 %v1571
  %1681 = vmatpush1.bf16.msra.mxu0 %v1570
  %1682 = vmatprep.subr.bf16.mxu0 %v1579
  %1683 = vmatpush1.bf16.msra.mxu0 %v1578
  %1684 = vmatprep.subr.bf16.mxu0 %v1587
  %1685 = vmatpush1.bf16.msra.mxu0 %v1586
  %1686 = vmatprep.subr.bf16.mxu0 %v1595
  %1687 = vmatpush1.bf16.msra.mxu0 %v1594
  %1688 = vmatprep.subr.bf16.mxu0 %v1603
  %1689 = vmatpush1.bf16.msra.mxu0 %v1602
  %1690 = vmatprep.subr.bf16.mxu0 0
  %1691 = vmatpush1.bf16.msra.mxu0 0
  %1692 = vmatprep.subr.bf16.mxu0 0
  %1693 = vmatpush1.bf16.msra.mxu0 0
  %1694 = vmatprep.subr.bf16.mxu0 0
  %1695 = vmatpush1.bf16.msra.mxu0 0
  %1696 = vmatprep.subr.bf16.mxu0 0
  %1697 = vmatpush1.bf16.msra.mxu0 0
  %1698 = vmatprep.subr.bf16.mxu0 0
  %1699 = vmatpush1.bf16.msra.mxu0 0
  %1700 = vmatprep.subr.bf16.mxu0 0
  %1701 = vmatpush1.bf16.msra.mxu0 0
  %1702 = vmatprep.subr.bf16.mxu0 0
  %1703 = vmatpush1.bf16.msra.mxu0 0
  %1704 = vmatprep.subr.bf16.mxu0 0
  %1705 = vmatpush1.bf16.msra.mxu0 0
  %1706 = vmatprep.mubr.bf16.mxu0 0
  %1707 = vmatmul.mubr.bf16.gmra.mrb[0].mxu0 %v1289
  %v1708 = vpop.f32.mrb[0].mxu0
  %v1709 = vadd.f32 0.0, %v1708
  %v1710 = vpop.f32.mrb[0].mxu0
  %v1711 = vadd.f32 0.0, %v1710
  %v1712 = vpop.f32.mrb[0].mxu0
  %v1713 = vpop.f32.mrb[0].mxu0
  %1714 = vdwg.mxu0
  %1715 = vmatprep.subr.bf16.mxu0 %v1549
  %1716 = vmatpush1.bf16.msra.mxu0 %v1548
  %1717 = vmatprep.subr.bf16.mxu0 %v1557
  %1718 = vmatpush1.bf16.msra.mxu0 %v1556
  %1719 = vmatprep.subr.bf16.mxu0 %v1565
  %1720 = vmatpush1.bf16.msra.mxu0 %v1564
  %1721 = vmatprep.subr.bf16.mxu0 %v1573
  %1722 = vmatpush1.bf16.msra.mxu0 %v1572
  %1723 = vmatprep.subr.bf16.mxu0 %v1581
  %1724 = vmatpush1.bf16.msra.mxu0 %v1580
  %1725 = vmatprep.subr.bf16.mxu0 %v1589
  %1726 = vmatpush1.bf16.msra.mxu0 %v1588
  %1727 = vmatprep.subr.bf16.mxu0 %v1597
  %1728 = vmatpush1.bf16.msra.mxu0 %v1596
  %1729 = vmatprep.subr.bf16.mxu0 %v1605
  %1730 = vmatpush1.bf16.msra.mxu0 %v1604
  %1731 = vmatprep.subr.bf16.mxu0 0
  %1732 = vmatpush1.bf16.msra.mxu0 0
  %1733 = vmatprep.subr.bf16.mxu0 0
  %1734 = vmatpush1.bf16.msra.mxu0 0
  %1735 = vmatprep.subr.bf16.mxu0 0
  %1736 = vmatpush1.bf16.msra.mxu0 0
  %1737 = vmatprep.subr.bf16.mxu0 0
  %1738 = vmatpush1.bf16.msra.mxu0 0
  %1739 = vmatprep.subr.bf16.mxu0 0
  %1740 = vmatpush1.bf16.msra.mxu0 0
  %1741 = vmatprep.subr.bf16.mxu0 0
  %1742 = vmatpush1.bf16.msra.mxu0 0
  %1743 = vmatprep.subr.bf16.mxu0 0
  %1744 = vmatpush1.bf16.msra.mxu0 0
  %1745 = vmatprep.subr.bf16.mxu0 0
  %1746 = vmatpush1.bf16.msra.mxu0 0
  %1747 = vmatprep.mubr.bf16.mxu0 0
  %1748 = vmatmul.mubr.bf16.gmra.mrb[0].mxu0 %v1289
  %v1749 = vpop.f32.mrb[0].mxu0
  %v1750 = vadd.f32 0.0, %v1749
  %v1751 = vpop.f32.mrb[0].mxu0
  %v1752 = vadd.f32 0.0, %v1751
  %v1753 = vpop.f32.mrb[0].mxu0
  %v1754 = vpop.f32.mrb[0].mxu0
  %1755 = vdwg.mxu0
  %1756 = vmatprep.subr.bf16.mxu0 %v1551
  %1757 = vmatpush1.bf16.msra.mxu0 %v1550
  %1758 = vmatprep.subr.bf16.mxu0 %v1559
  %1759 = vmatpush1.bf16.msra.mxu0 %v1558
  %1760 = vmatprep.subr.bf16.mxu0 %v1567
  %1761 = vmatpush1.bf16.msra.mxu0 %v1566
  %1762 = vmatprep.subr.bf16.mxu0 %v1575
  %1763 = vmatpush1.bf16.msra.mxu0 %v1574
  %1764 = vmatprep.subr.bf16.mxu0 %v1583
  %1765 = vmatpush1.bf16.msra.mxu0 %v1582
  %1766 = vmatprep.subr.bf16.mxu0 %v1591
  %1767 = vmatpush1.bf16.msra.mxu0 %v1590
  %1768 = vmatprep.subr.bf16.mxu0 %v1599
  %1769 = vmatpush1.bf16.msra.mxu0 %v1598
  %1770 = vmatprep.subr.bf16.mxu0 %v1607
  %1771 = vmatpush1.bf16.msra.mxu0 %v1606
  %1772 = vmatprep.subr.bf16.mxu0 0
  %1773 = vmatpush1.bf16.msra.mxu0 0
  %1774 = vmatprep.subr.bf16.mxu0 0
  %1775 = vmatpush1.bf16.msra.mxu0 0
  %1776 = vmatprep.subr.bf16.mxu0 0
  %1777 = vmatpush1.bf16.msra.mxu0 0
  %1778 = vmatprep.subr.bf16.mxu0 0
  %1779 = vmatpush1.bf16.msra.mxu0 0
  %1780 = vmatprep.subr.bf16.mxu0 0
  %1781 = vmatpush1.bf16.msra.mxu0 0
  %1782 = vmatprep.subr.bf16.mxu0 0
  %1783 = vmatpush1.bf16.msra.mxu0 0
  %1784 = vmatprep.subr.bf16.mxu0 0
  %1785 = vmatpush1.bf16.msra.mxu0 0
  %1786 = vmatprep.subr.bf16.mxu0 0
  %1787 = vmatpush1.bf16.msra.mxu0 0
  %1788 = vmatprep.mubr.bf16.mxu0 0
  %1789 = vmatmul.mubr.bf16.gmra.mrb[0].mxu0 %v1289
  %v1790 = vpop.f32.mrb[0].mxu0
  %v1791 = vadd.f32 0.0, %v1790
  %v1792 = vpop.f32.mrb[0].mxu0
  %v1793 = vadd.f32 0.0, %v1792
  %v1794 = vpop.f32.mrb[0].mxu0
  %v1795 = vpop.f32.mrb[0].mxu0
  %1796 = vdwg.mxu0
  %1797 = vmatprep.subr.bf16.mxu0 %v1553
  %1798 = vmatpush1.bf16.msra.mxu0 %v1552
  %1799 = vmatprep.subr.bf16.mxu0 %v1561
  %1800 = vmatpush1.bf16.msra.mxu0 %v1560
  %1801 = vmatprep.subr.bf16.mxu0 %v1569
  %1802 = vmatpush1.bf16.msra.mxu0 %v1568
  %1803 = vmatprep.subr.bf16.mxu0 %v1577
  %1804 = vmatpush1.bf16.msra.mxu0 %v1576
  %1805 = vmatprep.subr.bf16.mxu0 %v1585
  %1806 = vmatpush1.bf16.msra.mxu0 %v1584
  %1807 = vmatprep.subr.bf16.mxu0 %v1593
  %1808 = vmatpush1.bf16.msra.mxu0 %v1592
  %1809 = vmatprep.subr.bf16.mxu0 %v1601
  %1810 = vmatpush1.bf16.msra.mxu0 %v1600
  %1811 = vmatprep.subr.bf16.mxu0 %v1609
  %1812 = vmatpush1.bf16.msra.mxu0 %v1608
  %1813 = vmatprep.subr.bf16.mxu0 0
  %1814 = vmatpush1.bf16.msra.mxu0 0
  %1815 = vmatprep.subr.bf16.mxu0 0
  %1816 = vmatpush1.bf16.msra.mxu0 0
  %1817 = vmatprep.subr.bf16.mxu0 0
  %1818 = vmatpush1.bf16.msra.mxu0 0
  %1819 = vmatprep.subr.bf16.mxu0 0
  %1820 = vmatpush1.bf16.msra.mxu0 0
  %1821 = vmatprep.subr.bf16.mxu0 0
  %1822 = vmatpush1.bf16.msra.mxu0 0
  %1823 = vmatprep.subr.bf16.mxu0 0
  %1824 = vmatpush1.bf16.msra.mxu0 0
  %1825 = vmatprep.subr.bf16.mxu0 0
  %1826 = vmatpush1.bf16.msra.mxu0 0
  %1827 = vmatprep.subr.bf16.mxu0 0
  %1828 = vmatpush1.bf16.msra.mxu0 0
  %1829 = vmatprep.mubr.bf16.mxu0 0
  %1830 = vmatmul.mubr.bf16.gmra.mrb[0].mxu0 %v1289
  %v1831 = vpop.f32.mrb[0].mxu0
  %v1832 = vadd.f32 0.0, %v1831
  %v1833 = vpop.f32.mrb[0].mxu0
  %v1834 = vadd.f32 0.0, %v1833
  %v1835 = vpop.f32.mrb[0].mxu0
  %v1836 = vpop.f32.mrb[0].mxu0
  %1837 = vdwg.mxu0
  %v1966 = vunpack.c.l.b16 %v1161
  %v1967 = vunpack.c.h.b16 %v1161
  %v1968 = vunpack.c.l.b16 %v1162
  %v1969 = vunpack.c.h.b16 %v1162
  %v1970 = vunpack.c.l.b16 %v1163
  %v1971 = vunpack.c.h.b16 %v1163
  %v1972 = vunpack.c.l.b16 %v1164
  %v1973 = vunpack.c.h.b16 %v1164
  %v1974 = vunpack.c.l.b16 %v1165
  %v1975 = vunpack.c.h.b16 %v1165
  %v1976 = vunpack.c.l.b16 %v1166
  %v1977 = vunpack.c.h.b16 %v1166
  %v1978 = vunpack.c.l.b16 %v1167
  %v1979 = vunpack.c.h.b16 %v1167
  %v1980 = vunpack.c.l.b16 %v1168
  %v1981 = vunpack.c.h.b16 %v1168
  %v1982 = vunpack.c.l.b16 %v1169
  %v1983 = vunpack.c.h.b16 %v1169
  %v1984 = vunpack.c.l.b16 %v1170
  %v1985 = vunpack.c.h.b16 %v1170
  %v1986 = vunpack.c.l.b16 %v1171
  %v1987 = vunpack.c.h.b16 %v1171
  %v1988 = vunpack.c.l.b16 %v1172
  %v1989 = vunpack.c.h.b16 %v1172
  %v1990 = vunpack.c.l.b16 %v1173
  %v1991 = vunpack.c.h.b16 %v1173
  %v1992 = vunpack.c.l.b16 %v1174
  %v1993 = vunpack.c.h.b16 %v1174
  %v1994 = vunpack.c.l.b16 %v1175
  %v1995 = vunpack.c.h.b16 %v1175
  %v1996 = vunpack.c.l.b16 %v1176
  %v1997 = vunpack.c.h.b16 %v1176
  %v1998 = vunpack.c.l.b16 %v1177
  %v1999 = vunpack.c.h.b16 %v1177
  %v2000 = vunpack.c.l.b16 %v1178
  %v2001 = vunpack.c.h.b16 %v1178
  %v2002 = vunpack.c.l.b16 %v1179
  %v2003 = vunpack.c.h.b16 %v1179
  %v2004 = vunpack.c.l.b16 %v1180
  %v2005 = vunpack.c.h.b16 %v1180
  %v2006 = vunpack.c.l.b16 %v1181
  %v2007 = vunpack.c.h.b16 %v1181
  %v2008 = vunpack.c.l.b16 %v1182
  %v2009 = vunpack.c.h.b16 %v1182
  %v2010 = vunpack.c.l.b16 %v1183
  %v2011 = vunpack.c.h.b16 %v1183
  %v2012 = vunpack.c.l.b16 %v1184
  %v2013 = vunpack.c.h.b16 %v1184
  %v2014 = vunpack.c.l.b16 %v1185
  %v2015 = vunpack.c.h.b16 %v1185
  %v2016 = vunpack.c.l.b16 %v1186
  %v2017 = vunpack.c.h.b16 %v1186
  %v2018 = vunpack.c.l.b16 %v1187
  %v2019 = vunpack.c.h.b16 %v1187
  %v2020 = vunpack.c.l.b16 %v1188
  %v2021 = vunpack.c.h.b16 %v1188
  %v2022 = vunpack.c.l.b16 %v1189
  %v2023 = vunpack.c.h.b16 %v1189
  %v2024 = vunpack.c.l.b16 %v1190
  %v2025 = vunpack.c.h.b16 %v1190
  %v2026 = vunpack.c.l.b16 %v1191
  %v2027 = vunpack.c.h.b16 %v1191
  %v2028 = vunpack.c.l.b16 %v1192
  %v2029 = vunpack.c.h.b16 %v1192
  %v2030 = vunpack.c.l.b16 %v1193
  %v2031 = vunpack.c.h.b16 %v1193
  %v2032 = vunpack.c.l.b16 %v1194
  %v2033 = vunpack.c.h.b16 %v1194
  %v2034 = vunpack.c.l.b16 %v1195
  %v2035 = vunpack.c.h.b16 %v1195
  %v2036 = vunpack.c.l.b16 %v1196
  %v2037 = vunpack.c.h.b16 %v1196
  %v2038 = vunpack.c.l.b16 %v1197
  %v2039 = vunpack.c.h.b16 %v1197
  %v2040 = vunpack.c.l.b16 %v1198
  %v2041 = vunpack.c.h.b16 %v1198
  %v2042 = vunpack.c.l.b16 %v1199
  %v2043 = vunpack.c.h.b16 %v1199
  %v2044 = vunpack.c.l.b16 %v1200
  %v2045 = vunpack.c.h.b16 %v1200
  %v2046 = vunpack.c.l.b16 %v1201
  %v2047 = vunpack.c.h.b16 %v1201
  %v2048 = vunpack.c.l.b16 %v1202
  %v2049 = vunpack.c.h.b16 %v1202
  %v2050 = vunpack.c.l.b16 %v1203
  %v2051 = vunpack.c.h.b16 %v1203
  %v2052 = vunpack.c.l.b16 %v1204
  %v2053 = vunpack.c.h.b16 %v1204
  %v2054 = vunpack.c.l.b16 %v1205
  %v2055 = vunpack.c.h.b16 %v1205
  %v2056 = vunpack.c.l.b16 %v1206
  %v2057 = vunpack.c.h.b16 %v1206
  %v2058 = vunpack.c.l.b16 %v1207
  %v2059 = vunpack.c.h.b16 %v1207
  %v2060 = vunpack.c.l.b16 %v1208
  %v2061 = vunpack.c.h.b16 %v1208
  %v2062 = vunpack.c.l.b16 %v1209
  %v2063 = vunpack.c.h.b16 %v1209
  %v2064 = vunpack.c.l.b16 %v1210
  %v2065 = vunpack.c.h.b16 %v1210
  %v2066 = vunpack.c.l.b16 %v1211
  %v2067 = vunpack.c.h.b16 %v1211
  %v2068 = vunpack.c.l.b16 %v1212
  %v2069 = vunpack.c.h.b16 %v1212
  %v2070 = vunpack.c.l.b16 %v1213
  %v2071 = vunpack.c.h.b16 %v1213
  %v2072 = vunpack.c.l.b16 %v1214
  %v2073 = vunpack.c.h.b16 %v1214
  %v2074 = vunpack.c.l.b16 %v1215
  %v2075 = vunpack.c.h.b16 %v1215
  %v2076 = vunpack.c.l.b16 %v1216
  %v2077 = vunpack.c.h.b16 %v1216
  %v2078 = vunpack.c.l.b16 %v1217
  %v2079 = vunpack.c.h.b16 %v1217
  %v2080 = vunpack.c.l.b16 %v1218
  %v2081 = vunpack.c.h.b16 %v1218
  %v2082 = vunpack.c.l.b16 %v1219
  %v2083 = vunpack.c.h.b16 %v1219
  %v2084 = vunpack.c.l.b16 %v1220
  %v2085 = vunpack.c.h.b16 %v1220
  %v2086 = vunpack.c.l.b16 %v1221
  %v2087 = vunpack.c.h.b16 %v1221
  %v2088 = vunpack.c.l.b16 %v1222
  %v2089 = vunpack.c.h.b16 %v1222
  %v2090 = vunpack.c.l.b16 %v1223
  %v2091 = vunpack.c.h.b16 %v1223
  %v2092 = vunpack.c.l.b16 %v1224
  %v2093 = vunpack.c.h.b16 %v1224
  %v2094 = vunpack.c.l.b16 %v1225
  %v2095 = vunpack.c.h.b16 %v1225
  %v2096 = vunpack.c.l.b16 %v1226
  %v2097 = vunpack.c.h.b16 %v1226
  %v2098 = vunpack.c.l.b16 %v1227
  %v2099 = vunpack.c.h.b16 %v1227
  %v2100 = vunpack.c.l.b16 %v1228
  %v2101 = vunpack.c.h.b16 %v1228
  %v2102 = vunpack.c.l.b16 %v1229
  %v2103 = vunpack.c.h.b16 %v1229
  %v2104 = vunpack.c.l.b16 %v1230
  %v2105 = vunpack.c.h.b16 %v1230
  %v2106 = vunpack.c.l.b16 %v1231
  %v2107 = vunpack.c.h.b16 %v1231
  %v2108 = vunpack.c.l.b16 %v1232
  %v2109 = vunpack.c.h.b16 %v1232
  %v2110 = vunpack.c.l.b16 %v1233
  %v2111 = vunpack.c.h.b16 %v1233
  %v2112 = vunpack.c.l.b16 %v1234
  %v2113 = vunpack.c.h.b16 %v1234
  %v2114 = vunpack.c.l.b16 %v1235
  %v2115 = vunpack.c.h.b16 %v1235
  %v2116 = vunpack.c.l.b16 %v1236
  %v2117 = vunpack.c.h.b16 %v1236
  %v2118 = vunpack.c.l.b16 %v1237
  %v2119 = vunpack.c.h.b16 %v1237
  %v2120 = vunpack.c.l.b16 %v1238
  %v2121 = vunpack.c.h.b16 %v1238
  %v2122 = vunpack.c.l.b16 %v1239
  %v2123 = vunpack.c.h.b16 %v1239
  %v2124 = vunpack.c.l.b16 %v1240
  %v2125 = vunpack.c.h.b16 %v1240
  %v2126 = vunpack.c.l.b16 %v1241
  %v2127 = vunpack.c.h.b16 %v1241
  %v2128 = vunpack.c.l.b16 %v1242
  %v2129 = vunpack.c.h.b16 %v1242
  %v2130 = vunpack.c.l.b16 %v1243
  %v2131 = vunpack.c.h.b16 %v1243
  %v2132 = vunpack.c.l.b16 %v1244
  %v2133 = vunpack.c.h.b16 %v1244
  %v2134 = vunpack.c.l.b16 %v1245
  %v2135 = vunpack.c.h.b16 %v1245
  %v2136 = vunpack.c.l.b16 %v1246
  %v2137 = vunpack.c.h.b16 %v1246
  %v2138 = vunpack.c.l.b16 %v1247
  %v2139 = vunpack.c.h.b16 %v1247
  %v2140 = vunpack.c.l.b16 %v1248
  %v2141 = vunpack.c.h.b16 %v1248
  %v2142 = vunpack.c.l.b16 %v1249
  %v2143 = vunpack.c.h.b16 %v1249
  %v2144 = vunpack.c.l.b16 %v1250
  %v2145 = vunpack.c.h.b16 %v1250
  %v2146 = vunpack.c.l.b16 %v1251
  %v2147 = vunpack.c.h.b16 %v1251
  %v2148 = vunpack.c.l.b16 %v1252
  %v2149 = vunpack.c.h.b16 %v1252
  %v2150 = vunpack.c.l.b16 %v1253
  %v2151 = vunpack.c.h.b16 %v1253
  %v2152 = vunpack.c.l.b16 %v1254
  %v2153 = vunpack.c.h.b16 %v1254
  %v2154 = vunpack.c.l.b16 %v1255
  %v2155 = vunpack.c.h.b16 %v1255
  %v2156 = vunpack.c.l.b16 %v1256
  %v2157 = vunpack.c.h.b16 %v1256
  %v2158 = vunpack.c.l.b16 %v1257
  %v2159 = vunpack.c.h.b16 %v1257
  %v2160 = vunpack.c.l.b16 %v1258
  %v2161 = vunpack.c.h.b16 %v1258
  %v2162 = vunpack.c.l.b16 %v1259
  %v2163 = vunpack.c.h.b16 %v1259
  %v2164 = vunpack.c.l.b16 %v1260
  %v2165 = vunpack.c.h.b16 %v1260
  %v2166 = vunpack.c.l.b16 %v1261
  %v2167 = vunpack.c.h.b16 %v1261
  %v2168 = vunpack.c.l.b16 %v1262
  %v2169 = vunpack.c.h.b16 %v1262
  %v2170 = vunpack.c.l.b16 %v1263
  %v2171 = vunpack.c.h.b16 %v1263
  %v2172 = vunpack.c.l.b16 %v1264
  %v2173 = vunpack.c.h.b16 %v1264
  %v2174 = vunpack.c.l.b16 %v1265
  %v2175 = vunpack.c.h.b16 %v1265
  %v2176 = vunpack.c.l.b16 %v1266
  %v2177 = vunpack.c.h.b16 %v1266
  %v2178 = vunpack.c.l.b16 %v1267
  %v2179 = vunpack.c.h.b16 %v1267
  %v2180 = vunpack.c.l.b16 %v1268
  %v2181 = vunpack.c.h.b16 %v1268
  %v2182 = vunpack.c.l.b16 %v1269
  %v2183 = vunpack.c.h.b16 %v1269
  %v2184 = vunpack.c.l.b16 %v1270
  %v2185 = vunpack.c.h.b16 %v1270
  %v2186 = vunpack.c.l.b16 %v1271
  %v2187 = vunpack.c.h.b16 %v1271
  %v2188 = vunpack.c.l.b16 %v1272
  %v2189 = vunpack.c.h.b16 %v1272
  %v2190 = vunpack.c.l.b16 %v1273
  %v2191 = vunpack.c.h.b16 %v1273
  %v2192 = vunpack.c.l.b16 %v1274
  %v2193 = vunpack.c.h.b16 %v1274
  %v2194 = vunpack.c.l.b16 %v1275
  %v2195 = vunpack.c.h.b16 %v1275
  %v2196 = vunpack.c.l.b16 %v1276
  %v2197 = vunpack.c.h.b16 %v1276
  %v2198 = vunpack.c.l.b16 %v1277
  %v2199 = vunpack.c.h.b16 %v1277
  %v2200 = vunpack.c.l.b16 %v1278
  %v2201 = vunpack.c.h.b16 %v1278
  %v2202 = vunpack.c.l.b16 %v1279
  %v2203 = vunpack.c.h.b16 %v1279
  %v2204 = vunpack.c.l.b16 %v1280
  %v2205 = vunpack.c.h.b16 %v1280
  %v2206 = vunpack.c.l.b16 %v1281
  %v2207 = vunpack.c.h.b16 %v1281
  %v2208 = vunpack.c.l.b16 %v1282
  %v2209 = vunpack.c.h.b16 %v1282
  %v2210 = vunpack.c.l.b16 %v1283
  %v2211 = vunpack.c.h.b16 %v1283
  %v2212 = vunpack.c.l.b16 %v1284
  %v2213 = vunpack.c.h.b16 %v1284
  %v2214 = vunpack.c.l.b16 %v1285
  %v2215 = vunpack.c.h.b16 %v1285
  %v2216 = vunpack.c.l.b16 %v1286
  %v2217 = vunpack.c.h.b16 %v1286
  %v2218 = vunpack.c.l.b16 %v1287
  %v2219 = vunpack.c.h.b16 %v1287
  %v2220 = vunpack.c.l.b16 %v1288
  %v2221 = vunpack.c.h.b16 %v1288
  %v2222 = vpack.c.b16 %v1974, %v1966
  %v2223 = vpack.c.b16 %v1975, %v1967
  %v2224 = vpack.c.b16 %v1976, %v1968
  %v2225 = vpack.c.b16 %v1977, %v1969
  %v2226 = vpack.c.b16 %v1978, %v1970
  %v2227 = vpack.c.b16 %v1979, %v1971
  %v2228 = vpack.c.b16 %v1980, %v1972
  %v2229 = vpack.c.b16 %v1981, %v1973
  %v2230 = vpack.c.b16 %v1990, %v1982
  %v2231 = vpack.c.b16 %v1991, %v1983
  %v2232 = vpack.c.b16 %v1992, %v1984
  %v2233 = vpack.c.b16 %v1993, %v1985
  %v2234 = vpack.c.b16 %v1994, %v1986
  %v2235 = vpack.c.b16 %v1995, %v1987
  %v2236 = vpack.c.b16 %v1996, %v1988
  %v2237 = vpack.c.b16 %v1997, %v1989
  %v2238 = vpack.c.b16 %v2006, %v1998
  %v2239 = vpack.c.b16 %v2007, %v1999
  %v2240 = vpack.c.b16 %v2008, %v2000
  %v2241 = vpack.c.b16 %v2009, %v2001
  %v2242 = vpack.c.b16 %v2010, %v2002
  %v2243 = vpack.c.b16 %v2011, %v2003
  %v2244 = vpack.c.b16 %v2012, %v2004
  %v2245 = vpack.c.b16 %v2013, %v2005
  %v2246 = vpack.c.b16 %v2022, %v2014
  %v2247 = vpack.c.b16 %v2023, %v2015
  %v2248 = vpack.c.b16 %v2024, %v2016
  %v2249 = vpack.c.b16 %v2025, %v2017
  %v2250 = vpack.c.b16 %v2026, %v2018
  %v2251 = vpack.c.b16 %v2027, %v2019
  %v2252 = vpack.c.b16 %v2028, %v2020
  %v2253 = vpack.c.b16 %v2029, %v2021
  %v2254 = vpack.c.b16 %v2038, %v2030
  %v2255 = vpack.c.b16 %v2039, %v2031
  %v2256 = vpack.c.b16 %v2040, %v2032
  %v2257 = vpack.c.b16 %v2041, %v2033
  %v2258 = vpack.c.b16 %v2042, %v2034
  %v2259 = vpack.c.b16 %v2043, %v2035
  %v2260 = vpack.c.b16 %v2044, %v2036
  %v2261 = vpack.c.b16 %v2045, %v2037
  %v2262 = vpack.c.b16 %v2054, %v2046
  %v2263 = vpack.c.b16 %v2055, %v2047
  %v2264 = vpack.c.b16 %v2056, %v2048
  %v2265 = vpack.c.b16 %v2057, %v2049
  %v2266 = vpack.c.b16 %v2058, %v2050
  %v2267 = vpack.c.b16 %v2059, %v2051
  %v2268 = vpack.c.b16 %v2060, %v2052
  %v2269 = vpack.c.b16 %v2061, %v2053
  %v2270 = vpack.c.b16 %v2070, %v2062
  %v2271 = vpack.c.b16 %v2071, %v2063
  %v2272 = vpack.c.b16 %v2072, %v2064
  %v2273 = vpack.c.b16 %v2073, %v2065
  %v2274 = vpack.c.b16 %v2074, %v2066
  %v2275 = vpack.c.b16 %v2075, %v2067
  %v2276 = vpack.c.b16 %v2076, %v2068
  %v2277 = vpack.c.b16 %v2077, %v2069
  %v2278 = vpack.c.b16 %v2086, %v2078
  %v2279 = vpack.c.b16 %v2087, %v2079
  %v2280 = vpack.c.b16 %v2088, %v2080
  %v2281 = vpack.c.b16 %v2089, %v2081
  %v2282 = vpack.c.b16 %v2090, %v2082
  %v2283 = vpack.c.b16 %v2091, %v2083
  %v2284 = vpack.c.b16 %v2092, %v2084
  %v2285 = vpack.c.b16 %v2093, %v2085
  %v2286 = vpack.c.b16 %v2102, %v2094
  %v2287 = vpack.c.b16 %v2103, %v2095
  %v2288 = vpack.c.b16 %v2104, %v2096
  %v2289 = vpack.c.b16 %v2105, %v2097
  %v2290 = vpack.c.b16 %v2106, %v2098
  %v2291 = vpack.c.b16 %v2107, %v2099
  %v2292 = vpack.c.b16 %v2108, %v2100
  %v2293 = vpack.c.b16 %v2109, %v2101
  %v2294 = vpack.c.b16 %v2118, %v2110
  %v2295 = vpack.c.b16 %v2119, %v2111
  %v2296 = vpack.c.b16 %v2120, %v2112
  %v2297 = vpack.c.b16 %v2121, %v2113
  %v2298 = vpack.c.b16 %v2122, %v2114
  %v2299 = vpack.c.b16 %v2123, %v2115
  %v2300 = vpack.c.b16 %v2124, %v2116
  %v2301 = vpack.c.b16 %v2125, %v2117
  %v2302 = vpack.c.b16 %v2134, %v2126
  %v2303 = vpack.c.b16 %v2135, %v2127
  %v2304 = vpack.c.b16 %v2136, %v2128
  %v2305 = vpack.c.b16 %v2137, %v2129
  %v2306 = vpack.c.b16 %v2138, %v2130
  %v2307 = vpack.c.b16 %v2139, %v2131
  %v2308 = vpack.c.b16 %v2140, %v2132
  %v2309 = vpack.c.b16 %v2141, %v2133
  %v2310 = vpack.c.b16 %v2150, %v2142
  %v2311 = vpack.c.b16 %v2151, %v2143
  %v2312 = vpack.c.b16 %v2152, %v2144
  %v2313 = vpack.c.b16 %v2153, %v2145
  %v2314 = vpack.c.b16 %v2154, %v2146
  %v2315 = vpack.c.b16 %v2155, %v2147
  %v2316 = vpack.c.b16 %v2156, %v2148
  %v2317 = vpack.c.b16 %v2157, %v2149
  %v2318 = vpack.c.b16 %v2166, %v2158
  %v2319 = vpack.c.b16 %v2167, %v2159
  %v2320 = vpack.c.b16 %v2168, %v2160
  %v2321 = vpack.c.b16 %v2169, %v2161
  %v2322 = vpack.c.b16 %v2170, %v2162
  %v2323 = vpack.c.b16 %v2171, %v2163
  %v2324 = vpack.c.b16 %v2172, %v2164
  %v2325 = vpack.c.b16 %v2173, %v2165
  %v2326 = vpack.c.b16 %v2182, %v2174
  %v2327 = vpack.c.b16 %v2183, %v2175
  %v2328 = vpack.c.b16 %v2184, %v2176
  %v2329 = vpack.c.b16 %v2185, %v2177
  %v2330 = vpack.c.b16 %v2186, %v2178
  %v2331 = vpack.c.b16 %v2187, %v2179
  %v2332 = vpack.c.b16 %v2188, %v2180
  %v2333 = vpack.c.b16 %v2189, %v2181
  %v2334 = vpack.c.b16 %v2198, %v2190
  %v2335 = vpack.c.b16 %v2199, %v2191
  %v2336 = vpack.c.b16 %v2200, %v2192
  %v2337 = vpack.c.b16 %v2201, %v2193
  %v2338 = vpack.c.b16 %v2202, %v2194
  %v2339 = vpack.c.b16 %v2203, %v2195
  %v2340 = vpack.c.b16 %v2204, %v2196
  %v2341 = vpack.c.b16 %v2205, %v2197
  %v2342 = vpack.c.b16 %v2214, %v2206
  %v2343 = vpack.c.b16 %v2215, %v2207
  %v2344 = vpack.c.b16 %v2216, %v2208
  %v2345 = vpack.c.b16 %v2217, %v2209
  %v2346 = vpack.c.b16 %v2218, %v2210
  %v2347 = vpack.c.b16 %v2219, %v2211
  %v2348 = vpack.c.b16 %v2220, %v2212
  %v2349 = vpack.c.b16 %v2221, %v2213
  %2478 = vmatprep.subr.bf16.mxu0 %v2223
  %2479 = vmatpush1.bf16.msra.mxu0 %v2222
  %2480 = vmatprep.subr.bf16.mxu0 %v2231
  %2481 = vmatpush1.bf16.msra.mxu0 %v2230
  %2482 = vmatprep.subr.bf16.mxu0 %v2239
  %2483 = vmatpush1.bf16.msra.mxu0 %v2238
  %2484 = vmatprep.subr.bf16.mxu0 %v2247
  %2485 = vmatpush1.bf16.msra.mxu0 %v2246
  %2486 = vmatprep.subr.bf16.mxu0 %v2255
  %2487 = vmatpush1.bf16.msra.mxu0 %v2254
  %2488 = vmatprep.subr.bf16.mxu0 %v2263
  %2489 = vmatpush1.bf16.msra.mxu0 %v2262
  %2490 = vmatprep.subr.bf16.mxu0 %v2271
  %2491 = vmatpush1.bf16.msra.mxu0 %v2270
  %2492 = vmatprep.subr.bf16.mxu0 %v2279
  %2493 = vmatpush1.bf16.msra.mxu0 %v2278
  %2494 = vmatprep.subr.bf16.mxu0 %v2287
  %2495 = vmatpush1.bf16.msra.mxu0 %v2286
  %2496 = vmatprep.subr.bf16.mxu0 %v2295
  %2497 = vmatpush1.bf16.msra.mxu0 %v2294
  %2498 = vmatprep.subr.bf16.mxu0 %v2303
  %2499 = vmatpush1.bf16.msra.mxu0 %v2302
  %2500 = vmatprep.subr.bf16.mxu0 %v2311
  %2501 = vmatpush1.bf16.msra.mxu0 %v2310
  %2502 = vmatprep.subr.bf16.mxu0 %v2319
  %2503 = vmatpush1.bf16.msra.mxu0 %v2318
  %2504 = vmatprep.subr.bf16.mxu0 %v2327
  %2505 = vmatpush1.bf16.msra.mxu0 %v2326
  %2506 = vmatprep.subr.bf16.mxu0 %v2335
  %2507 = vmatpush1.bf16.msra.mxu0 %v2334
  %2508 = vmatprep.subr.bf16.mxu0 %v2343
  %2509 = vmatpush1.bf16.msra.mxu0 %v2342
  %2510 = vmatprep.mubr.bf16.mxu0 %v1160
  %2511 = vmatmul.mubr.bf16.gmra.mrb[0].mxu0 %v1159
  %v2512 = vpop.f32.mrb[0].mxu0
  %v2513 = vadd.f32 %v1709, %v2512
  %v2514 = vpop.f32.mrb[0].mxu0
  %v2515 = vadd.f32 %v1711, %v2514
  %v2516 = vpop.f32.mrb[0].mxu0
  %v2517 = vpop.f32.mrb[0].mxu0
  %2518 = vdwg.mxu0
  %2519 = vmatprep.subr.bf16.mxu0 %v2225
  %2520 = vmatpush1.bf16.msra.mxu0 %v2224
  %2521 = vmatprep.subr.bf16.mxu0 %v2233
  %2522 = vmatpush1.bf16.msra.mxu0 %v2232
  %2523 = vmatprep.subr.bf16.mxu0 %v2241
  %2524 = vmatpush1.bf16.msra.mxu0 %v2240
  %2525 = vmatprep.subr.bf16.mxu0 %v2249
  %2526 = vmatpush1.bf16.msra.mxu0 %v2248
  %2527 = vmatprep.subr.bf16.mxu0 %v2257
  %2528 = vmatpush1.bf16.msra.mxu0 %v2256
  %2529 = vmatprep.subr.bf16.mxu0 %v2265
  %2530 = vmatpush1.bf16.msra.mxu0 %v2264
  %2531 = vmatprep.subr.bf16.mxu0 %v2273
  %2532 = vmatpush1.bf16.msra.mxu0 %v2272
  %2533 = vmatprep.subr.bf16.mxu0 %v2281
  %2534 = vmatpush1.bf16.msra.mxu0 %v2280
  %2535 = vmatprep.subr.bf16.mxu0 %v2289
  %2536 = vmatpush1.bf16.msra.mxu0 %v2288
  %2537 = vmatprep.subr.bf16.mxu0 %v2297
  %2538 = vmatpush1.bf16.msra.mxu0 %v2296
  %2539 = vmatprep.subr.bf16.mxu0 %v2305
  %2540 = vmatpush1.bf16.msra.mxu0 %v2304
  %2541 = vmatprep.subr.bf16.mxu0 %v2313
  %2542 = vmatpush1.bf16.msra.mxu0 %v2312
  %2543 = vmatprep.subr.bf16.mxu0 %v2321
  %2544 = vmatpush1.bf16.msra.mxu0 %v2320
  %2545 = vmatprep.subr.bf16.mxu0 %v2329
  %2546 = vmatpush1.bf16.msra.mxu0 %v2328
  %2547 = vmatprep.subr.bf16.mxu0 %v2337
  %2548 = vmatpush1.bf16.msra.mxu0 %v2336
  %2549 = vmatprep.subr.bf16.mxu0 %v2345
  %2550 = vmatpush1.bf16.msra.mxu0 %v2344
  %2551 = vmatprep.mubr.bf16.mxu0 %v1160
  %2552 = vmatmul.mubr.bf16.gmra.mrb[0].mxu0 %v1159
  %v2553 = vpop.f32.mrb[0].mxu0
  %v2554 = vadd.f32 %v1750, %v2553
  %v2555 = vpop.f32.mrb[0].mxu0
  %v2556 = vadd.f32 %v1752, %v2555
  %v2557 = vpop.f32.mrb[0].mxu0
  %v2558 = vpop.f32.mrb[0].mxu0
  %2559 = vdwg.mxu0
  %2560 = vmatprep.subr.bf16.mxu0 %v2227
  %2561 = vmatpush1.bf16.msra.mxu0 %v2226
  %2562 = vmatprep.subr.bf16.mxu0 %v2235
  %2563 = vmatpush1.bf16.msra.mxu0 %v2234
  %2564 = vmatprep.subr.bf16.mxu0 %v2243
  %2565 = vmatpush1.bf16.msra.mxu0 %v2242
  %2566 = vmatprep.subr.bf16.mxu0 %v2251
  %2567 = vmatpush1.bf16.msra.mxu0 %v2250
  %2568 = vmatprep.subr.bf16.mxu0 %v2259
  %2569 = vmatpush1.bf16.msra.mxu0 %v2258
  %2570 = vmatprep.subr.bf16.mxu0 %v2267
  %2571 = vmatpush1.bf16.msra.mxu0 %v2266
  %2572 = vmatprep.subr.bf16.mxu0 %v2275
  %2573 = vmatpush1.bf16.msra.mxu0 %v2274
  %2574 = vmatprep.subr.bf16.mxu0 %v2283
  %2575 = vmatpush1.bf16.msra.mxu0 %v2282
  %2576 = vmatprep.subr.bf16.mxu0 %v2291
  %2577 = vmatpush1.bf16.msra.mxu0 %v2290
  %2578 = vmatprep.subr.bf16.mxu0 %v2299
  %2579 = vmatpush1.bf16.msra.mxu0 %v2298
  %2580 = vmatprep.subr.bf16.mxu0 %v2307
  %2581 = vmatpush1.bf16.msra.mxu0 %v2306
  %2582 = vmatprep.subr.bf16.mxu0 %v2315
  %2583 = vmatpush1.bf16.msra.mxu0 %v2314
  %2584 = vmatprep.subr.bf16.mxu0 %v2323
  %2585 = vmatpush1.bf16.msra.mxu0 %v2322
  %2586 = vmatprep.subr.bf16.mxu0 %v2331
  %2587 = vmatpush1.bf16.msra.mxu0 %v2330
  %2588 = vmatprep.subr.bf16.mxu0 %v2339
  %2589 = vmatpush1.bf16.msra.mxu0 %v2338
  %2590 = vmatprep.subr.bf16.mxu0 %v2347
  %2591 = vmatpush1.bf16.msra.mxu0 %v2346
  %2592 = vmatprep.mubr.bf16.mxu0 %v1160
  %2593 = vmatmul.mubr.bf16.gmra.mrb[0].mxu0 %v1159
  %v2594 = vpop.f32.mrb[0].mxu0
  %v2595 = vadd.f32 %v1791, %v2594
  %v2596 = vpop.f32.mrb[0].mxu0
  %v2597 = vadd.f32 %v1793, %v2596
  %v2598 = vpop.f32.mrb[0].mxu0
  %v2599 = vpop.f32.mrb[0].mxu0
  %2600 = vdwg.mxu0
  %2601 = vmatprep.subr.bf16.mxu0 %v2229
  %2602 = vmatpush1.bf16.msra.mxu0 %v2228
  %2603 = vmatprep.subr.bf16.mxu0 %v2237
  %2604 = vmatpush1.bf16.msra.mxu0 %v2236
  %2605 = vmatprep.subr.bf16.mxu0 %v2245
  %2606 = vmatpush1.bf16.msra.mxu0 %v2244
  %2607 = vmatprep.subr.bf16.mxu0 %v2253
  %2608 = vmatpush1.bf16.msra.mxu0 %v2252
  %2609 = vmatprep.subr.bf16.mxu0 %v2261
  %2610 = vmatpush1.bf16.msra.mxu0 %v2260
  %2611 = vmatprep.subr.bf16.mxu0 %v2269
  %2612 = vmatpush1.bf16.msra.mxu0 %v2268
  %2613 = vmatprep.subr.bf16.mxu0 %v2277
  %2614 = vmatpush1.bf16.msra.mxu0 %v2276
  %2615 = vmatprep.subr.bf16.mxu0 %v2285
  %2616 = vmatpush1.bf16.msra.mxu0 %v2284
  %2617 = vmatprep.subr.bf16.mxu0 %v2293
  %2618 = vmatpush1.bf16.msra.mxu0 %v2292
  %2619 = vmatprep.subr.bf16.mxu0 %v2301
  %2620 = vmatpush1.bf16.msra.mxu0 %v2300
  %2621 = vmatprep.subr.bf16.mxu0 %v2309
  %2622 = vmatpush1.bf16.msra.mxu0 %v2308
  %2623 = vmatprep.subr.bf16.mxu0 %v2317
  %2624 = vmatpush1.bf16.msra.mxu0 %v2316
  %2625 = vmatprep.subr.bf16.mxu0 %v2325
  %2626 = vmatpush1.bf16.msra.mxu0 %v2324
  %2627 = vmatprep.subr.bf16.mxu0 %v2333
  %2628 = vmatpush1.bf16.msra.mxu0 %v2332
  %2629 = vmatprep.subr.bf16.mxu0 %v2341
  %2630 = vmatpush1.bf16.msra.mxu0 %v2340
  %2631 = vmatprep.subr.bf16.mxu0 %v2349
  %2632 = vmatpush1.bf16.msra.mxu0 %v2348
  %2633 = vmatprep.mubr.bf16.mxu0 %v1160
  %2634 = vmatmul.mubr.bf16.gmra.mrb[0].mxu0 %v1159
  %v2635 = vpop.f32.mrb[0].mxu0
  %v2636 = vadd.f32 %v1832, %v2635
  %v2637 = vpop.f32.mrb[0].mxu0
  %v2638 = vadd.f32 %v1834, %v2637
  %v2639 = vpop.f32.mrb[0].mxu0
  %v2640 = vpop.f32.mrb[0].mxu0
  %2641 = vdwg.mxu0
  %v2642 = vld [vmem:[%s6] sm:$0xff]
  %v2644 = vlaneseq
  %v2645 = vshrl.u32 %v2644, 7
  %v2646 = vsub.s32 0, %v2645
  %v2647 = vrot.slane %v2642, %v2646
  %v2648 = vlaneseq
  %v2649 = vshrl.u32 %v2648, 7
  %v2650 = vsub.s32 1, %v2649
  %v2651 = vrot.slane %v2642, %v2650
  %v2652 = vlaneseq
  %v2653 = vshrl.u32 %v2652, 7
  %v2654 = vsub.s32 2, %v2653
  %v2655 = vrot.slane %v2642, %v2654
  %v2656 = vlaneseq
  %v2657 = vshrl.u32 %v2656, 7
  %v2658 = vsub.s32 3, %v2657
  %v2659 = vrot.slane %v2642, %v2658
  %v2660 = vlaneseq
  %v2661 = vshrl.u32 %v2660, 7
  %v2662 = vsub.s32 4, %v2661
  %v2663 = vrot.slane %v2642, %v2662
  %v2664 = vlaneseq
  %v2665 = vshrl.u32 %v2664, 7
  %v2666 = vsub.s32 5, %v2665
  %v2667 = vrot.slane %v2642, %v2666
  %v2668 = vlaneseq
  %v2669 = vshrl.u32 %v2668, 7
  %v2670 = vsub.s32 6, %v2669
  %v2671 = vrot.slane %v2642, %v2670
  %v2672 = vlaneseq
  %v2673 = vshrl.u32 %v2672, 7
  %v2674 = vsub.s32 7, %v2673
  %v2675 = vrot.slane %v2642, %v2674
  %v2684 = vadd.f32 %v2513, %v2647
  %v2685 = vadd.f32 %v2515, %v2651
  %v2686 = vadd.f32 %v2554, %v2655
  %v2687 = vadd.f32 %v2556, %v2659
  %v2688 = vadd.f32 %v2595, %v2663
  %v2689 = vadd.f32 %v2597, %v2667
  %v2690 = vadd.f32 %v2636, %v2671
  %v2691 = vadd.f32 %v2638, %v2675
  %v2692 = vmax.f32 %v2684, 0.0
  %v2693 = vmax.f32 %v2685, 0.0
  %v2694 = vmax.f32 %v2686, 0.0
  %v2695 = vmax.f32 %v2687, 0.0
  %v2696 = vmax.f32 %v2688, 0.0
  %v2697 = vmax.f32 %v2689, 0.0
  %v2698 = vmax.f32 %v2690, 0.0
  %v2699 = vmax.f32 %v2691, 0.0
  %v2700 = vpack.c.bf16 %v2692, %v2692
  %v2701 = vpack.c.bf16 %v2693, %v2693
  %v2702 = vpack.c.bf16 %v2694, %v2694
  %v2703 = vpack.c.bf16 %v2695, %v2695
  %v2704 = vpack.c.bf16 %v2696, %v2696
  %v2705 = vpack.c.bf16 %v2697, %v2697
  %v2706 = vpack.c.bf16 %v2698, %v2698
  %v2707 = vpack.c.bf16 %v2699, %v2699
  %v2708 = vld [vmem:[%s7] sm:$0xff]
  %v2709 = vld [vmem:[%s7 + $0x8] sm:$0xff]
  %v2710 = vld [vmem:[%s7 + $0x10] sm:$0xff]
  %v2711 = vld [vmem:[%s7 + $0x18] sm:$0xff]
  %v2712 = vld [vmem:[%s7 + $0x20] sm:$0xff]
  %v2713 = vld [vmem:[%s7 + $0x28] sm:$0xff]
  %v2714 = vld [vmem:[%s7 + $0x30] sm:$0xff]
  %v2715 = vld [vmem:[%s7 + $0x38] sm:$0xff]
  %v2716 = vld [vmem:[%s7 + $0x40] sm:$0xff]
  %v2717 = vld [vmem:[%s7 + $0x48] sm:$0xff]
  %v2718 = vld [vmem:[%s7 + $0x50] sm:$0xff]
  %v2719 = vld [vmem:[%s7 + $0x58] sm:$0xff]
  %v2720 = vld [vmem:[%s7 + $0x60] sm:$0xff]
  %v2721 = vld [vmem:[%s7 + $0x68] sm:$0xff]
  %v2722 = vld [vmem:[%s7 + $0x70] sm:$0xff]
  %v2723 = vld [vmem:[%s7 + $0x78] sm:$0xff]
  %v2724 = vld [vmem:[%s7 + $0x80] sm:$0xff]
  %v2725 = vld [vmem:[%s7 + $0x88] sm:$0xff]
  %v2726 = vld [vmem:[%s7 + $0x90] sm:$0xff]
  %v2727 = vld [vmem:[%s7 + $0x98] sm:$0xff]
  %v2728 = vld [vmem:[%s7 + $0xa0] sm:$0xff]
  %v2729 = vld [vmem:[%s7 + $0xa8] sm:$0xff]
  %v2730 = vld [vmem:[%s7 + $0xb0] sm:$0xff]
  %v2731 = vld [vmem:[%s7 + $0xb8] sm:$0xff]
  %v2732 = vld [vmem:[%s7 + $0xc0] sm:$0xff]
  %v2733 = vld [vmem:[%s7 + $0xc8] sm:$0xff]
  %v2734 = vld [vmem:[%s7 + $0xd0] sm:$0xff]
  %v2735 = vld [vmem:[%s7 + $0xd8] sm:$0xff]
  %v2736 = vld [vmem:[%s7 + $0xe0] sm:$0xff]
  %v2737 = vld [vmem:[%s7 + $0xe8] sm:$0xff]
  %v2738 = vld [vmem:[%s7 + $0xf0] sm:$0xff]
  %v2739 = vld [vmem:[%s7 + $0xf8] sm:$0xff]
  %v2740 = vld [vmem:[%s7 + $0x100] sm:$0xff]
  %v2741 = vld [vmem:[%s7 + $0x108] sm:$0xff]
  %v2742 = vld [vmem:[%s7 + $0x110] sm:$0xff]
  %v2743 = vld [vmem:[%s7 + $0x118] sm:$0xff]
  %v2744 = vld [vmem:[%s7 + $0x120] sm:$0xff]
  %v2745 = vld [vmem:[%s7 + $0x128] sm:$0xff]
  %v2746 = vld [vmem:[%s7 + $0x130] sm:$0xff]
  %v2747 = vld [vmem:[%s7 + $0x138] sm:$0xff]
  %v2748 = vld [vmem:[%s7 + $0x140] sm:$0xff]
  %v2749 = vld [vmem:[%s7 + $0x148] sm:$0xff]
  %v2750 = vld [vmem:[%s7 + $0x150] sm:$0xff]
  %v2751 = vld [vmem:[%s7 + $0x158] sm:$0xff]
  %v2752 = vld [vmem:[%s7 + $0x160] sm:$0xff]
  %v2753 = vld [vmem:[%s7 + $0x168] sm:$0xff]
  %v2754 = vld [vmem:[%s7 + $0x170] sm:$0xff]
  %v2755 = vld [vmem:[%s7 + $0x178] sm:$0xff]
  %v2756 = vld [vmem:[%s7 + $0x180] sm:$0xff]
  %v2757 = vld [vmem:[%s7 + $0x188] sm:$0xff]
  %v2758 = vld [vmem:[%s7 + $0x190] sm:$0xff]
  %v2759 = vld [vmem:[%s7 + $0x198] sm:$0xff]
  %v2760 = vld [vmem:[%s7 + $0x1a0] sm:$0xff]
  %v2761 = vld [vmem:[%s7 + $0x1a8] sm:$0xff]
  %v2762 = vld [vmem:[%s7 + $0x1b0] sm:$0xff]
  %v2763 = vld [vmem:[%s7 + $0x1b8] sm:$0xff]
  %v2764 = vld [vmem:[%s7 + $0x1c0] sm:$0xff]
  %v2765 = vld [vmem:[%s7 + $0x1c8] sm:$0xff]
  %v2766 = vld [vmem:[%s7 + $0x1d0] sm:$0xff]
  %v2767 = vld [vmem:[%s7 + $0x1d8] sm:$0xff]
  %v2768 = vld [vmem:[%s7 + $0x1e0] sm:$0xff]
  %v2769 = vld [vmem:[%s7 + $0x1e8] sm:$0xff]
  %v2770 = vld [vmem:[%s7 + $0x1f0] sm:$0xff]
  %v2771 = vld [vmem:[%s7 + $0x1f8] sm:$0xff]
  %v2772 = vld [vmem:[%s7 + $0x200] sm:$0xff]
  %v2773 = vld [vmem:[%s7 + $0x208] sm:$0xff]
  %v2774 = vld [vmem:[%s7 + $0x210] sm:$0xff]
  %v2775 = vld [vmem:[%s7 + $0x218] sm:$0xff]
  %v2776 = vld [vmem:[%s7 + $0x220] sm:$0xff]
  %v2777 = vld [vmem:[%s7 + $0x228] sm:$0xff]
  %v2778 = vld [vmem:[%s7 + $0x230] sm:$0xff]
  %v2779 = vld [vmem:[%s7 + $0x238] sm:$0xff]
  %v2780 = vld [vmem:[%s7 + $0x240] sm:$0xff]
  %v2781 = vld [vmem:[%s7 + $0x248] sm:$0xff]
  %v2782 = vld [vmem:[%s7 + $0x250] sm:$0xff]
  %v2783 = vld [vmem:[%s7 + $0x258] sm:$0xff]
  %v2784 = vld [vmem:[%s7 + $0x260] sm:$0xff]
  %v2785 = vld [vmem:[%s7 + $0x268] sm:$0xff]
  %v2786 = vld [vmem:[%s7 + $0x270] sm:$0xff]
  %v2787 = vld [vmem:[%s7 + $0x278] sm:$0xff]
  %v2788 = vld [vmem:[%s7 + $0x280] sm:$0xff]
  %v2789 = vld [vmem:[%s7 + $0x288] sm:$0xff]
  %v2790 = vld [vmem:[%s7 + $0x290] sm:$0xff]
  %v2791 = vld [vmem:[%s7 + $0x298] sm:$0xff]
  %v2792 = vld [vmem:[%s7 + $0x2a0] sm:$0xff]
  %v2793 = vld [vmem:[%s7 + $0x2a8] sm:$0xff]
  %v2794 = vld [vmem:[%s7 + $0x2b0] sm:$0xff]
  %v2795 = vld [vmem:[%s7 + $0x2b8] sm:$0xff]
  %v2796 = vld [vmem:[%s7 + $0x2c0] sm:$0xff]
  %v2797 = vld [vmem:[%s7 + $0x2c8] sm:$0xff]
  %v2798 = vld [vmem:[%s7 + $0x2d0] sm:$0xff]
  %v2799 = vld [vmem:[%s7 + $0x2d8] sm:$0xff]
  %v2800 = vld [vmem:[%s7 + $0x2e0] sm:$0xff]
  %v2801 = vld [vmem:[%s7 + $0x2e8] sm:$0xff]
  %v2802 = vld [vmem:[%s7 + $0x2f0] sm:$0xff]
  %v2803 = vld [vmem:[%s7 + $0x2f8] sm:$0xff]
  %v2804 = vld [vmem:[%s7 + $0x300] sm:$0xff]
  %v2805 = vld [vmem:[%s7 + $0x308] sm:$0xff]
  %v2806 = vld [vmem:[%s7 + $0x310] sm:$0xff]
  %v2807 = vld [vmem:[%s7 + $0x318] sm:$0xff]
  %v2808 = vld [vmem:[%s7 + $0x320] sm:$0xff]
  %v2809 = vld [vmem:[%s7 + $0x328] sm:$0xff]
  %v2810 = vld [vmem:[%s7 + $0x330] sm:$0xff]
  %v2811 = vld [vmem:[%s7 + $0x338] sm:$0xff]
  %v2812 = vld [vmem:[%s7 + $0x340] sm:$0xff]
  %v2813 = vld [vmem:[%s7 + $0x348] sm:$0xff]
  %v2814 = vld [vmem:[%s7 + $0x350] sm:$0xff]
  %v2815 = vld [vmem:[%s7 + $0x358] sm:$0xff]
  %v2816 = vld [vmem:[%s7 + $0x360] sm:$0xff]
  %v2817 = vld [vmem:[%s7 + $0x368] sm:$0xff]
  %v2818 = vld [vmem:[%s7 + $0x370] sm:$0xff]
  %v2819 = vld [vmem:[%s7 + $0x378] sm:$0xff]
  %v2820 = vld [vmem:[%s7 + $0x380] sm:$0xff]
  %v2821 = vld [vmem:[%s7 + $0x388] sm:$0xff]
  %v2822 = vld [vmem:[%s7 + $0x390] sm:$0xff]
  %v2823 = vld [vmem:[%s7 + $0x398] sm:$0xff]
  %v2824 = vld [vmem:[%s7 + $0x3a0] sm:$0xff]
  %v2825 = vld [vmem:[%s7 + $0x3a8] sm:$0xff]
  %v2826 = vld [vmem:[%s7 + $0x3b0] sm:$0xff]
  %v2827 = vld [vmem:[%s7 + $0x3b8] sm:$0xff]
  %v2828 = vld [vmem:[%s7 + $0x3c0] sm:$0xff]
  %v2829 = vld [vmem:[%s7 + $0x3c8] sm:$0xff]
  %v2830 = vld [vmem:[%s7 + $0x3d0] sm:$0xff]
  %v2831 = vld [vmem:[%s7 + $0x3d8] sm:$0xff]
  %v2832 = vld [vmem:[%s7 + $0x3e0] sm:$0xff]
  %v2833 = vld [vmem:[%s7 + $0x3e8] sm:$0xff]
  %v2834 = vld [vmem:[%s7 + $0x3f0] sm:$0xff]
  %v2835 = vld [vmem:[%s7 + $0x3f8] sm:$0xff]
  %v2836 = vld [vmem:[%s7 + $0x400] sm:$0xff]
  %v2837 = vld [vmem:[%s7 + $0x408] sm:$0xff]
  %v2838 = vld [vmem:[%s7 + $0x410] sm:$0xff]
  %v2839 = vld [vmem:[%s7 + $0x418] sm:$0xff]
  %v2840 = vld [vmem:[%s7 + $0x420] sm:$0xff]
  %v2841 = vld [vmem:[%s7 + $0x428] sm:$0xff]
  %v2842 = vld [vmem:[%s7 + $0x430] sm:$0xff]
  %v2843 = vld [vmem:[%s7 + $0x438] sm:$0xff]
  %v2844 = vld [vmem:[%s7 + $0x440] sm:$0xff]
  %v2845 = vld [vmem:[%s7 + $0x448] sm:$0xff]
  %v2846 = vld [vmem:[%s7 + $0x450] sm:$0xff]
  %v2847 = vld [vmem:[%s7 + $0x458] sm:$0xff]
  %v2848 = vld [vmem:[%s7 + $0x460] sm:$0xff]
  %v2849 = vld [vmem:[%s7 + $0x468] sm:$0xff]
  %v2850 = vld [vmem:[%s7 + $0x470] sm:$0xff]
  %v2851 = vld [vmem:[%s7 + $0x478] sm:$0xff]
  %v2852 = vld [vmem:[%s7 + $0x480] sm:$0xff]
  %v2853 = vld [vmem:[%s7 + $0x488] sm:$0xff]
  %v2854 = vld [vmem:[%s7 + $0x490] sm:$0xff]
  %v2855 = vld [vmem:[%s7 + $0x498] sm:$0xff]
  %v2856 = vld [vmem:[%s7 + $0x4a0] sm:$0xff]
  %v2857 = vld [vmem:[%s7 + $0x4a8] sm:$0xff]
  %v2858 = vld [vmem:[%s7 + $0x4b0] sm:$0xff]
  %v2859 = vld [vmem:[%s7 + $0x4b8] sm:$0xff]
  %v2860 = vld [vmem:[%s7 + $0x4c0] sm:$0xff]
  %v2861 = vld [vmem:[%s7 + $0x4c8] sm:$0xff]
  %v2862 = vld [vmem:[%s7 + $0x4d0] sm:$0xff]
  %v2863 = vld [vmem:[%s7 + $0x4d8] sm:$0xff]
  %v2864 = vld [vmem:[%s7 + $0x4e0] sm:$0xff]
  %v2865 = vld [vmem:[%s7 + $0x4e8] sm:$0xff]
  %v2866 = vld [vmem:[%s7 + $0x4f0] sm:$0xff]
  %v2867 = vld [vmem:[%s7 + $0x4f8] sm:$0xff]
  %v2868 = vld [vmem:[%s7 + $0x500] sm:$0xff]
  %v2869 = vld [vmem:[%s7 + $0x508] sm:$0xff]
  %v2870 = vld [vmem:[%s7 + $0x510] sm:$0xff]
  %v2871 = vld [vmem:[%s7 + $0x518] sm:$0xff]
  %v2872 = vld [vmem:[%s7 + $0x520] sm:$0xff]
  %v2873 = vld [vmem:[%s7 + $0x528] sm:$0xff]
  %v2874 = vld [vmem:[%s7 + $0x530] sm:$0xff]
  %v2875 = vld [vmem:[%s7 + $0x538] sm:$0xff]
  %v2876 = vld [vmem:[%s7 + $0x540] sm:$0xff]
  %v2877 = vld [vmem:[%s7 + $0x548] sm:$0xff]
  %v2878 = vld [vmem:[%s7 + $0x550] sm:$0xff]
  %v2879 = vld [vmem:[%s7 + $0x558] sm:$0xff]
  %v2880 = vld [vmem:[%s7 + $0x560] sm:$0xff]
  %v2881 = vld [vmem:[%s7 + $0x568] sm:$0xff]
  %v2882 = vld [vmem:[%s7 + $0x570] sm:$0xff]
  %v2883 = vld [vmem:[%s7 + $0x578] sm:$0xff]
  %v2884 = vld [vmem:[%s7 + $0x580] sm:$0xff]
  %v2885 = vld [vmem:[%s7 + $0x588] sm:$0xff]
  %v2886 = vld [vmem:[%s7 + $0x590] sm:$0xff]
  %v2887 = vld [vmem:[%s7 + $0x598] sm:$0xff]
  %v2888 = vld [vmem:[%s7 + $0x5a0] sm:$0xff]
  %v2889 = vld [vmem:[%s7 + $0x5a8] sm:$0xff]
  %v2890 = vld [vmem:[%s7 + $0x5b0] sm:$0xff]
  %v2891 = vld [vmem:[%s7 + $0x5b8] sm:$0xff]
  %v2892 = vld [vmem:[%s7 + $0x5c0] sm:$0xff]
  %v2893 = vld [vmem:[%s7 + $0x5c8] sm:$0xff]
  %v2894 = vld [vmem:[%s7 + $0x5d0] sm:$0xff]
  %v2895 = vld [vmem:[%s7 + $0x5d8] sm:$0xff]
  %v2896 = vld [vmem:[%s7 + $0x5e0] sm:$0xff]
  %v2897 = vld [vmem:[%s7 + $0x5e8] sm:$0xff]
  %v2898 = vld [vmem:[%s7 + $0x5f0] sm:$0xff]
  %v2899 = vld [vmem:[%s7 + $0x5f8] sm:$0xff]
  %v2900 = vld [vmem:[%s7 + $0x600] sm:$0xff]
  %v2901 = vld [vmem:[%s7 + $0x608] sm:$0xff]
  %v2902 = vld [vmem:[%s7 + $0x610] sm:$0xff]
  %v2903 = vld [vmem:[%s7 + $0x618] sm:$0xff]
  %v2904 = vld [vmem:[%s7 + $0x620] sm:$0xff]
  %v2905 = vld [vmem:[%s7 + $0x628] sm:$0xff]
  %v2906 = vld [vmem:[%s7 + $0x630] sm:$0xff]
  %v2907 = vld [vmem:[%s7 + $0x638] sm:$0xff]
  %v2908 = vld [vmem:[%s7 + $0x640] sm:$0xff]
  %v2909 = vld [vmem:[%s7 + $0x648] sm:$0xff]
  %v2910 = vld [vmem:[%s7 + $0x650] sm:$0xff]
  %v2911 = vld [vmem:[%s7 + $0x658] sm:$0xff]
  %v2912 = vld [vmem:[%s7 + $0x660] sm:$0xff]
  %v2913 = vld [vmem:[%s7 + $0x668] sm:$0xff]
  %v2914 = vld [vmem:[%s7 + $0x670] sm:$0xff]
  %v2915 = vld [vmem:[%s7 + $0x678] sm:$0xff]
  %v2916 = vld [vmem:[%s7 + $0x680] sm:$0xff]
  %v2917 = vld [vmem:[%s7 + $0x688] sm:$0xff]
  %v2918 = vld [vmem:[%s7 + $0x690] sm:$0xff]
  %v2919 = vld [vmem:[%s7 + $0x698] sm:$0xff]
  %v2920 = vld [vmem:[%s7 + $0x6a0] sm:$0xff]
  %v2921 = vld [vmem:[%s7 + $0x6a8] sm:$0xff]
  %v2922 = vld [vmem:[%s7 + $0x6b0] sm:$0xff]
  %v2923 = vld [vmem:[%s7 + $0x6b8] sm:$0xff]
  %v2924 = vld [vmem:[%s7 + $0x6c0] sm:$0xff]
  %v2925 = vld [vmem:[%s7 + $0x6c8] sm:$0xff]
  %v2926 = vld [vmem:[%s7 + $0x6d0] sm:$0xff]
  %v2927 = vld [vmem:[%s7 + $0x6d8] sm:$0xff]
  %v2928 = vld [vmem:[%s7 + $0x6e0] sm:$0xff]
  %v2929 = vld [vmem:[%s7 + $0x6e8] sm:$0xff]
  %v2930 = vld [vmem:[%s7 + $0x6f0] sm:$0xff]
  %v2931 = vld [vmem:[%s7 + $0x6f8] sm:$0xff]
  %v2932 = vld [vmem:[%s7 + $0x700] sm:$0xff]
  %v2933 = vld [vmem:[%s7 + $0x708] sm:$0xff]
  %v2934 = vld [vmem:[%s7 + $0x710] sm:$0xff]
  %v2935 = vld [vmem:[%s7 + $0x718] sm:$0xff]
  %v2936 = vld [vmem:[%s7 + $0x720] sm:$0xff]
  %v2937 = vld [vmem:[%s7 + $0x728] sm:$0xff]
  %v2938 = vld [vmem:[%s7 + $0x730] sm:$0xff]
  %v2939 = vld [vmem:[%s7 + $0x738] sm:$0xff]
  %v2940 = vld [vmem:[%s7 + $0x740] sm:$0xff]
  %v2941 = vld [vmem:[%s7 + $0x748] sm:$0xff]
  %v2942 = vld [vmem:[%s7 + $0x750] sm:$0xff]
  %v2943 = vld [vmem:[%s7 + $0x758] sm:$0xff]
  %v2944 = vld [vmem:[%s7 + $0x760] sm:$0xff]
  %v2945 = vld [vmem:[%s7 + $0x768] sm:$0xff]
  %v2946 = vld [vmem:[%s7 + $0x770] sm:$0xff]
  %v2947 = vld [vmem:[%s7 + $0x778] sm:$0xff]
  %v2948 = vld [vmem:[%s7 + $0x780] sm:$0xff]
  %v2949 = vld [vmem:[%s7 + $0x788] sm:$0xff]
  %v2950 = vld [vmem:[%s7 + $0x790] sm:$0xff]
  %v2951 = vld [vmem:[%s7 + $0x798] sm:$0xff]
  %v2952 = vld [vmem:[%s7 + $0x7a0] sm:$0xff]
  %v2953 = vld [vmem:[%s7 + $0x7a8] sm:$0xff]
  %v2954 = vld [vmem:[%s7 + $0x7b0] sm:$0xff]
  %v2955 = vld [vmem:[%s7 + $0x7b8] sm:$0xff]
  %v2956 = vld [vmem:[%s7 + $0x7c0] sm:$0xff]
  %v2957 = vld [vmem:[%s7 + $0x7c8] sm:$0xff]
  %v2958 = vld [vmem:[%s7 + $0x7d0] sm:$0xff]
  %v2959 = vld [vmem:[%s7 + $0x7d8] sm:$0xff]
  %v2960 = vld [vmem:[%s7 + $0x7e0] sm:$0xff]
  %v2961 = vld [vmem:[%s7 + $0x7e8] sm:$0xff]
  %v2962 = vld [vmem:[%s7 + $0x7f0] sm:$0xff]
  %v2963 = vld [vmem:[%s7 + $0x7f8] sm:$0xff]
  %v2964 = vld [vmem:[%s8] sm:$0xf]
  %v2966 = vlaneseq
  %v2967 = vshrl.u32 %v2966, 7
  %v2968 = vsub.s32 0, %v2967
  %v2969 = vrot.slane %v2964, %v2968
  %v2970 = vlaneseq
  %v2971 = vshrl.u32 %v2970, 7
  %v2972 = vsub.s32 1, %v2971
  %v2973 = vrot.slane %v2964, %v2972
  %v2974 = vlaneseq
  %v2975 = vshrl.u32 %v2974, 7
  %v2976 = vsub.s32 2, %v2975
  %v2977 = vrot.slane %v2964, %v2976
  %v2978 = vlaneseq
  %v2979 = vshrl.u32 %v2978, 7
  %v2980 = vsub.s32 3, %v2979
  %v2981 = vrot.slane %v2964, %v2980
  %v3242 = vunpack.c.l.b16 %v2708
  %v3243 = vunpack.c.h.b16 %v2708
  %v3244 = vunpack.c.l.b16 %v2709
  %v3245 = vunpack.c.h.b16 %v2709
  %v3246 = vunpack.c.l.b16 %v2710
  %v3247 = vunpack.c.h.b16 %v2710
  %v3248 = vunpack.c.l.b16 %v2711
  %v3249 = vunpack.c.h.b16 %v2711
  %v3250 = vunpack.c.l.b16 %v2712
  %v3251 = vunpack.c.h.b16 %v2712
  %v3252 = vunpack.c.l.b16 %v2713
  %v3253 = vunpack.c.h.b16 %v2713
  %v3254 = vunpack.c.l.b16 %v2714
  %v3255 = vunpack.c.h.b16 %v2714
  %v3256 = vunpack.c.l.b16 %v2715
  %v3257 = vunpack.c.h.b16 %v2715
  %v3258 = vunpack.c.l.b16 %v2716
  %v3259 = vunpack.c.h.b16 %v2716
  %v3260 = vunpack.c.l.b16 %v2717
  %v3261 = vunpack.c.h.b16 %v2717
  %v3262 = vunpack.c.l.b16 %v2718
  %v3263 = vunpack.c.h.b16 %v2718
  %v3264 = vunpack.c.l.b16 %v2719
  %v3265 = vunpack.c.h.b16 %v2719
  %v3266 = vunpack.c.l.b16 %v2720
  %v3267 = vunpack.c.h.b16 %v2720
  %v3268 = vunpack.c.l.b16 %v2721
  %v3269 = vunpack.c.h.b16 %v2721
  %v3270 = vunpack.c.l.b16 %v2722
  %v3271 = vunpack.c.h.b16 %v2722
  %v3272 = vunpack.c.l.b16 %v2723
  %v3273 = vunpack.c.h.b16 %v2723
  %v3274 = vunpack.c.l.b16 %v2724
  %v3275 = vunpack.c.h.b16 %v2724
  %v3276 = vunpack.c.l.b16 %v2725
  %v3277 = vunpack.c.h.b16 %v2725
  %v3278 = vunpack.c.l.b16 %v2726
  %v3279 = vunpack.c.h.b16 %v2726
  %v3280 = vunpack.c.l.b16 %v2727
  %v3281 = vunpack.c.h.b16 %v2727
  %v3282 = vunpack.c.l.b16 %v2728
  %v3283 = vunpack.c.h.b16 %v2728
  %v3284 = vunpack.c.l.b16 %v2729
  %v3285 = vunpack.c.h.b16 %v2729
  %v3286 = vunpack.c.l.b16 %v2730
  %v3287 = vunpack.c.h.b16 %v2730
  %v3288 = vunpack.c.l.b16 %v2731
  %v3289 = vunpack.c.h.b16 %v2731
  %v3290 = vunpack.c.l.b16 %v2732
  %v3291 = vunpack.c.h.b16 %v2732
  %v3292 = vunpack.c.l.b16 %v2733
  %v3293 = vunpack.c.h.b16 %v2733
  %v3294 = vunpack.c.l.b16 %v2734
  %v3295 = vunpack.c.h.b16 %v2734
  %v3296 = vunpack.c.l.b16 %v2735
  %v3297 = vunpack.c.h.b16 %v2735
  %v3298 = vunpack.c.l.b16 %v2736
  %v3299 = vunpack.c.h.b16 %v2736
  %v3300 = vunpack.c.l.b16 %v2737
  %v3301 = vunpack.c.h.b16 %v2737
  %v3302 = vunpack.c.l.b16 %v2738
  %v3303 = vunpack.c.h.b16 %v2738
  %v3304 = vunpack.c.l.b16 %v2739
  %v3305 = vunpack.c.h.b16 %v2739
  %v3306 = vunpack.c.l.b16 %v2740
  %v3307 = vunpack.c.h.b16 %v2740
  %v3308 = vunpack.c.l.b16 %v2741
  %v3309 = vunpack.c.h.b16 %v2741
  %v3310 = vunpack.c.l.b16 %v2742
  %v3311 = vunpack.c.h.b16 %v2742
  %v3312 = vunpack.c.l.b16 %v2743
  %v3313 = vunpack.c.h.b16 %v2743
  %v3314 = vunpack.c.l.b16 %v2744
  %v3315 = vunpack.c.h.b16 %v2744
  %v3316 = vunpack.c.l.b16 %v2745
  %v3317 = vunpack.c.h.b16 %v2745
  %v3318 = vunpack.c.l.b16 %v2746
  %v3319 = vunpack.c.h.b16 %v2746
  %v3320 = vunpack.c.l.b16 %v2747
  %v3321 = vunpack.c.h.b16 %v2747
  %v3322 = vunpack.c.l.b16 %v2748
  %v3323 = vunpack.c.h.b16 %v2748
  %v3324 = vunpack.c.l.b16 %v2749
  %v3325 = vunpack.c.h.b16 %v2749
  %v3326 = vunpack.c.l.b16 %v2750
  %v3327 = vunpack.c.h.b16 %v2750
  %v3328 = vunpack.c.l.b16 %v2751
  %v3329 = vunpack.c.h.b16 %v2751
  %v3330 = vunpack.c.l.b16 %v2752
  %v3331 = vunpack.c.h.b16 %v2752
  %v3332 = vunpack.c.l.b16 %v2753
  %v3333 = vunpack.c.h.b16 %v2753
  %v3334 = vunpack.c.l.b16 %v2754
  %v3335 = vunpack.c.h.b16 %v2754
  %v3336 = vunpack.c.l.b16 %v2755
  %v3337 = vunpack.c.h.b16 %v2755
  %v3338 = vunpack.c.l.b16 %v2756
  %v3339 = vunpack.c.h.b16 %v2756
  %v3340 = vunpack.c.l.b16 %v2757
  %v3341 = vunpack.c.h.b16 %v2757
  %v3342 = vunpack.c.l.b16 %v2758
  %v3343 = vunpack.c.h.b16 %v2758
  %v3344 = vunpack.c.l.b16 %v2759
  %v3345 = vunpack.c.h.b16 %v2759
  %v3346 = vunpack.c.l.b16 %v2760
  %v3347 = vunpack.c.h.b16 %v2760
  %v3348 = vunpack.c.l.b16 %v2761
  %v3349 = vunpack.c.h.b16 %v2761
  %v3350 = vunpack.c.l.b16 %v2762
  %v3351 = vunpack.c.h.b16 %v2762
  %v3352 = vunpack.c.l.b16 %v2763
  %v3353 = vunpack.c.h.b16 %v2763
  %v3354 = vunpack.c.l.b16 %v2764
  %v3355 = vunpack.c.h.b16 %v2764
  %v3356 = vunpack.c.l.b16 %v2765
  %v3357 = vunpack.c.h.b16 %v2765
  %v3358 = vunpack.c.l.b16 %v2766
  %v3359 = vunpack.c.h.b16 %v2766
  %v3360 = vunpack.c.l.b16 %v2767
  %v3361 = vunpack.c.h.b16 %v2767
  %v3362 = vunpack.c.l.b16 %v2768
  %v3363 = vunpack.c.h.b16 %v2768
  %v3364 = vunpack.c.l.b16 %v2769
  %v3365 = vunpack.c.h.b16 %v2769
  %v3366 = vunpack.c.l.b16 %v2770
  %v3367 = vunpack.c.h.b16 %v2770
  %v3368 = vunpack.c.l.b16 %v2771
  %v3369 = vunpack.c.h.b16 %v2771
  %v3370 = vunpack.c.l.b16 %v2772
  %v3371 = vunpack.c.h.b16 %v2772
  %v3372 = vunpack.c.l.b16 %v2773
  %v3373 = vunpack.c.h.b16 %v2773
  %v3374 = vunpack.c.l.b16 %v2774
  %v3375 = vunpack.c.h.b16 %v2774
  %v3376 = vunpack.c.l.b16 %v2775
  %v3377 = vunpack.c.h.b16 %v2775
  %v3378 = vunpack.c.l.b16 %v2776
  %v3379 = vunpack.c.h.b16 %v2776
  %v3380 = vunpack.c.l.b16 %v2777
  %v3381 = vunpack.c.h.b16 %v2777
  %v3382 = vunpack.c.l.b16 %v2778
  %v3383 = vunpack.c.h.b16 %v2778
  %v3384 = vunpack.c.l.b16 %v2779
  %v3385 = vunpack.c.h.b16 %v2779
  %v3386 = vunpack.c.l.b16 %v2780
  %v3387 = vunpack.c.h.b16 %v2780
  %v3388 = vunpack.c.l.b16 %v2781
  %v3389 = vunpack.c.h.b16 %v2781
  %v3390 = vunpack.c.l.b16 %v2782
  %v3391 = vunpack.c.h.b16 %v2782
  %v3392 = vunpack.c.l.b16 %v2783
  %v3393 = vunpack.c.h.b16 %v2783
  %v3394 = vunpack.c.l.b16 %v2784
  %v3395 = vunpack.c.h.b16 %v2784
  %v3396 = vunpack.c.l.b16 %v2785
  %v3397 = vunpack.c.h.b16 %v2785
  %v3398 = vunpack.c.l.b16 %v2786
  %v3399 = vunpack.c.h.b16 %v2786
  %v3400 = vunpack.c.l.b16 %v2787
  %v3401 = vunpack.c.h.b16 %v2787
  %v3402 = vunpack.c.l.b16 %v2788
  %v3403 = vunpack.c.h.b16 %v2788
  %v3404 = vunpack.c.l.b16 %v2789
  %v3405 = vunpack.c.h.b16 %v2789
  %v3406 = vunpack.c.l.b16 %v2790
  %v3407 = vunpack.c.h.b16 %v2790
  %v3408 = vunpack.c.l.b16 %v2791
  %v3409 = vunpack.c.h.b16 %v2791
  %v3410 = vunpack.c.l.b16 %v2792
  %v3411 = vunpack.c.h.b16 %v2792
  %v3412 = vunpack.c.l.b16 %v2793
  %v3413 = vunpack.c.h.b16 %v2793
  %v3414 = vunpack.c.l.b16 %v2794
  %v3415 = vunpack.c.h.b16 %v2794
  %v3416 = vunpack.c.l.b16 %v2795
  %v3417 = vunpack.c.h.b16 %v2795
  %v3418 = vunpack.c.l.b16 %v2796
  %v3419 = vunpack.c.h.b16 %v2796
  %v3420 = vunpack.c.l.b16 %v2797
  %v3421 = vunpack.c.h.b16 %v2797
  %v3422 = vunpack.c.l.b16 %v2798
  %v3423 = vunpack.c.h.b16 %v2798
  %v3424 = vunpack.c.l.b16 %v2799
  %v3425 = vunpack.c.h.b16 %v2799
  %v3426 = vunpack.c.l.b16 %v2800
  %v3427 = vunpack.c.h.b16 %v2800
  %v3428 = vunpack.c.l.b16 %v2801
  %v3429 = vunpack.c.h.b16 %v2801
  %v3430 = vunpack.c.l.b16 %v2802
  %v3431 = vunpack.c.h.b16 %v2802
  %v3432 = vunpack.c.l.b16 %v2803
  %v3433 = vunpack.c.h.b16 %v2803
  %v3434 = vunpack.c.l.b16 %v2804
  %v3435 = vunpack.c.h.b16 %v2804
  %v3436 = vunpack.c.l.b16 %v2805
  %v3437 = vunpack.c.h.b16 %v2805
  %v3438 = vunpack.c.l.b16 %v2806
  %v3439 = vunpack.c.h.b16 %v2806
  %v3440 = vunpack.c.l.b16 %v2807
  %v3441 = vunpack.c.h.b16 %v2807
  %v3442 = vunpack.c.l.b16 %v2808
  %v3443 = vunpack.c.h.b16 %v2808
  %v3444 = vunpack.c.l.b16 %v2809
  %v3445 = vunpack.c.h.b16 %v2809
  %v3446 = vunpack.c.l.b16 %v2810
  %v3447 = vunpack.c.h.b16 %v2810
  %v3448 = vunpack.c.l.b16 %v2811
  %v3449 = vunpack.c.h.b16 %v2811
  %v3450 = vunpack.c.l.b16 %v2812
  %v3451 = vunpack.c.h.b16 %v2812
  %v3452 = vunpack.c.l.b16 %v2813
  %v3453 = vunpack.c.h.b16 %v2813
  %v3454 = vunpack.c.l.b16 %v2814
  %v3455 = vunpack.c.h.b16 %v2814
  %v3456 = vunpack.c.l.b16 %v2815
  %v3457 = vunpack.c.h.b16 %v2815
  %v3458 = vunpack.c.l.b16 %v2816
  %v3459 = vunpack.c.h.b16 %v2816
  %v3460 = vunpack.c.l.b16 %v2817
  %v3461 = vunpack.c.h.b16 %v2817
  %v3462 = vunpack.c.l.b16 %v2818
  %v3463 = vunpack.c.h.b16 %v2818
  %v3464 = vunpack.c.l.b16 %v2819
  %v3465 = vunpack.c.h.b16 %v2819
  %v3466 = vunpack.c.l.b16 %v2820
  %v3467 = vunpack.c.h.b16 %v2820
  %v3468 = vunpack.c.l.b16 %v2821
  %v3469 = vunpack.c.h.b16 %v2821
  %v3470 = vunpack.c.l.b16 %v2822
  %v3471 = vunpack.c.h.b16 %v2822
  %v3472 = vunpack.c.l.b16 %v2823
  %v3473 = vunpack.c.h.b16 %v2823
  %v3474 = vunpack.c.l.b16 %v2824
  %v3475 = vunpack.c.h.b16 %v2824
  %v3476 = vunpack.c.l.b16 %v2825
  %v3477 = vunpack.c.h.b16 %v2825
  %v3478 = vunpack.c.l.b16 %v2826
  %v3479 = vunpack.c.h.b16 %v2826
  %v3480 = vunpack.c.l.b16 %v2827
  %v3481 = vunpack.c.h.b16 %v2827
  %v3482 = vunpack.c.l.b16 %v2828
  %v3483 = vunpack.c.h.b16 %v2828
  %v3484 = vunpack.c.l.b16 %v2829
  %v3485 = vunpack.c.h.b16 %v2829
  %v3486 = vunpack.c.l.b16 %v2830
  %v3487 = vunpack.c.h.b16 %v2830
  %v3488 = vunpack.c.l.b16 %v2831
  %v3489 = vunpack.c.h.b16 %v2831
  %v3490 = vunpack.c.l.b16 %v2832
  %v3491 = vunpack.c.h.b16 %v2832
  %v3492 = vunpack.c.l.b16 %v2833
  %v3493 = vunpack.c.h.b16 %v2833
  %v3494 = vunpack.c.l.b16 %v2834
  %v3495 = vunpack.c.h.b16 %v2834
  %v3496 = vunpack.c.l.b16 %v2835
  %v3497 = vunpack.c.h.b16 %v2835
  %v3498 = vunpack.c.l.b16 %v2836
  %v3499 = vunpack.c.h.b16 %v2836
  %v3500 = vunpack.c.l.b16 %v2837
  %v3501 = vunpack.c.h.b16 %v2837
  %v3502 = vunpack.c.l.b16 %v2838
  %v3503 = vunpack.c.h.b16 %v2838
  %v3504 = vunpack.c.l.b16 %v2839
  %v3505 = vunpack.c.h.b16 %v2839
  %v3506 = vunpack.c.l.b16 %v2840
  %v3507 = vunpack.c.h.b16 %v2840
  %v3508 = vunpack.c.l.b16 %v2841
  %v3509 = vunpack.c.h.b16 %v2841
  %v3510 = vunpack.c.l.b16 %v2842
  %v3511 = vunpack.c.h.b16 %v2842
  %v3512 = vunpack.c.l.b16 %v2843
  %v3513 = vunpack.c.h.b16 %v2843
  %v3514 = vunpack.c.l.b16 %v2844
  %v3515 = vunpack.c.h.b16 %v2844
  %v3516 = vunpack.c.l.b16 %v2845
  %v3517 = vunpack.c.h.b16 %v2845
  %v3518 = vunpack.c.l.b16 %v2846
  %v3519 = vunpack.c.h.b16 %v2846
  %v3520 = vunpack.c.l.b16 %v2847
  %v3521 = vunpack.c.h.b16 %v2847
  %v3522 = vunpack.c.l.b16 %v2848
  %v3523 = vunpack.c.h.b16 %v2848
  %v3524 = vunpack.c.l.b16 %v2849
  %v3525 = vunpack.c.h.b16 %v2849
  %v3526 = vunpack.c.l.b16 %v2850
  %v3527 = vunpack.c.h.b16 %v2850
  %v3528 = vunpack.c.l.b16 %v2851
  %v3529 = vunpack.c.h.b16 %v2851
  %v3530 = vunpack.c.l.b16 %v2852
  %v3531 = vunpack.c.h.b16 %v2852
  %v3532 = vunpack.c.l.b16 %v2853
  %v3533 = vunpack.c.h.b16 %v2853
  %v3534 = vunpack.c.l.b16 %v2854
  %v3535 = vunpack.c.h.b16 %v2854
  %v3536 = vunpack.c.l.b16 %v2855
  %v3537 = vunpack.c.h.b16 %v2855
  %v3538 = vunpack.c.l.b16 %v2856
  %v3539 = vunpack.c.h.b16 %v2856
  %v3540 = vunpack.c.l.b16 %v2857
  %v3541 = vunpack.c.h.b16 %v2857
  %v3542 = vunpack.c.l.b16 %v2858
  %v3543 = vunpack.c.h.b16 %v2858
  %v3544 = vunpack.c.l.b16 %v2859
  %v3545 = vunpack.c.h.b16 %v2859
  %v3546 = vunpack.c.l.b16 %v2860
  %v3547 = vunpack.c.h.b16 %v2860
  %v3548 = vunpack.c.l.b16 %v2861
  %v3549 = vunpack.c.h.b16 %v2861
  %v3550 = vunpack.c.l.b16 %v2862
  %v3551 = vunpack.c.h.b16 %v2862
  %v3552 = vunpack.c.l.b16 %v2863
  %v3553 = vunpack.c.h.b16 %v2863
  %v3554 = vunpack.c.l.b16 %v2864
  %v3555 = vunpack.c.h.b16 %v2864
  %v3556 = vunpack.c.l.b16 %v2865
  %v3557 = vunpack.c.h.b16 %v2865
  %v3558 = vunpack.c.l.b16 %v2866
  %v3559 = vunpack.c.h.b16 %v2866
  %v3560 = vunpack.c.l.b16 %v2867
  %v3561 = vunpack.c.h.b16 %v2867
  %v3562 = vunpack.c.l.b16 %v2868
  %v3563 = vunpack.c.h.b16 %v2868
  %v3564 = vunpack.c.l.b16 %v2869
  %v3565 = vunpack.c.h.b16 %v2869
  %v3566 = vunpack.c.l.b16 %v2870
  %v3567 = vunpack.c.h.b16 %v2870
  %v3568 = vunpack.c.l.b16 %v2871
  %v3569 = vunpack.c.h.b16 %v2871
  %v3570 = vunpack.c.l.b16 %v2872
  %v3571 = vunpack.c.h.b16 %v2872
  %v3572 = vunpack.c.l.b16 %v2873
  %v3573 = vunpack.c.h.b16 %v2873
  %v3574 = vunpack.c.l.b16 %v2874
  %v3575 = vunpack.c.h.b16 %v2874
  %v3576 = vunpack.c.l.b16 %v2875
  %v3577 = vunpack.c.h.b16 %v2875
  %v3578 = vunpack.c.l.b16 %v2876
  %v3579 = vunpack.c.h.b16 %v2876
  %v3580 = vunpack.c.l.b16 %v2877
  %v3581 = vunpack.c.h.b16 %v2877
  %v3582 = vunpack.c.l.b16 %v2878
  %v3583 = vunpack.c.h.b16 %v2878
  %v3584 = vunpack.c.l.b16 %v2879
  %v3585 = vunpack.c.h.b16 %v2879
  %v3586 = vunpack.c.l.b16 %v2880
  %v3587 = vunpack.c.h.b16 %v2880
  %v3588 = vunpack.c.l.b16 %v2881
  %v3589 = vunpack.c.h.b16 %v2881
  %v3590 = vunpack.c.l.b16 %v2882
  %v3591 = vunpack.c.h.b16 %v2882
  %v3592 = vunpack.c.l.b16 %v2883
  %v3593 = vunpack.c.h.b16 %v2883
  %v3594 = vunpack.c.l.b16 %v2884
  %v3595 = vunpack.c.h.b16 %v2884
  %v3596 = vunpack.c.l.b16 %v2885
  %v3597 = vunpack.c.h.b16 %v2885
  %v3598 = vunpack.c.l.b16 %v2886
  %v3599 = vunpack.c.h.b16 %v2886
  %v3600 = vunpack.c.l.b16 %v2887
  %v3601 = vunpack.c.h.b16 %v2887
  %v3602 = vunpack.c.l.b16 %v2888
  %v3603 = vunpack.c.h.b16 %v2888
  %v3604 = vunpack.c.l.b16 %v2889
  %v3605 = vunpack.c.h.b16 %v2889
  %v3606 = vunpack.c.l.b16 %v2890
  %v3607 = vunpack.c.h.b16 %v2890
  %v3608 = vunpack.c.l.b16 %v2891
  %v3609 = vunpack.c.h.b16 %v2891
  %v3610 = vunpack.c.l.b16 %v2892
  %v3611 = vunpack.c.h.b16 %v2892
  %v3612 = vunpack.c.l.b16 %v2893
  %v3613 = vunpack.c.h.b16 %v2893
  %v3614 = vunpack.c.l.b16 %v2894
  %v3615 = vunpack.c.h.b16 %v2894
  %v3616 = vunpack.c.l.b16 %v2895
  %v3617 = vunpack.c.h.b16 %v2895
  %v3618 = vunpack.c.l.b16 %v2896
  %v3619 = vunpack.c.h.b16 %v2896
  %v3620 = vunpack.c.l.b16 %v2897
  %v3621 = vunpack.c.h.b16 %v2897
  %v3622 = vunpack.c.l.b16 %v2898
  %v3623 = vunpack.c.h.b16 %v2898
  %v3624 = vunpack.c.l.b16 %v2899
  %v3625 = vunpack.c.h.b16 %v2899
  %v3626 = vunpack.c.l.b16 %v2900
  %v3627 = vunpack.c.h.b16 %v2900
  %v3628 = vunpack.c.l.b16 %v2901
  %v3629 = vunpack.c.h.b16 %v2901
  %v3630 = vunpack.c.l.b16 %v2902
  %v3631 = vunpack.c.h.b16 %v2902
  %v3632 = vunpack.c.l.b16 %v2903
  %v3633 = vunpack.c.h.b16 %v2903
  %v3634 = vunpack.c.l.b16 %v2904
  %v3635 = vunpack.c.h.b16 %v2904
  %v3636 = vunpack.c.l.b16 %v2905
  %v3637 = vunpack.c.h.b16 %v2905
  %v3638 = vunpack.c.l.b16 %v2906
  %v3639 = vunpack.c.h.b16 %v2906
  %v3640 = vunpack.c.l.b16 %v2907
  %v3641 = vunpack.c.h.b16 %v2907
  %v3642 = vunpack.c.l.b16 %v2908
  %v3643 = vunpack.c.h.b16 %v2908
  %v3644 = vunpack.c.l.b16 %v2909
  %v3645 = vunpack.c.h.b16 %v2909
  %v3646 = vunpack.c.l.b16 %v2910
  %v3647 = vunpack.c.h.b16 %v2910
  %v3648 = vunpack.c.l.b16 %v2911
  %v3649 = vunpack.c.h.b16 %v2911
  %v3650 = vunpack.c.l.b16 %v2912
  %v3651 = vunpack.c.h.b16 %v2912
  %v3652 = vunpack.c.l.b16 %v2913
  %v3653 = vunpack.c.h.b16 %v2913
  %v3654 = vunpack.c.l.b16 %v2914
  %v3655 = vunpack.c.h.b16 %v2914
  %v3656 = vunpack.c.l.b16 %v2915
  %v3657 = vunpack.c.h.b16 %v2915
  %v3658 = vunpack.c.l.b16 %v2916
  %v3659 = vunpack.c.h.b16 %v2916
  %v3660 = vunpack.c.l.b16 %v2917
  %v3661 = vunpack.c.h.b16 %v2917
  %v3662 = vunpack.c.l.b16 %v2918
  %v3663 = vunpack.c.h.b16 %v2918
  %v3664 = vunpack.c.l.b16 %v2919
  %v3665 = vunpack.c.h.b16 %v2919
  %v3666 = vunpack.c.l.b16 %v2920
  %v3667 = vunpack.c.h.b16 %v2920
  %v3668 = vunpack.c.l.b16 %v2921
  %v3669 = vunpack.c.h.b16 %v2921
  %v3670 = vunpack.c.l.b16 %v2922
  %v3671 = vunpack.c.h.b16 %v2922
  %v3672 = vunpack.c.l.b16 %v2923
  %v3673 = vunpack.c.h.b16 %v2923
  %v3674 = vunpack.c.l.b16 %v2924
  %v3675 = vunpack.c.h.b16 %v2924
  %v3676 = vunpack.c.l.b16 %v2925
  %v3677 = vunpack.c.h.b16 %v2925
  %v3678 = vunpack.c.l.b16 %v2926
  %v3679 = vunpack.c.h.b16 %v2926
  %v3680 = vunpack.c.l.b16 %v2927
  %v3681 = vunpack.c.h.b16 %v2927
  %v3682 = vunpack.c.l.b16 %v2928
  %v3683 = vunpack.c.h.b16 %v2928
  %v3684 = vunpack.c.l.b16 %v2929
  %v3685 = vunpack.c.h.b16 %v2929
  %v3686 = vunpack.c.l.b16 %v2930
  %v3687 = vunpack.c.h.b16 %v2930
  %v3688 = vunpack.c.l.b16 %v2931
  %v3689 = vunpack.c.h.b16 %v2931
  %v3690 = vunpack.c.l.b16 %v2932
  %v3691 = vunpack.c.h.b16 %v2932
  %v3692 = vunpack.c.l.b16 %v2933
  %v3693 = vunpack.c.h.b16 %v2933
  %v3694 = vunpack.c.l.b16 %v2934
  %v3695 = vunpack.c.h.b16 %v2934
  %v3696 = vunpack.c.l.b16 %v2935
  %v3697 = vunpack.c.h.b16 %v2935
  %v3698 = vunpack.c.l.b16 %v2936
  %v3699 = vunpack.c.h.b16 %v2936
  %v3700 = vunpack.c.l.b16 %v2937
  %v3701 = vunpack.c.h.b16 %v2937
  %v3702 = vunpack.c.l.b16 %v2938
  %v3703 = vunpack.c.h.b16 %v2938
  %v3704 = vunpack.c.l.b16 %v2939
  %v3705 = vunpack.c.h.b16 %v2939
  %v3706 = vunpack.c.l.b16 %v2940
  %v3707 = vunpack.c.h.b16 %v2940
  %v3708 = vunpack.c.l.b16 %v2941
  %v3709 = vunpack.c.h.b16 %v2941
  %v3710 = vunpack.c.l.b16 %v2942
  %v3711 = vunpack.c.h.b16 %v2942
  %v3712 = vunpack.c.l.b16 %v2943
  %v3713 = vunpack.c.h.b16 %v2943
  %v3714 = vunpack.c.l.b16 %v2944
  %v3715 = vunpack.c.h.b16 %v2944
  %v3716 = vunpack.c.l.b16 %v2945
  %v3717 = vunpack.c.h.b16 %v2945
  %v3718 = vunpack.c.l.b16 %v2946
  %v3719 = vunpack.c.h.b16 %v2946
  %v3720 = vunpack.c.l.b16 %v2947
  %v3721 = vunpack.c.h.b16 %v2947
  %v3722 = vunpack.c.l.b16 %v2948
  %v3723 = vunpack.c.h.b16 %v2948
  %v3724 = vunpack.c.l.b16 %v2949
  %v3725 = vunpack.c.h.b16 %v2949
  %v3726 = vunpack.c.l.b16 %v2950
  %v3727 = vunpack.c.h.b16 %v2950
  %v3728 = vunpack.c.l.b16 %v2951
  %v3729 = vunpack.c.h.b16 %v2951
  %v3730 = vunpack.c.l.b16 %v2952
  %v3731 = vunpack.c.h.b16 %v2952
  %v3732 = vunpack.c.l.b16 %v2953
  %v3733 = vunpack.c.h.b16 %v2953
  %v3734 = vunpack.c.l.b16 %v2954
  %v3735 = vunpack.c.h.b16 %v2954
  %v3736 = vunpack.c.l.b16 %v2955
  %v3737 = vunpack.c.h.b16 %v2955
  %v3738 = vunpack.c.l.b16 %v2956
  %v3739 = vunpack.c.h.b16 %v2956
  %v3740 = vunpack.c.l.b16 %v2957
  %v3741 = vunpack.c.h.b16 %v2957
  %v3742 = vunpack.c.l.b16 %v2958
  %v3743 = vunpack.c.h.b16 %v2958
  %v3744 = vunpack.c.l.b16 %v2959
  %v3745 = vunpack.c.h.b16 %v2959
  %v3746 = vunpack.c.l.b16 %v2960
  %v3747 = vunpack.c.h.b16 %v2960
  %v3748 = vunpack.c.l.b16 %v2961
  %v3749 = vunpack.c.h.b16 %v2961
  %v3750 = vunpack.c.l.b16 %v2962
  %v3751 = vunpack.c.h.b16 %v2962
  %v3752 = vunpack.c.l.b16 %v2963
  %v3753 = vunpack.c.h.b16 %v2963
  %v3754 = vpack.c.b16 %v3246, %v3242
  %v3755 = vpack.c.b16 %v3247, %v3243
  %v3756 = vpack.c.b16 %v3248, %v3244
  %v3757 = vpack.c.b16 %v3249, %v3245
  %v3758 = vpack.c.b16 %v3254, %v3250
  %v3759 = vpack.c.b16 %v3255, %v3251
  %v3760 = vpack.c.b16 %v3256, %v3252
  %v3761 = vpack.c.b16 %v3257, %v3253
  %v3762 = vpack.c.b16 %v3262, %v3258
  %v3763 = vpack.c.b16 %v3263, %v3259
  %v3764 = vpack.c.b16 %v3264, %v3260
  %v3765 = vpack.c.b16 %v3265, %v3261
  %v3766 = vpack.c.b16 %v3270, %v3266
  %v3767 = vpack.c.b16 %v3271, %v3267
  %v3768 = vpack.c.b16 %v3272, %v3268
  %v3769 = vpack.c.b16 %v3273, %v3269
  %v3770 = vpack.c.b16 %v3278, %v3274
  %v3771 = vpack.c.b16 %v3279, %v3275
  %v3772 = vpack.c.b16 %v3280, %v3276
  %v3773 = vpack.c.b16 %v3281, %v3277
  %v3774 = vpack.c.b16 %v3286, %v3282
  %v3775 = vpack.c.b16 %v3287, %v3283
  %v3776 = vpack.c.b16 %v3288, %v3284
  %v3777 = vpack.c.b16 %v3289, %v3285
  %v3778 = vpack.c.b16 %v3294, %v3290
  %v3779 = vpack.c.b16 %v3295, %v3291
  %v3780 = vpack.c.b16 %v3296, %v3292
  %v3781 = vpack.c.b16 %v3297, %v3293
  %v3782 = vpack.c.b16 %v3302, %v3298
  %v3783 = vpack.c.b16 %v3303, %v3299
  %v3784 = vpack.c.b16 %v3304, %v3300
  %v3785 = vpack.c.b16 %v3305, %v3301
  %v3786 = vpack.c.b16 %v3310, %v3306
  %v3787 = vpack.c.b16 %v3311, %v3307
  %v3788 = vpack.c.b16 %v3312, %v3308
  %v3789 = vpack.c.b16 %v3313, %v3309
  %v3790 = vpack.c.b16 %v3318, %v3314
  %v3791 = vpack.c.b16 %v3319, %v3315
  %v3792 = vpack.c.b16 %v3320, %v3316
  %v3793 = vpack.c.b16 %v3321, %v3317
  %v3794 = vpack.c.b16 %v3326, %v3322
  %v3795 = vpack.c.b16 %v3327, %v3323
  %v3796 = vpack.c.b16 %v3328, %v3324
  %v3797 = vpack.c.b16 %v3329, %v3325
  %v3798 = vpack.c.b16 %v3334, %v3330
  %v3799 = vpack.c.b16 %v3335, %v3331
  %v3800 = vpack.c.b16 %v3336, %v3332
  %v3801 = vpack.c.b16 %v3337, %v3333
  %v3802 = vpack.c.b16 %v3342, %v3338
  %v3803 = vpack.c.b16 %v3343, %v3339
  %v3804 = vpack.c.b16 %v3344, %v3340
  %v3805 = vpack.c.b16 %v3345, %v3341
  %v3806 = vpack.c.b16 %v3350, %v3346
  %v3807 = vpack.c.b16 %v3351, %v3347
  %v3808 = vpack.c.b16 %v3352, %v3348
  %v3809 = vpack.c.b16 %v3353, %v3349
  %v3810 = vpack.c.b16 %v3358, %v3354
  %v3811 = vpack.c.b16 %v3359, %v3355
  %v3812 = vpack.c.b16 %v3360, %v3356
  %v3813 = vpack.c.b16 %v3361, %v3357
  %v3814 = vpack.c.b16 %v3366, %v3362
  %v3815 = vpack.c.b16 %v3367, %v3363
  %v3816 = vpack.c.b16 %v3368, %v3364
  %v3817 = vpack.c.b16 %v3369, %v3365
  %v3818 = vpack.c.b16 %v3374, %v3370
  %v3819 = vpack.c.b16 %v3375, %v3371
  %v3820 = vpack.c.b16 %v3376, %v3372
  %v3821 = vpack.c.b16 %v3377, %v3373
  %v3822 = vpack.c.b16 %v3382, %v3378
  %v3823 = vpack.c.b16 %v3383, %v3379
  %v3824 = vpack.c.b16 %v3384, %v3380
  %v3825 = vpack.c.b16 %v3385, %v3381
  %v3826 = vpack.c.b16 %v3390, %v3386
  %v3827 = vpack.c.b16 %v3391, %v3387
  %v3828 = vpack.c.b16 %v3392, %v3388
  %v3829 = vpack.c.b16 %v3393, %v3389
  %v3830 = vpack.c.b16 %v3398, %v3394
  %v3831 = vpack.c.b16 %v3399, %v3395
  %v3832 = vpack.c.b16 %v3400, %v3396
  %v3833 = vpack.c.b16 %v3401, %v3397
  %v3834 = vpack.c.b16 %v3406, %v3402
  %v3835 = vpack.c.b16 %v3407, %v3403
  %v3836 = vpack.c.b16 %v3408, %v3404
  %v3837 = vpack.c.b16 %v3409, %v3405
  %v3838 = vpack.c.b16 %v3414, %v3410
  %v3839 = vpack.c.b16 %v3415, %v3411
  %v3840 = vpack.c.b16 %v3416, %v3412
  %v3841 = vpack.c.b16 %v3417, %v3413
  %v3842 = vpack.c.b16 %v3422, %v3418
  %v3843 = vpack.c.b16 %v3423, %v3419
  %v3844 = vpack.c.b16 %v3424, %v3420
  %v3845 = vpack.c.b16 %v3425, %v3421
  %v3846 = vpack.c.b16 %v3430, %v3426
  %v3847 = vpack.c.b16 %v3431, %v3427
  %v3848 = vpack.c.b16 %v3432, %v3428
  %v3849 = vpack.c.b16 %v3433, %v3429
  %v3850 = vpack.c.b16 %v3438, %v3434
  %v3851 = vpack.c.b16 %v3439, %v3435
  %v3852 = vpack.c.b16 %v3440, %v3436
  %v3853 = vpack.c.b16 %v3441, %v3437
  %v3854 = vpack.c.b16 %v3446, %v3442
  %v3855 = vpack.c.b16 %v3447, %v3443
  %v3856 = vpack.c.b16 %v3448, %v3444
  %v3857 = vpack.c.b16 %v3449, %v3445
  %v3858 = vpack.c.b16 %v3454, %v3450
  %v3859 = vpack.c.b16 %v3455, %v3451
  %v3860 = vpack.c.b16 %v3456, %v3452
  %v3861 = vpack.c.b16 %v3457, %v3453
  %v3862 = vpack.c.b16 %v3462, %v3458
  %v3863 = vpack.c.b16 %v3463, %v3459
  %v3864 = vpack.c.b16 %v3464, %v3460
  %v3865 = vpack.c.b16 %v3465, %v3461
  %v3866 = vpack.c.b16 %v3470, %v3466
  %v3867 = vpack.c.b16 %v3471, %v3467
  %v3868 = vpack.c.b16 %v3472, %v3468
  %v3869 = vpack.c.b16 %v3473, %v3469
  %v3870 = vpack.c.b16 %v3478, %v3474
  %v3871 = vpack.c.b16 %v3479, %v3475
  %v3872 = vpack.c.b16 %v3480, %v3476
  %v3873 = vpack.c.b16 %v3481, %v3477
  %v3874 = vpack.c.b16 %v3486, %v3482
  %v3875 = vpack.c.b16 %v3487, %v3483
  %v3876 = vpack.c.b16 %v3488, %v3484
  %v3877 = vpack.c.b16 %v3489, %v3485
  %v3878 = vpack.c.b16 %v3494, %v3490
  %v3879 = vpack.c.b16 %v3495, %v3491
  %v3880 = vpack.c.b16 %v3496, %v3492
  %v3881 = vpack.c.b16 %v3497, %v3493
  %v3882 = vpack.c.b16 %v3502, %v3498
  %v3883 = vpack.c.b16 %v3503, %v3499
  %v3884 = vpack.c.b16 %v3504, %v3500
  %v3885 = vpack.c.b16 %v3505, %v3501
  %v3886 = vpack.c.b16 %v3510, %v3506
  %v3887 = vpack.c.b16 %v3511, %v3507
  %v3888 = vpack.c.b16 %v3512, %v3508
  %v3889 = vpack.c.b16 %v3513, %v3509
  %v3890 = vpack.c.b16 %v3518, %v3514
  %v3891 = vpack.c.b16 %v3519, %v3515
  %v3892 = vpack.c.b16 %v3520, %v3516
  %v3893 = vpack.c.b16 %v3521, %v3517
  %v3894 = vpack.c.b16 %v3526, %v3522
  %v3895 = vpack.c.b16 %v3527, %v3523
  %v3896 = vpack.c.b16 %v3528, %v3524
  %v3897 = vpack.c.b16 %v3529, %v3525
  %v3898 = vpack.c.b16 %v3534, %v3530
  %v3899 = vpack.c.b16 %v3535, %v3531
  %v3900 = vpack.c.b16 %v3536, %v3532
  %v3901 = vpack.c.b16 %v3537, %v3533
  %v3902 = vpack.c.b16 %v3542, %v3538
  %v3903 = vpack.c.b16 %v3543, %v3539
  %v3904 = vpack.c.b16 %v3544, %v3540
  %v3905 = vpack.c.b16 %v3545, %v3541
  %v3906 = vpack.c.b16 %v3550, %v3546
  %v3907 = vpack.c.b16 %v3551, %v3547
  %v3908 = vpack.c.b16 %v3552, %v3548
  %v3909 = vpack.c.b16 %v3553, %v3549
  %v3910 = vpack.c.b16 %v3558, %v3554
  %v3911 = vpack.c.b16 %v3559, %v3555
  %v3912 = vpack.c.b16 %v3560, %v3556
  %v3913 = vpack.c.b16 %v3561, %v3557
  %v3914 = vpack.c.b16 %v3566, %v3562
  %v3915 = vpack.c.b16 %v3567, %v3563
  %v3916 = vpack.c.b16 %v3568, %v3564
  %v3917 = vpack.c.b16 %v3569, %v3565
  %v3918 = vpack.c.b16 %v3574, %v3570
  %v3919 = vpack.c.b16 %v3575, %v3571
  %v3920 = vpack.c.b16 %v3576, %v3572
  %v3921 = vpack.c.b16 %v3577, %v3573
  %v3922 = vpack.c.b16 %v3582, %v3578
  %v3923 = vpack.c.b16 %v3583, %v3579
  %v3924 = vpack.c.b16 %v3584, %v3580
  %v3925 = vpack.c.b16 %v3585, %v3581
  %v3926 = vpack.c.b16 %v3590, %v3586
  %v3927 = vpack.c.b16 %v3591, %v3587
  %v3928 = vpack.c.b16 %v3592, %v3588
  %v3929 = vpack.c.b16 %v3593, %v3589
  %v3930 = vpack.c.b16 %v3598, %v3594
  %v3931 = vpack.c.b16 %v3599, %v3595
  %v3932 = vpack.c.b16 %v3600, %v3596
  %v3933 = vpack.c.b16 %v3601, %v3597
  %v3934 = vpack.c.b16 %v3606, %v3602
  %v3935 = vpack.c.b16 %v3607, %v3603
  %v3936 = vpack.c.b16 %v3608, %v3604
  %v3937 = vpack.c.b16 %v3609, %v3605
  %v3938 = vpack.c.b16 %v3614, %v3610
  %v3939 = vpack.c.b16 %v3615, %v3611
  %v3940 = vpack.c.b16 %v3616, %v3612
  %v3941 = vpack.c.b16 %v3617, %v3613
  %v3942 = vpack.c.b16 %v3622, %v3618
  %v3943 = vpack.c.b16 %v3623, %v3619
  %v3944 = vpack.c.b16 %v3624, %v3620
  %v3945 = vpack.c.b16 %v3625, %v3621
  %v3946 = vpack.c.b16 %v3630, %v3626
  %v3947 = vpack.c.b16 %v3631, %v3627
  %v3948 = vpack.c.b16 %v3632, %v3628
  %v3949 = vpack.c.b16 %v3633, %v3629
  %v3950 = vpack.c.b16 %v3638, %v3634
  %v3951 = vpack.c.b16 %v3639, %v3635
  %v3952 = vpack.c.b16 %v3640, %v3636
  %v3953 = vpack.c.b16 %v3641, %v3637
  %v3954 = vpack.c.b16 %v3646, %v3642
  %v3955 = vpack.c.b16 %v3647, %v3643
  %v3956 = vpack.c.b16 %v3648, %v3644
  %v3957 = vpack.c.b16 %v3649, %v3645
  %v3958 = vpack.c.b16 %v3654, %v3650
  %v3959 = vpack.c.b16 %v3655, %v3651
  %v3960 = vpack.c.b16 %v3656, %v3652
  %v3961 = vpack.c.b16 %v3657, %v3653
  %v3962 = vpack.c.b16 %v3662, %v3658
  %v3963 = vpack.c.b16 %v3663, %v3659
  %v3964 = vpack.c.b16 %v3664, %v3660
  %v3965 = vpack.c.b16 %v3665, %v3661
  %v3966 = vpack.c.b16 %v3670, %v3666
  %v3967 = vpack.c.b16 %v3671, %v3667
  %v3968 = vpack.c.b16 %v3672, %v3668
  %v3969 = vpack.c.b16 %v3673, %v3669
  %v3970 = vpack.c.b16 %v3678, %v3674
  %v3971 = vpack.c.b16 %v3679, %v3675
  %v3972 = vpack.c.b16 %v3680, %v3676
  %v3973 = vpack.c.b16 %v3681, %v3677
  %v3974 = vpack.c.b16 %v3686, %v3682
  %v3975 = vpack.c.b16 %v3687, %v3683
  %v3976 = vpack.c.b16 %v3688, %v3684
  %v3977 = vpack.c.b16 %v3689, %v3685
  %v3978 = vpack.c.b16 %v3694, %v3690
  %v3979 = vpack.c.b16 %v3695, %v3691
  %v3980 = vpack.c.b16 %v3696, %v3692
  %v3981 = vpack.c.b16 %v3697, %v3693
  %v3982 = vpack.c.b16 %v3702, %v3698
  %v3983 = vpack.c.b16 %v3703, %v3699
  %v3984 = vpack.c.b16 %v3704, %v3700
  %v3985 = vpack.c.b16 %v3705, %v3701
  %v3986 = vpack.c.b16 %v3710, %v3706
  %v3987 = vpack.c.b16 %v3711, %v3707
  %v3988 = vpack.c.b16 %v3712, %v3708
  %v3989 = vpack.c.b16 %v3713, %v3709
  %v3990 = vpack.c.b16 %v3718, %v3714
  %v3991 = vpack.c.b16 %v3719, %v3715
  %v3992 = vpack.c.b16 %v3720, %v3716
  %v3993 = vpack.c.b16 %v3721, %v3717
  %v3994 = vpack.c.b16 %v3726, %v3722
  %v3995 = vpack.c.b16 %v3727, %v3723
  %v3996 = vpack.c.b16 %v3728, %v3724
  %v3997 = vpack.c.b16 %v3729, %v3725
  %v3998 = vpack.c.b16 %v3734, %v3730
  %v3999 = vpack.c.b16 %v3735, %v3731
  %v4000 = vpack.c.b16 %v3736, %v3732
  %v4001 = vpack.c.b16 %v3737, %v3733
  %v4002 = vpack.c.b16 %v3742, %v3738
  %v4003 = vpack.c.b16 %v3743, %v3739
  %v4004 = vpack.c.b16 %v3744, %v3740
  %v4005 = vpack.c.b16 %v3745, %v3741
  %v4006 = vpack.c.b16 %v3750, %v3746
  %v4007 = vpack.c.b16 %v3751, %v3747
  %v4008 = vpack.c.b16 %v3752, %v3748
  %v4009 = vpack.c.b16 %v3753, %v3749
  %4266 = vmatprep.subr.bf16.mxu0 %v3755
  %4267 = vmatpush1.bf16.msra.mxu0 %v3754
  %4268 = vmatprep.subr.bf16.mxu0 %v3759
  %4269 = vmatpush1.bf16.msra.mxu0 %v3758
  %4270 = vmatprep.subr.bf16.mxu0 %v3763
  %4271 = vmatpush1.bf16.msra.mxu0 %v3762
  %4272 = vmatprep.subr.bf16.mxu0 %v3767
  %4273 = vmatpush1.bf16.msra.mxu0 %v3766
  %4274 = vmatprep.subr.bf16.mxu0 %v3771
  %4275 = vmatpush1.bf16.msra.mxu0 %v3770
  %4276 = vmatprep.subr.bf16.mxu0 %v3775
  %4277 = vmatpush1.bf16.msra.mxu0 %v3774
  %4278 = vmatprep.subr.bf16.mxu0 %v3779
  %4279 = vmatpush1.bf16.msra.mxu0 %v3778
  %4280 = vmatprep.subr.bf16.mxu0 %v3783
  %4281 = vmatpush1.bf16.msra.mxu0 %v3782
  %4282 = vmatprep.subr.bf16.mxu0 %v3787
  %4283 = vmatpush1.bf16.msra.mxu0 %v3786
  %4284 = vmatprep.subr.bf16.mxu0 %v3791
  %4285 = vmatpush1.bf16.msra.mxu0 %v3790
  %4286 = vmatprep.subr.bf16.mxu0 %v3795
  %4287 = vmatpush1.bf16.msra.mxu0 %v3794
  %4288 = vmatprep.subr.bf16.mxu0 %v3799
  %4289 = vmatpush1.bf16.msra.mxu0 %v3798
  %4290 = vmatprep.subr.bf16.mxu0 %v3803
  %4291 = vmatpush1.bf16.msra.mxu0 %v3802
  %4292 = vmatprep.subr.bf16.mxu0 %v3807
  %4293 = vmatpush1.bf16.msra.mxu0 %v3806
  %4294 = vmatprep.subr.bf16.mxu0 %v3811
  %4295 = vmatpush1.bf16.msra.mxu0 %v3810
  %4296 = vmatprep.subr.bf16.mxu0 %v3815
  %4297 = vmatpush1.bf16.msra.mxu0 %v3814
  %4298 = vmatprep.mubr.bf16.mxu0 %v2701
  %4299 = vmatmul.mubr.bf16.gmra.mrb[0].mxu0 %v2700
  %v4300 = vpop.f32.mrb[0].mxu0
  %v4301 = vadd.f32 %v2969, %v4300
  %v4302 = vpop.f32.mrb[0].mxu0
  %v4303 = vadd.f32 %v2973, %v4302
  %v4304 = vpop.f32.mrb[0].mxu0
  %v4305 = vpop.f32.mrb[0].mxu0
  %4306 = vdwg.mxu0
  %4307 = vmatprep.subr.bf16.mxu0 %v3819
  %4308 = vmatpush1.bf16.msra.mxu0 %v3818
  %4309 = vmatprep.subr.bf16.mxu0 %v3823
  %4310 = vmatpush1.bf16.msra.mxu0 %v3822
  %4311 = vmatprep.subr.bf16.mxu0 %v3827
  %4312 = vmatpush1.bf16.msra.mxu0 %v3826
  %4313 = vmatprep.subr.bf16.mxu0 %v3831
  %4314 = vmatpush1.bf16.msra.mxu0 %v3830
  %4315 = vmatprep.subr.bf16.mxu0 %v3835
  %4316 = vmatpush1.bf16.msra.mxu0 %v3834
  %4317 = vmatprep.subr.bf16.mxu0 %v3839
  %4318 = vmatpush1.bf16.msra.mxu0 %v3838
  %4319 = vmatprep.subr.bf16.mxu0 %v3843
  %4320 = vmatpush1.bf16.msra.mxu0 %v3842
  %4321 = vmatprep.subr.bf16.mxu0 %v3847
  %4322 = vmatpush1.bf16.msra.mxu0 %v3846
  %4323 = vmatprep.subr.bf16.mxu0 %v3851
  %4324 = vmatpush1.bf16.msra.mxu0 %v3850
  %4325 = vmatprep.subr.bf16.mxu0 %v3855
  %4326 = vmatpush1.bf16.msra.mxu0 %v3854
  %4327 = vmatprep.subr.bf16.mxu0 %v3859
  %4328 = vmatpush1.bf16.msra.mxu0 %v3858
  %4329 = vmatprep.subr.bf16.mxu0 %v3863
  %4330 = vmatpush1.bf16.msra.mxu0 %v3862
  %4331 = vmatprep.subr.bf16.mxu0 %v3867
  %4332 = vmatpush1.bf16.msra.mxu0 %v3866
  %4333 = vmatprep.subr.bf16.mxu0 %v3871
  %4334 = vmatpush1.bf16.msra.mxu0 %v3870
  %4335 = vmatprep.subr.bf16.mxu0 %v3875
  %4336 = vmatpush1.bf16.msra.mxu0 %v3874
  %4337 = vmatprep.subr.bf16.mxu0 %v3879
  %4338 = vmatpush1.bf16.msra.mxu0 %v3878
  %4339 = vmatprep.mubr.bf16.mxu0 %v2703
  %4340 = vmatmul.mubr.bf16.gmra.mrb[0].mxu0 %v2702
  %v4341 = vpop.f32.mrb[0].mxu0
  %v4342 = vadd.f32 %v4301, %v4341
  %v4343 = vpop.f32.mrb[0].mxu0
  %v4344 = vadd.f32 %v4303, %v4343
  %v4345 = vpop.f32.mrb[0].mxu0
  %v4346 = vpop.f32.mrb[0].mxu0
  %4347 = vdwg.mxu0
  %4348 = vmatprep.subr.bf16.mxu0 %v3883
  %4349 = vmatpush1.bf16.msra.mxu0 %v3882
  %4350 = vmatprep.subr.bf16.mxu0 %v3887
  %4351 = vmatpush1.bf16.msra.mxu0 %v3886
  %4352 = vmatprep.subr.bf16.mxu0 %v3891
  %4353 = vmatpush1.bf16.msra.mxu0 %v3890
  %4354 = vmatprep.subr.bf16.mxu0 %v3895
  %4355 = vmatpush1.bf16.msra.mxu0 %v3894
  %4356 = vmatprep.subr.bf16.mxu0 %v3899
  %4357 = vmatpush1.bf16.msra.mxu0 %v3898
  %4358 = vmatprep.subr.bf16.mxu0 %v3903
  %4359 = vmatpush1.bf16.msra.mxu0 %v3902
  %4360 = vmatprep.subr.bf16.mxu0 %v3907
  %4361 = vmatpush1.bf16.msra.mxu0 %v3906
  %4362 = vmatprep.subr.bf16.mxu0 %v3911
  %4363 = vmatpush1.bf16.msra.mxu0 %v3910
  %4364 = vmatprep.subr.bf16.mxu0 %v3915
  %4365 = vmatpush1.bf16.msra.mxu0 %v3914
  %4366 = vmatprep.subr.bf16.mxu0 %v3919
  %4367 = vmatpush1.bf16.msra.mxu0 %v3918
  %4368 = vmatprep.subr.bf16.mxu0 %v3923
  %4369 = vmatpush1.bf16.msra.mxu0 %v3922
  %4370 = vmatprep.subr.bf16.mxu0 %v3927
  %4371 = vmatpush1.bf16.msra.mxu0 %v3926
  %4372 = vmatprep.subr.bf16.mxu0 %v3931
  %4373 = vmatpush1.bf16.msra.mxu0 %v3930
  %4374 = vmatprep.subr.bf16.mxu0 %v3935
  %4375 = vmatpush1.bf16.msra.mxu0 %v3934
  %4376 = vmatprep.subr.bf16.mxu0 %v3939
  %4377 = vmatpush1.bf16.msra.mxu0 %v3938
  %4378 = vmatprep.subr.bf16.mxu0 %v3943
  %4379 = vmatpush1.bf16.msra.mxu0 %v3942
  %4380 = vmatprep.mubr.bf16.mxu0 %v2705
  %4381 = vmatmul.mubr.bf16.gmra.mrb[0].mxu0 %v2704
  %v4382 = vpop.f32.mrb[0].mxu0
  %v4383 = vadd.f32 %v4342, %v4382
  %v4384 = vpop.f32.mrb[0].mxu0
  %v4385 = vadd.f32 %v4344, %v4384
  %v4386 = vpop.f32.mrb[0].mxu0
  %v4387 = vpop.f32.mrb[0].mxu0
  %4388 = vdwg.mxu0
  %4389 = vmatprep.subr.bf16.mxu0 %v3947
  %4390 = vmatpush1.bf16.msra.mxu0 %v3946
  %4391 = vmatprep.subr.bf16.mxu0 %v3951
  %4392 = vmatpush1.bf16.msra.mxu0 %v3950
  %4393 = vmatprep.subr.bf16.mxu0 %v3955
  %4394 = vmatpush1.bf16.msra.mxu0 %v3954
  %4395 = vmatprep.subr.bf16.mxu0 %v3959
  %4396 = vmatpush1.bf16.msra.mxu0 %v3958
  %4397 = vmatprep.subr.bf16.mxu0 %v3963
  %4398 = vmatpush1.bf16.msra.mxu0 %v3962
  %4399 = vmatprep.subr.bf16.mxu0 %v3967
  %4400 = vmatpush1.bf16.msra.mxu0 %v3966
  %4401 = vmatprep.subr.bf16.mxu0 %v3971
  %4402 = vmatpush1.bf16.msra.mxu0 %v3970
  %4403 = vmatprep.subr.bf16.mxu0 %v3975
  %4404 = vmatpush1.bf16.msra.mxu0 %v3974
  %4405 = vmatprep.subr.bf16.mxu0 %v3979
  %4406 = vmatpush1.bf16.msra.mxu0 %v3978
  %4407 = vmatprep.subr.bf16.mxu0 %v3983
  %4408 = vmatpush1.bf16.msra.mxu0 %v3982
  %4409 = vmatprep.subr.bf16.mxu0 %v3987
  %4410 = vmatpush1.bf16.msra.mxu0 %v3986
  %4411 = vmatprep.subr.bf16.mxu0 %v3991
  %4412 = vmatpush1.bf16.msra.mxu0 %v3990
  %4413 = vmatprep.subr.bf16.mxu0 %v3995
  %4414 = vmatpush1.bf16.msra.mxu0 %v3994
  %4415 = vmatprep.subr.bf16.mxu0 %v3999
  %4416 = vmatpush1.bf16.msra.mxu0 %v3998
  %4417 = vmatprep.subr.bf16.mxu0 %v4003
  %4418 = vmatpush1.bf16.msra.mxu0 %v4002
  %4419 = vmatprep.subr.bf16.mxu0 %v4007
  %4420 = vmatpush1.bf16.msra.mxu0 %v4006
  %4421 = vmatprep.mubr.bf16.mxu0 %v2707
  %4422 = vmatmul.mubr.bf16.gmra.mrb[0].mxu0 %v2706
  %v4423 = vpop.f32.mrb[0].mxu0
  %v4424 = vadd.f32 %v4383, %v4423
  %v4425 = vpop.f32.mrb[0].mxu0
  %v4426 = vadd.f32 %v4385, %v4425
  %v4427 = vpop.f32.mrb[0].mxu0
  %v4428 = vpop.f32.mrb[0].mxu0
  %4429 = vdwg.mxu0
  %4430 = vmatprep.subr.bf16.mxu0 %v3757
  %4431 = vmatpush1.bf16.msra.mxu0 %v3756
  %4432 = vmatprep.subr.bf16.mxu0 %v3761
  %4433 = vmatpush1.bf16.msra.mxu0 %v3760
  %4434 = vmatprep.subr.bf16.mxu0 %v3765
  %4435 = vmatpush1.bf16.msra.mxu0 %v3764
  %4436 = vmatprep.subr.bf16.mxu0 %v3769
  %4437 = vmatpush1.bf16.msra.mxu0 %v3768
  %4438 = vmatprep.subr.bf16.mxu0 %v3773
  %4439 = vmatpush1.bf16.msra.mxu0 %v3772
  %4440 = vmatprep.subr.bf16.mxu0 %v3777
  %4441 = vmatpush1.bf16.msra.mxu0 %v3776
  %4442 = vmatprep.subr.bf16.mxu0 %v3781
  %4443 = vmatpush1.bf16.msra.mxu0 %v3780
  %4444 = vmatprep.subr.bf16.mxu0 %v3785
  %4445 = vmatpush1.bf16.msra.mxu0 %v3784
  %4446 = vmatprep.subr.bf16.mxu0 %v3789
  %4447 = vmatpush1.bf16.msra.mxu0 %v3788
  %4448 = vmatprep.subr.bf16.mxu0 %v3793
  %4449 = vmatpush1.bf16.msra.mxu0 %v3792
  %4450 = vmatprep.subr.bf16.mxu0 %v3797
  %4451 = vmatpush1.bf16.msra.mxu0 %v3796
  %4452 = vmatprep.subr.bf16.mxu0 %v3801
  %4453 = vmatpush1.bf16.msra.mxu0 %v3800
  %4454 = vmatprep.subr.bf16.mxu0 %v3805
  %4455 = vmatpush1.bf16.msra.mxu0 %v3804
  %4456 = vmatprep.subr.bf16.mxu0 %v3809
  %4457 = vmatpush1.bf16.msra.mxu0 %v3808
  %4458 = vmatprep.subr.bf16.mxu0 %v3813
  %4459 = vmatpush1.bf16.msra.mxu0 %v3812
  %4460 = vmatprep.subr.bf16.mxu0 %v3817
  %4461 = vmatpush1.bf16.msra.mxu0 %v3816
  %4462 = vmatprep.mubr.bf16.mxu0 %v2701
  %4463 = vmatmul.mubr.bf16.gmra.mrb[0].mxu0 %v2700
  %v4464 = vpop.f32.mrb[0].mxu0
  %v4465 = vadd.f32 %v2977, %v4464
  %v4466 = vpop.f32.mrb[0].mxu0
  %v4467 = vadd.f32 %v2981, %v4466
  %v4468 = vpop.f32.mrb[0].mxu0
  %v4469 = vpop.f32.mrb[0].mxu0
  %4470 = vdwg.mxu0
  %4471 = vmatprep.subr.bf16.mxu0 %v3821
  %4472 = vmatpush1.bf16.msra.mxu0 %v3820
  %4473 = vmatprep.subr.bf16.mxu0 %v3825
  %4474 = vmatpush1.bf16.msra.mxu0 %v3824
  %4475 = vmatprep.subr.bf16.mxu0 %v3829
  %4476 = vmatpush1.bf16.msra.mxu0 %v3828
  %4477 = vmatprep.subr.bf16.mxu0 %v3833
  %4478 = vmatpush1.bf16.msra.mxu0 %v3832
  %4479 = vmatprep.subr.bf16.mxu0 %v3837
  %4480 = vmatpush1.bf16.msra.mxu0 %v3836
  %4481 = vmatprep.subr.bf16.mxu0 %v3841
  %4482 = vmatpush1.bf16.msra.mxu0 %v3840
  %4483 = vmatprep.subr.bf16.mxu0 %v3845
  %4484 = vmatpush1.bf16.msra.mxu0 %v3844
  %4485 = vmatprep.subr.bf16.mxu0 %v3849
  %4486 = vmatpush1.bf16.msra.mxu0 %v3848
  %4487 = vmatprep.subr.bf16.mxu0 %v3853
  %4488 = vmatpush1.bf16.msra.mxu0 %v3852
  %4489 = vmatprep.subr.bf16.mxu0 %v3857
  %4490 = vmatpush1.bf16.msra.mxu0 %v3856
  %4491 = vmatprep.subr.bf16.mxu0 %v3861
  %4492 = vmatpush1.bf16.msra.mxu0 %v3860
  %4493 = vmatprep.subr.bf16.mxu0 %v3865
  %4494 = vmatpush1.bf16.msra.mxu0 %v3864
  %4495 = vmatprep.subr.bf16.mxu0 %v3869
  %4496 = vmatpush1.bf16.msra.mxu0 %v3868
  %4497 = vmatprep.subr.bf16.mxu0 %v3873
  %4498 = vmatpush1.bf16.msra.mxu0 %v3872
  %4499 = vmatprep.subr.bf16.mxu0 %v3877
  %4500 = vmatpush1.bf16.msra.mxu0 %v3876
  %4501 = vmatprep.subr.bf16.mxu0 %v3881
  %4502 = vmatpush1.bf16.msra.mxu0 %v3880
  %4503 = vmatprep.mubr.bf16.mxu0 %v2703
  %4504 = vmatmul.mubr.bf16.gmra.mrb[0].mxu0 %v2702
  %v4505 = vpop.f32.mrb[0].mxu0
  %v4506 = vadd.f32 %v4465, %v4505
  %v4507 = vpop.f32.mrb[0].mxu0
  %v4508 = vadd.f32 %v4467, %v4507
  %v4509 = vpop.f32.mrb[0].mxu0
  %v4510 = vpop.f32.mrb[0].mxu0
  %4511 = vdwg.mxu0
  %4512 = vmatprep.subr.bf16.mxu0 %v3885
  %4513 = vmatpush1.bf16.msra.mxu0 %v3884
  %4514 = vmatprep.subr.bf16.mxu0 %v3889
  %4515 = vmatpush1.bf16.msra.mxu0 %v3888
  %4516 = vmatprep.subr.bf16.mxu0 %v3893
  %4517 = vmatpush1.bf16.msra.mxu0 %v3892
  %4518 = vmatprep.subr.bf16.mxu0 %v3897
  %4519 = vmatpush1.bf16.msra.mxu0 %v3896
  %4520 = vmatprep.subr.bf16.mxu0 %v3901
  %4521 = vmatpush1.bf16.msra.mxu0 %v3900
  %4522 = vmatprep.subr.bf16.mxu0 %v3905
  %4523 = vmatpush1.bf16.msra.mxu0 %v3904
  %4524 = vmatprep.subr.bf16.mxu0 %v3909
  %4525 = vmatpush1.bf16.msra.mxu0 %v3908
  %4526 = vmatprep.subr.bf16.mxu0 %v3913
  %4527 = vmatpush1.bf16.msra.mxu0 %v3912
  %4528 = vmatprep.subr.bf16.mxu0 %v3917
  %4529 = vmatpush1.bf16.msra.mxu0 %v3916
  %4530 = vmatprep.subr.bf16.mxu0 %v3921
  %4531 = vmatpush1.bf16.msra.mxu0 %v3920
  %4532 = vmatprep.subr.bf16.mxu0 %v3925
  %4533 = vmatpush1.bf16.msra.mxu0 %v3924
  %4534 = vmatprep.subr.bf16.mxu0 %v3929
  %4535 = vmatpush1.bf16.msra.mxu0 %v3928
  %4536 = vmatprep.subr.bf16.mxu0 %v3933
  %4537 = vmatpush1.bf16.msra.mxu0 %v3932
  %4538 = vmatprep.subr.bf16.mxu0 %v3937
  %4539 = vmatpush1.bf16.msra.mxu0 %v3936
  %4540 = vmatprep.subr.bf16.mxu0 %v3941
  %4541 = vmatpush1.bf16.msra.mxu0 %v3940
  %4542 = vmatprep.subr.bf16.mxu0 %v3945
  %4543 = vmatpush1.bf16.msra.mxu0 %v3944
  %4544 = vmatprep.mubr.bf16.mxu0 %v2705
  %4545 = vmatmul.mubr.bf16.gmra.mrb[0].mxu0 %v2704
  %v4546 = vpop.f32.mrb[0].mxu0
  %v4547 = vadd.f32 %v4506, %v4546
  %v4548 = vpop.f32.mrb[0].mxu0
  %v4549 = vadd.f32 %v4508, %v4548
  %v4550 = vpop.f32.mrb[0].mxu0
  %v4551 = vpop.f32.mrb[0].mxu0
  %4552 = vdwg.mxu0
  %4553 = vmatprep.subr.bf16.mxu0 %v3949
  %4554 = vmatpush1.bf16.msra.mxu0 %v3948
  %4555 = vmatprep.subr.bf16.mxu0 %v3953
  %4556 = vmatpush1.bf16.msra.mxu0 %v3952
  %4557 = vmatprep.subr.bf16.mxu0 %v3957
  %4558 = vmatpush1.bf16.msra.mxu0 %v3956
  %4559 = vmatprep.subr.bf16.mxu0 %v3961
  %4560 = vmatpush1.bf16.msra.mxu0 %v3960
  %4561 = vmatprep.subr.bf16.mxu0 %v3965
  %4562 = vmatpush1.bf16.msra.mxu0 %v3964
  %4563 = vmatprep.subr.bf16.mxu0 %v3969
  %4564 = vmatpush1.bf16.msra.mxu0 %v3968
  %4565 = vmatprep.subr.bf16.mxu0 %v3973
  %4566 = vmatpush1.bf16.msra.mxu0 %v3972
  %4567 = vmatprep.subr.bf16.mxu0 %v3977
  %4568 = vmatpush1.bf16.msra.mxu0 %v3976
  %4569 = vmatprep.subr.bf16.mxu0 %v3981
  %4570 = vmatpush1.bf16.msra.mxu0 %v3980
  %4571 = vmatprep.subr.bf16.mxu0 %v3985
  %4572 = vmatpush1.bf16.msra.mxu0 %v3984
  %4573 = vmatprep.subr.bf16.mxu0 %v3989
  %4574 = vmatpush1.bf16.msra.mxu0 %v3988
  %4575 = vmatprep.subr.bf16.mxu0 %v3993
  %4576 = vmatpush1.bf16.msra.mxu0 %v3992
  %4577 = vmatprep.subr.bf16.mxu0 %v3997
  %4578 = vmatpush1.bf16.msra.mxu0 %v3996
  %4579 = vmatprep.subr.bf16.mxu0 %v4001
  %4580 = vmatpush1.bf16.msra.mxu0 %v4000
  %4581 = vmatprep.subr.bf16.mxu0 %v4005
  %4582 = vmatpush1.bf16.msra.mxu0 %v4004
  %4583 = vmatprep.subr.bf16.mxu0 %v4009
  %4584 = vmatpush1.bf16.msra.mxu0 %v4008
  %4585 = vmatprep.mubr.bf16.mxu0 %v2707
  %4586 = vmatmul.mubr.bf16.gmra.mrb[0].mxu0 %v2706
  %v4587 = vpop.f32.mrb[0].mxu0
  %v4588 = vadd.f32 %v4547, %v4587
  %v4589 = vpop.f32.mrb[0].mxu0
  %v4590 = vadd.f32 %v4549, %v4589
  %v4591 = vpop.f32.mrb[0].mxu0
  %v4592 = vpop.f32.mrb[0].mxu0
  %4593 = vdwg.mxu0
  %v4594 = vmax.f32 %v4424, 0.0
  %v4595 = vmax.f32 %v4426, 0.0
  %v4596 = vmax.f32 %v4588, 0.0
  %v4597 = vmax.f32 %v4590, 0.0
  %v4598 = vpack.c.bf16 %v4594, %v4594
  %v4599 = vpack.c.bf16 %v4595, %v4595
  %v4600 = vpack.c.bf16 %v4596, %v4596
  %v4601 = vpack.c.bf16 %v4597, %v4597
  %v4602 = vld [vmem:[%s9] sm:$0xf]
  %v4603 = vld [vmem:[%s9 + $0x4] sm:$0xf]
  %v4604 = vld [vmem:[%s9 + $0x8] sm:$0xf]
  %v4605 = vld [vmem:[%s9 + $0xc] sm:$0xf]
  %v4606 = vld [vmem:[%s9 + $0x10] sm:$0xf]
  %v4607 = vld [vmem:[%s9 + $0x14] sm:$0xf]
  %v4608 = vld [vmem:[%s9 + $0x18] sm:$0xf]
  %v4609 = vld [vmem:[%s9 + $0x1c] sm:$0xf]
  %v4610 = vld [vmem:[%s9 + $0x20] sm:$0xf]
  %v4611 = vld [vmem:[%s9 + $0x24] sm:$0xf]
  %v4612 = vld [vmem:[%s9 + $0x28] sm:$0xf]
  %v4613 = vld [vmem:[%s9 + $0x2c] sm:$0xf]
  %v4614 = vld [vmem:[%s9 + $0x30] sm:$0xf]
  %v4615 = vld [vmem:[%s9 + $0x34] sm:$0xf]
  %v4616 = vld [vmem:[%s9 + $0x38] sm:$0xf]
  %v4617 = vld [vmem:[%s9 + $0x3c] sm:$0xf]
  %v4618 = vld [vmem:[%s9 + $0x40] sm:$0xf]
  %v4619 = vld [vmem:[%s9 + $0x44] sm:$0xf]
  %v4620 = vld [vmem:[%s9 + $0x48] sm:$0xf]
  %v4621 = vld [vmem:[%s9 + $0x4c] sm:$0xf]
  %v4622 = vld [vmem:[%s9 + $0x50] sm:$0xf]
  %v4623 = vld [vmem:[%s9 + $0x54] sm:$0xf]
  %v4624 = vld [vmem:[%s9 + $0x58] sm:$0xf]
  %v4625 = vld [vmem:[%s9 + $0x5c] sm:$0xf]
  %v4626 = vld [vmem:[%s9 + $0x60] sm:$0xf]
  %v4627 = vld [vmem:[%s9 + $0x64] sm:$0xf]
  %v4628 = vld [vmem:[%s9 + $0x68] sm:$0xf]
  %v4629 = vld [vmem:[%s9 + $0x6c] sm:$0xf]
  %v4630 = vld [vmem:[%s9 + $0x70] sm:$0xf]
  %v4631 = vld [vmem:[%s9 + $0x74] sm:$0xf]
  %v4632 = vld [vmem:[%s9 + $0x78] sm:$0xf]
  %v4633 = vld [vmem:[%s9 + $0x7c] sm:$0xf]
  %v4634 = vld [vmem:[%s9 + $0x80] sm:$0xf]
  %v4635 = vld [vmem:[%s9 + $0x84] sm:$0xf]
  %v4636 = vld [vmem:[%s9 + $0x88] sm:$0xf]
  %v4637 = vld [vmem:[%s9 + $0x8c] sm:$0xf]
  %v4638 = vld [vmem:[%s9 + $0x90] sm:$0xf]
  %v4639 = vld [vmem:[%s9 + $0x94] sm:$0xf]
  %v4640 = vld [vmem:[%s9 + $0x98] sm:$0xf]
  %v4641 = vld [vmem:[%s9 + $0x9c] sm:$0xf]
  %v4642 = vld [vmem:[%s9 + $0xa0] sm:$0xf]
  %v4643 = vld [vmem:[%s9 + $0xa4] sm:$0xf]
  %v4644 = vld [vmem:[%s9 + $0xa8] sm:$0xf]
  %v4645 = vld [vmem:[%s9 + $0xac] sm:$0xf]
  %v4646 = vld [vmem:[%s9 + $0xb0] sm:$0xf]
  %v4647 = vld [vmem:[%s9 + $0xb4] sm:$0xf]
  %v4648 = vld [vmem:[%s9 + $0xb8] sm:$0xf]
  %v4649 = vld [vmem:[%s9 + $0xbc] sm:$0xf]
  %v4650 = vld [vmem:[%s9 + $0xc0] sm:$0xf]
  %v4651 = vld [vmem:[%s9 + $0xc4] sm:$0xf]
  %v4652 = vld [vmem:[%s9 + $0xc8] sm:$0xf]
  %v4653 = vld [vmem:[%s9 + $0xcc] sm:$0xf]
  %v4654 = vld [vmem:[%s9 + $0xd0] sm:$0xf]
  %v4655 = vld [vmem:[%s9 + $0xd4] sm:$0xf]
  %v4656 = vld [vmem:[%s9 + $0xd8] sm:$0xf]
  %v4657 = vld [vmem:[%s9 + $0xdc] sm:$0xf]
  %v4658 = vld [vmem:[%s9 + $0xe0] sm:$0xf]
  %v4659 = vld [vmem:[%s9 + $0xe4] sm:$0xf]
  %v4660 = vld [vmem:[%s9 + $0xe8] sm:$0xf]
  %v4661 = vld [vmem:[%s9 + $0xec] sm:$0xf]
  %v4662 = vld [vmem:[%s9 + $0xf0] sm:$0xf]
  %v4663 = vld [vmem:[%s9 + $0xf4] sm:$0xf]
  %v4664 = vld [vmem:[%s9 + $0xf8] sm:$0xf]
  %v4665 = vld [vmem:[%s9 + $0xfc] sm:$0xf]
  %v4666 = vld [vmem:[%s10] sm:$0x1]
  %v4668 = vlaneseq
  %v4669 = vshrl.u32 %v4668, 7
  %v4670 = vsub.s32 0, %v4669
  %v4671 = vrot.slane %v4666, %v4670
  %v4737 = vunpack.c.l.b16 %v4602
  %v4738 = vunpack.c.l.b16 %v4603
  %v4739 = vunpack.c.l.b16 %v4604
  %v4740 = vunpack.c.l.b16 %v4605
  %v4741 = vunpack.c.l.b16 %v4606
  %v4742 = vunpack.c.l.b16 %v4607
  %v4743 = vunpack.c.l.b16 %v4608
  %v4744 = vunpack.c.l.b16 %v4609
  %v4745 = vunpack.c.l.b16 %v4610
  %v4746 = vunpack.c.l.b16 %v4611
  %v4747 = vunpack.c.l.b16 %v4612
  %v4748 = vunpack.c.l.b16 %v4613
  %v4749 = vunpack.c.l.b16 %v4614
  %v4750 = vunpack.c.l.b16 %v4615
  %v4751 = vunpack.c.l.b16 %v4616
  %v4752 = vunpack.c.l.b16 %v4617
  %v4753 = vunpack.c.l.b16 %v4618
  %v4754 = vunpack.c.l.b16 %v4619
  %v4755 = vunpack.c.l.b16 %v4620
  %v4756 = vunpack.c.l.b16 %v4621
  %v4757 = vunpack.c.l.b16 %v4622
  %v4758 = vunpack.c.l.b16 %v4623
  %v4759 = vunpack.c.l.b16 %v4624
  %v4760 = vunpack.c.l.b16 %v4625
  %v4761 = vunpack.c.l.b16 %v4626
  %v4762 = vunpack.c.l.b16 %v4627
  %v4763 = vunpack.c.l.b16 %v4628
  %v4764 = vunpack.c.l.b16 %v4629
  %v4765 = vunpack.c.l.b16 %v4630
  %v4766 = vunpack.c.l.b16 %v4631
  %v4767 = vunpack.c.l.b16 %v4632
  %v4768 = vunpack.c.l.b16 %v4633
  %v4769 = vunpack.c.l.b16 %v4634
  %v4770 = vunpack.c.l.b16 %v4635
  %v4771 = vunpack.c.l.b16 %v4636
  %v4772 = vunpack.c.l.b16 %v4637
  %v4773 = vunpack.c.l.b16 %v4638
  %v4774 = vunpack.c.l.b16 %v4639
  %v4775 = vunpack.c.l.b16 %v4640
  %v4776 = vunpack.c.l.b16 %v4641
  %v4777 = vunpack.c.l.b16 %v4642
  %v4778 = vunpack.c.l.b16 %v4643
  %v4779 = vunpack.c.l.b16 %v4644
  %v4780 = vunpack.c.l.b16 %v4645
  %v4781 = vunpack.c.l.b16 %v4646
  %v4782 = vunpack.c.l.b16 %v4647
  %v4783 = vunpack.c.l.b16 %v4648
  %v4784 = vunpack.c.l.b16 %v4649
  %v4785 = vunpack.c.l.b16 %v4650
  %v4786 = vunpack.c.l.b16 %v4651
  %v4787 = vunpack.c.l.b16 %v4652
  %v4788 = vunpack.c.l.b16 %v4653
  %v4789 = vunpack.c.l.b16 %v4654
  %v4790 = vunpack.c.l.b16 %v4655
  %v4791 = vunpack.c.l.b16 %v4656
  %v4792 = vunpack.c.l.b16 %v4657
  %v4793 = vunpack.c.l.b16 %v4658
  %v4794 = vunpack.c.l.b16 %v4659
  %v4795 = vunpack.c.l.b16 %v4660
  %v4796 = vunpack.c.l.b16 %v4661
  %v4797 = vunpack.c.l.b16 %v4662
  %v4798 = vunpack.c.l.b16 %v4663
  %v4799 = vunpack.c.l.b16 %v4664
  %v4800 = vunpack.c.l.b16 %v4665
  %v4801 = vpack.c.b16 %v4738, %v4737
  %v4802 = vpack.c.b16 %v4740, %v4739
  %v4803 = vpack.c.b16 %v4742, %v4741
  %v4804 = vpack.c.b16 %v4744, %v4743
  %v4805 = vpack.c.b16 %v4746, %v4745
  %v4806 = vpack.c.b16 %v4748, %v4747
  %v4807 = vpack.c.b16 %v4750, %v4749
  %v4808 = vpack.c.b16 %v4752, %v4751
  %v4809 = vpack.c.b16 %v4754, %v4753
  %v4810 = vpack.c.b16 %v4756, %v4755
  %v4811 = vpack.c.b16 %v4758, %v4757
  %v4812 = vpack.c.b16 %v4760, %v4759
  %v4813 = vpack.c.b16 %v4762, %v4761
  %v4814 = vpack.c.b16 %v4764, %v4763
  %v4815 = vpack.c.b16 %v4766, %v4765
  %v4816 = vpack.c.b16 %v4768, %v4767
  %v4817 = vpack.c.b16 %v4770, %v4769
  %v4818 = vpack.c.b16 %v4772, %v4771
  %v4819 = vpack.c.b16 %v4774, %v4773
  %v4820 = vpack.c.b16 %v4776, %v4775
  %v4821 = vpack.c.b16 %v4778, %v4777
  %v4822 = vpack.c.b16 %v4780, %v4779
  %v4823 = vpack.c.b16 %v4782, %v4781
  %v4824 = vpack.c.b16 %v4784, %v4783
  %v4825 = vpack.c.b16 %v4786, %v4785
  %v4826 = vpack.c.b16 %v4788, %v4787
  %v4827 = vpack.c.b16 %v4790, %v4789
  %v4828 = vpack.c.b16 %v4792, %v4791
  %v4829 = vpack.c.b16 %v4794, %v4793
  %v4830 = vpack.c.b16 %v4796, %v4795
  %v4831 = vpack.c.b16 %v4798, %v4797
  %v4832 = vpack.c.b16 %v4800, %v4799
  %4865 = vmatprep.subr.bf16.mxu0 0
  %4866 = vmatpush1.bf16.msra.mxu0 %v4801
  %4867 = vmatprep.subr.bf16.mxu0 0
  %4868 = vmatpush1.bf16.msra.mxu0 %v4802
  %4869 = vmatprep.subr.bf16.mxu0 0
  %4870 = vmatpush1.bf16.msra.mxu0 %v4803
  %4871 = vmatprep.subr.bf16.mxu0 0
  %4872 = vmatpush1.bf16.msra.mxu0 %v4804
  %4873 = vmatprep.subr.bf16.mxu0 0
  %4874 = vmatpush1.bf16.msra.mxu0 %v4805
  %4875 = vmatprep.subr.bf16.mxu0 0
  %4876 = vmatpush1.bf16.msra.mxu0 %v4806
  %4877 = vmatprep.subr.bf16.mxu0 0
  %4878 = vmatpush1.bf16.msra.mxu0 %v4807
  %4879 = vmatprep.subr.bf16.mxu0 0
  %4880 = vmatpush1.bf16.msra.mxu0 %v4808
  %4881 = vmatprep.subr.bf16.mxu0 0
  %4882 = vmatpush1.bf16.msra.mxu0 %v4809
  %4883 = vmatprep.subr.bf16.mxu0 0
  %4884 = vmatpush1.bf16.msra.mxu0 %v4810
  %4885 = vmatprep.subr.bf16.mxu0 0
  %4886 = vmatpush1.bf16.msra.mxu0 %v4811
  %4887 = vmatprep.subr.bf16.mxu0 0
  %4888 = vmatpush1.bf16.msra.mxu0 %v4812
  %4889 = vmatprep.subr.bf16.mxu0 0
  %4890 = vmatpush1.bf16.msra.mxu0 %v4813
  %4891 = vmatprep.subr.bf16.mxu0 0
  %4892 = vmatpush1.bf16.msra.mxu0 %v4814
  %4893 = vmatprep.subr.bf16.mxu0 0
  %4894 = vmatpush1.bf16.msra.mxu0 %v4815
  %4895 = vmatprep.subr.bf16.mxu0 0
  %4896 = vmatpush1.bf16.msra.mxu0 %v4816
  %4897 = vmatprep.mubr.bf16.mxu0 %v4599
  %4898 = vmatmul.mubr.bf16.gmra.mrb[0].mxu0 %v4598
  %v4899 = vpop.f32.mrb[0].mxu0
  %v4900 = vadd.f32 %v4671, %v4899
  %v4901 = vpop.f32.mrb[0].mxu0
  %v4902 = vpop.f32.mrb[0].mxu0
  %v4903 = vpop.f32.mrb[0].mxu0
  %4904 = vdwg.mxu0
  %4905 = vmatprep.subr.bf16.mxu0 0
  %4906 = vmatpush1.bf16.msra.mxu0 %v4817
  %4907 = vmatprep.subr.bf16.mxu0 0
  %4908 = vmatpush1.bf16.msra.mxu0 %v4818
  %4909 = vmatprep.subr.bf16.mxu0 0
  %4910 = vmatpush1.bf16.msra.mxu0 %v4819
  %4911 = vmatprep.subr.bf16.mxu0 0
  %4912 = vmatpush1.bf16.msra.mxu0 %v4820
  %4913 = vmatprep.subr.bf16.mxu0 0
  %4914 = vmatpush1.bf16.msra.mxu0 %v4821
  %4915 = vmatprep.subr.bf16.mxu0 0
  %4916 = vmatpush1.bf16.msra.mxu0 %v4822
  %4917 = vmatprep.subr.bf16.mxu0 0
  %4918 = vmatpush1.bf16.msra.mxu0 %v4823
  %4919 = vmatprep.subr.bf16.mxu0 0
  %4920 = vmatpush1.bf16.msra.mxu0 %v4824
  %4921 = vmatprep.subr.bf16.mxu0 0
  %4922 = vmatpush1.bf16.msra.mxu0 %v4825
  %4923 = vmatprep.subr.bf16.mxu0 0
  %4924 = vmatpush1.bf16.msra.mxu0 %v4826
  %4925 = vmatprep.subr.bf16.mxu0 0
  %4926 = vmatpush1.bf16.msra.mxu0 %v4827
  %4927 = vmatprep.subr.bf16.mxu0 0
  %4928 = vmatpush1.bf16.msra.mxu0 %v4828
  %4929 = vmatprep.subr.bf16.mxu0 0
  %4930 = vmatpush1.bf16.msra.mxu0 %v4829
  %4931 = vmatprep.subr.bf16.mxu0 0
  %4932 = vmatpush1.bf16.msra.mxu0 %v4830
  %4933 = vmatprep.subr.bf16.mxu0 0
  %4934 = vmatpush1.bf16.msra.mxu0 %v4831
  %4935 = vmatprep.subr.bf16.mxu0 0
  %4936 = vmatpush1.bf16.msra.mxu0 %v4832
  %4937 = vmatprep.mubr.bf16.mxu0 %v4601
  %4938 = vmatmul.mubr.bf16.gmra.mrb[0].mxu0 %v4600
  %v4939 = vpop.f32.mrb[0].mxu0
  %v4940 = vadd.f32 %v4900, %v4939
  %v4941 = vpop.f32.mrb[0].mxu0
  %v4942 = vpop.f32.mrb[0].mxu0
  %v4943 = vpop.f32.mrb[0].mxu0
  %4944 = vdwg.mxu0
  %4945 = vst [vmem:[%s11] sm:$0xff] %v4940
  // Predicated region
  $region46: #{critic_forward.5} parent=0 // pred_check
    _
  $region47: #{critic_forward.5} parent=0 // pred_check_branch
    %4947 = sbr.rel (0) target = $region49
  $region48: #{critic_forward.5} parent=0 // pred_region
    _
  $region49: #{critic_forward.5} parent=0 // pred_fallthru
    _
  // Predicated region
  $region50: #{critic_forward.5} parent=0 // pred_check
    _
  $region51: #{critic_forward.5} parent=0 // pred_check_branch
    %4949 = sbr.rel (0) target = $region53
  $region52: #{critic_forward.5} parent=0 // pred_region
    _
  $region53: #{critic_forward.5} parent=0 // pred_fallthru
    _

</llo_original>
